<compile_context>
chip_gen: v5e
topology: v5e:2x2
jax: 0.10.0
libtpu: 0.0.40
codegen_flags: <defaults>
</compile_context>

<pallas_src>
import math

import jax
import jax.numpy as jnp
from jax.experimental import pallas as pl
from jax.experimental.pallas import tpu as pltpu

NEG_SLOPE = 0.01  # nn.LeakyReLU default


def _leaky(x):
    return jnp.where(x >= 0, x, NEG_SLOPE * x)


# ----------------------------- fused kernel ---------------------------------

def make_same_block_kernel(Wp, C2, num_res):
    """Activations are padded-flat, channel-major (C, Lg), with Ng images folded
    side-by-side into the lane dimension (Lg = Ng * Lpad, Lpad multiple of 128)."""

    def kernel(mask_ref, x_ref, w1_ref, b1_ref, w2_ref, b2_ref, w3_ref,
               o_ref, imcol_ref):
        Lg = o_ref.shape[-1]
        mask = mask_ref[...]          # (1, Lg): 1.0 at interior pixels, 0.0 at pad lanes
        # Running activation lives in the output block's VMEM; the residual
        # operand is re-read right before the add (bounds vreg live ranges).
        o_ref[0] = x_ref[0]

        for r in range(num_res):      # unrolled: all ResBlocks fused in one kernel
            x = o_ref[0]              # (C, Lg)

            # conv1 (1x1) + LeakyReLU: channel-major matmul (2C,C)@(C,Lg)
            y1 = jnp.dot(w1_ref[r], x, preferred_element_type=jnp.float32) + b1_ref[r]
            # INVARIANT (do not remove): `* mask` zeroes every pad lane — the
            # conv zero-padding ring, each image's lane-alignment tail, and the
            # stale residual garbage left there by the previous ResBlock.  The
            # 3x3 taps below read those lanes and rely on them being zero.
            y1 = _leaky(y1) * mask

            # Build the 9 im2col tap rows with XLU rolls; all stores are
            # lane-aligned full-width vst.  rolled[p] == y1[p + s] for every
            # interior output lane p (wrap-around only touches pad lanes).
            for t in range(9):
                s = (t // 3 - 1) * Wp + (t % 3 - 1)    # padded-flat tap offset
                tap = y1 if s == 0 else pltpu.roll(y1, shift=(-s) % Lg, axis=1)
                imcol_ref[t * C2:(t + 1) * C2, :] = tap

            # grouped 3x3 conv as ONE im2col matmul: (2C, 9*2C)@(9*2C, Lg)
            y2 = jnp.dot(w2_ref[r], imcol_ref[...],
                         preferred_element_type=jnp.float32) + b2_ref[r]
            y2 = _leaky(y2)

            # conv3 (1x1, no bias) + residual: (C, 2C)@(2C, Lg) + x
            y3 = jnp.dot(w3_ref[r], y2, preferred_element_type=jnp.float32)
            o_ref[0] = (y3 + o_ref[0]).astype(o_ref.dtype)

    return kernel


def _num_groups(n_images):
    """One grid step per TensorCore: v7x has 2 TCs/chip, v5e/v6e have 1."""
    try:
        kind = jax.devices()[0].device_kind.lower()
    except Exception:
        kind = ""
    n_tc = 2 if ("v7" in kind or "7x" in kind) else 1
    g = max(1, min(n_tc, n_images))
    while n_images % g:
        g -= 1
    return g


def same_block_pallas(x_nchw, stacked, groups=None):
    """x_nchw: (N, C, H, W) f32 (PyTorch layout). Returns (N, C, H, W)."""
    N, C, H, W = x_nchw.shape
    C2 = 2 * C
    Hp, Wp = H + 2, W + 2
    Lp = Hp * Wp                          # padded-flat spatial length (324)
    Lpad = pl.cdiv(Lp, 128) * 128         # lane-dense per-image footprint (384)
    num_res = stacked["w1"].shape[0]

    G = _num_groups(N) if groups is None else groups
    assert N % G == 0
    Ng = N // G
    Lg = Ng * Lpad                        # lane extent per grid step

    # Padded-flat channel-major layout, zeros at every pad lane; batch folded
    # into the lane dimension.  (Host-side pad/unpad is negligible at 16x16;
    # keep the padded-flat layout end-to-end when chaining SameBlocks at scale.)
    xpad = jnp.pad(x_nchw, ((0, 0), (0, 0), (1, 1), (1, 1))).reshape(N, C, Lp)
    xpad = jnp.pad(xpad, ((0, 0), (0, 0), (0, Lpad - Lp)))
    xg = xpad.reshape(G, Ng, C, Lpad).transpose(0, 2, 1, 3).reshape(G, C, Lg)

    mask1 = jnp.pad(jnp.ones((H, W), jnp.float32), ((1, 1), (1, 1))).reshape(Lp)
    mask = jnp.tile(jnp.pad(mask1, (0, Lpad - Lp)), Ng).reshape(1, Lg)

    kernel = make_same_block_kernel(Wp, C2, num_res)
    out = pl.pallas_call(
        kernel,
        out_shape=jax.ShapeDtypeStruct((G, C, Lg), x_nchw.dtype),
        grid=(G,),
        in_specs=[
            pl.BlockSpec((1, Lg), lambda g: (0, 0)),                    # mask
            pl.BlockSpec((1, C, Lg), lambda g: (g, 0, 0)),              # x
            pl.BlockSpec((num_res, C2, C), lambda g: (0, 0, 0)),        # w1
            pl.BlockSpec((num_res, C2, 1), lambda g: (0, 0, 0)),        # b1
            pl.BlockSpec((num_res, C2, 9 * C2), lambda g: (0, 0, 0)),   # w2 (im2col)
            pl.BlockSpec((num_res, C2, 1), lambda g: (0, 0, 0)),        # b2
            pl.BlockSpec((num_res, C, C2), lambda g: (0, 0, 0)),        # w3
        ],
        out_specs=pl.BlockSpec((1, C, Lg), lambda g: (g, 0, 0)),
        scratch_shapes=[pltpu.VMEM((9 * C2, Lg), jnp.float32)],         # im2col
        compiler_params=pltpu.CompilerParams(dimension_semantics=("parallel",)),
    )(mask, xg, stacked["w1"], stacked["b1"], stacked["w2b"],
      stacked["b2"], stacked["w3"])

    out = out.reshape(G, C, Ng, Lpad).transpose(0, 2, 1, 3).reshape(N, C, Lpad)
    return out[:, :, :Lp].reshape(N, C, Hp, Wp)[:, :, 1:H + 1, 1:W + 1]


# ----------------------------- parameters (plain JAX glue) ------------------

def kaiming_uniform(key, shape, fan_in):
    # nn.init.kaiming_uniform_ default: a=0, 'leaky_relu' -> gain = sqrt(2)
    bound = math.sqrt(2.0) * math.sqrt(3.0 / fan_in)
    return jax.random.uniform(key, shape, jnp.float32, -bound, bound)


def make_same_block_params(key, ch, num_res, total_blocks):
    """Weights for all ResBlocks, stacked on a leading num_res axis in kernel
    layout, plus OIHW copies for the pure-JAX reference.

    weight_norm at init has g == ||v||, so effective weight == v; we generate
    effective weights directly.
    NOTE: the PyTorch module zero-inits conv3 and the biases; we use small
    nonzero values so the full compute path is exercised -- forward semantics
    are identical for any parameter values.
    """
    c2 = 2 * ch
    grp = 16
    n_grps = c2 // grp
    num_total = num_res * total_blocks
    scale = num_total ** (-0.25)

    w1s, b1s, w2bs, b2s, w3s, ref_params = [], [], [], [], [], []
    for kb in jax.random.split(key, num_res):
        k1, k2, k3, k4, k5 = jax.random.split(kb, 5)
        w1_oihw = kaiming_uniform(k1, (c2, ch, 1, 1), fan_in=ch) * scale
        b1 = 0.05 * jax.random.normal(k4, (c2,), jnp.float32)
        w2_oihw = kaiming_uniform(k2, (c2, grp, 3, 3), fan_in=grp * 9) * scale
        b2 = 0.05 * jax.random.normal(k5, (c2,), jnp.float32)
        w3_oihw = 0.05 * jax.random.normal(k3, (ch, c2, 1, 1), jnp.float32)

        # kernel (channel-major) layouts
        w1_t = w1_oihw[:, :, 0, 0]                        # (2C, C)
        w3_t = w3_oihw[:, :, 0, 0]                        # (C, 2C)
        w2_dense = jnp.zeros((3, 3, c2, c2), jnp.float32)  # (kh, kw, in, out)
        for g in range(n_grps):
            o0 = g * grp
            blk = jnp.transpose(w2_oihw[o0:o0 + grp], (2, 3, 1, 0))
            w2_dense = w2_dense.at[:, :, o0:o0 + grp, o0:o0 + grp].set(blk)
        w2b = w2_dense.reshape(9 * c2, c2).T              # (2C, 9*2C), cols = (kh,kw,cin)

        w1s.append(w1_t)
        b1s.append(b1.reshape(c2, 1))
        w2bs.append(w2b)
        b2s.append(b2.reshape(c2, 1))
        w3s.append(w3_t)
        ref_params.append(dict(w1=w1_oihw, b1=b1, w2=w2_oihw, b2=b2,
                               w3=w3_oihw, n_grps=n_grps))

    stacked = dict(w1=jnp.stack(w1s), b1=jnp.stack(b1s), w2b=jnp.stack(w2bs),
                   b2=jnp.stack(b2s), w3=jnp.stack(w3s))
    return stacked, ref_params


# ----------------------------- pure-JAX reference ---------------------------

def conv_nchw(x, w_oihw, bias, groups, pad):
    out = jax.lax.conv_general_dilated(
        x, w_oihw, window_strides=(1, 1), padding=[(pad, pad), (pad, pad)],
        dimension_numbers=("NCHW", "OIHW", "NCHW"),
        feature_group_count=groups, precision=jax.lax.Precision.HIGHEST)
    if bias is not None:
        out = out + bias.reshape(1, -1, 1, 1)
    return out


def same_block_ref(x_nchw, ref_params):
    for p in ref_params:
        h = _leaky(conv_nchw(x_nchw, p["w1"], p["b1"], 1, 0))
        h = _leaky(conv_nchw(h, p["w2"], p["b2"], p["n_grps"], 1))
        h = conv_nchw(h, p["w3"], None, 1, 0)
        x_nchw = h + x_nchw
    return x_nchw


# ----------------------------- main ------------------------------------------

if __name__ == "__main__":
    # SameBlock(ch_in=16, ch_out=16, num_res=2, total_blocks=2), NCHW input.
    N, C, H, W = 2, 16, 16, 16
    num_res, total_blocks = 2, 2

    root = jax.random.PRNGKey(0)
    kx, kp = jax.random.split(root)
    stacked, ref_params = make_same_block_params(kp, C, num_res, total_blocks)
    x = jax.random.normal(kx, (N, C, H, W), jnp.float32)

    out = jax.block_until_ready(same_block_pallas(x, stacked))
    ref = jax.block_until_ready(same_block_ref(x, ref_params))

    assert out.shape == (N, C, H, W)
    max_err = float(jnp.max(jnp.abs(out - ref)))
    assert jnp.allclose(out, ref, atol=5e-3, rtol=5e-3), f"max_err={max_err}"
    print("KERNEL_OK")
</pallas_src>

<mosaic_0001>
module attributes {stable_mosaic.version = 11 : i64} {
  func.func @kernel(%arg0: i32, %arg1: memref<1x768xf32, #tpu.memory_space<vmem>>, %arg2: memref<1x16x768xf32, #tpu.memory_space<vmem>>, %arg3: memref<2x32x16xf32, #tpu.memory_space<vmem>>, %arg4: memref<2x32x1xf32, #tpu.memory_space<vmem>>, %arg5: memref<2x32x288xf32, #tpu.memory_space<vmem>>, %arg6: memref<2x32x1xf32, #tpu.memory_space<vmem>>, %arg7: memref<2x16x32xf32, #tpu.memory_space<vmem>>, %arg8: memref<1x16x768xf32, #tpu.memory_space<vmem>>, %arg9: memref<288x768xf32, #tpu.memory_space<vmem>>) attributes {dimension_semantics = [#tpu.dimension_semantics<parallel>], iteration_bounds = array<i64: 1>, scalar_prefetch = 0 : i64, scratch_operands = 1 : i64, tpu.core_type = #tpu.core_type<tc>, window_params = [{pipeline_mode = #tpu.pipeline_mode<synchronous>, transform_indices = @transform_0, window_bounds = array<i64: 1, 768>}, {transform_indices = @transform_1, window_bounds = array<i64: 1, 16, 768>}, {pipeline_mode = #tpu.pipeline_mode<synchronous>, transform_indices = @transform_2, window_bounds = array<i64: 2, 32, 16>}, {pipeline_mode = #tpu.pipeline_mode<synchronous>, transform_indices = @transform_3, window_bounds = array<i64: 2, 32, 1>}, {pipeline_mode = #tpu.pipeline_mode<synchronous>, transform_indices = @transform_4, window_bounds = array<i64: 2, 32, 288>}, {pipeline_mode = #tpu.pipeline_mode<synchronous>, transform_indices = @transform_5, window_bounds = array<i64: 2, 32, 1>}, {pipeline_mode = #tpu.pipeline_mode<synchronous>, transform_indices = @transform_6, window_bounds = array<i64: 2, 16, 32>}, {transform_indices = @transform_7, window_bounds = array<i64: 1, 16, 768>}]} {
    %c0 = arith.constant 0 : index
    %c0_0 = arith.constant 0 : index
    %0 = vector.load %arg1[%c0, %c0_0] : memref<1x768xf32, #tpu.memory_space<vmem>>, vector<1x768xf32>
    %c0_1 = arith.constant 0 : index
    %c0_2 = arith.constant 0 : index
    %c0_3 = arith.constant 0 : index
    %1 = vector.load %arg2[%c0_1, %c0_2, %c0_3] : memref<1x16x768xf32, #tpu.memory_space<vmem>>, vector<1x16x768xf32>
    %2 = vector.shape_cast %1 : vector<1x16x768xf32> to vector<16x768xf32>
    %c0_4 = arith.constant 0 : index
    %c0_5 = arith.constant 0 : index
    %c0_6 = arith.constant 0 : index
    %3 = vector.load %arg8[%c0_4, %c0_5, %c0_6] : memref<1x16x768xf32, #tpu.memory_space<vmem>>, vector<1x16x768xf32>
    %4 = vector.shape_cast %3 : vector<1x16x768xf32> to vector<16x768xf32>
    %5 = vector.shape_cast %2 : vector<16x768xf32> to vector<1x16x768xf32>
    tpu.vector_store %arg8[%c0_4, %c0_5, %c0_6], %5 {strides = array<i32>} : memref<1x16x768xf32, #tpu.memory_space<vmem>>, vector<1x16x768xf32>,
    %c0_7 = arith.constant 0 : index
    %c0_8 = arith.constant 0 : index
    %c0_9 = arith.constant 0 : index
    %6 = vector.load %arg8[%c0_7, %c0_8, %c0_9] : memref<1x16x768xf32, #tpu.memory_space<vmem>>, vector<1x16x768xf32>
    %7 = vector.shape_cast %6 : vector<1x16x768xf32> to vector<16x768xf32>
    %c0_10 = arith.constant 0 : index
    %c0_11 = arith.constant 0 : index
    %c0_12 = arith.constant 0 : index
    %8 = vector.load %arg3[%c0_10, %c0_11, %c0_12] : memref<2x32x16xf32, #tpu.memory_space<vmem>>, vector<1x32x16xf32>
    %9 = vector.shape_cast %8 : vector<1x32x16xf32> to vector<32x16xf32>
    %cst = arith.constant dense<0.000000e+00> : vector<32x768xf32>
    %10 = tpu.matmul %9, %7, %cst {dimension_numbers = #tpu.dot_dimension_numbers<[1], [0], [0], [1], [0, 0, 1, 1], [], []>} : vector<32x16xf32>, vector<16x768xf32>, vector<32x768xf32> -> vector<32x768xf32>
    %c0_13 = arith.constant 0 : index
    %c0_14 = arith.constant 0 : index
    %c0_15 = arith.constant 0 : index
    %11 = vector.load %arg4[%c0_13, %c0_14, %c0_15] : memref<2x32x1xf32, #tpu.memory_space<vmem>>, vector<1x32x1xf32>
    %12 = vector.shape_cast %11 : vector<1x32x1xf32> to vector<32x1xf32>
    %13 = vector.broadcast %12 : vector<32x1xf32> to vector<32x768xf32>
    %14 = arith.addf %10, %13 : vector<32x768xf32>
    %cst_16 = arith.constant 0.000000e+00 : f32
    %15 = vector.broadcast %cst_16 : f32 to vector<32x768xf32>
    %16 = arith.cmpf oge, %14, %15 : vector<32x768xf32>
    %cst_17 = arith.constant 0.00999999977 : f32
    %17 = vector.broadcast %cst_17 : f32 to vector<32x768xf32>
    %18 = arith.mulf %17, %14 : vector<32x768xf32>
    %19 = arith.select %16, %14, %18 : vector<32x768xi1>, vector<32x768xf32>
    %20 = vector.broadcast %0 : vector<1x768xf32> to vector<32x768xf32>
    %21 = arith.mulf %19, %20 : vector<32x768xf32>
    %c19_i32 = arith.constant 19 : i32
    %22 = tpu.dynamic_rotate %21 by %c19_i32 dim 1 : vector<32x768xf32>, i32 -> vector<32x768xf32>
    %c0_18 = arith.constant 0 : index
    %c0_19 = arith.constant 0 : index
    %23 = vector.load %arg9[%c0_18, %c0_19] : memref<288x768xf32, #tpu.memory_space<vmem>>, vector<32x768xf32>
    tpu.vector_store %arg9[%c0_18, %c0_19], %22 {strides = array<i32>} : memref<288x768xf32, #tpu.memory_space<vmem>>, vector<32x768xf32>,
    %c18_i32 = arith.constant 18 : i32
    %24 = tpu.dynamic_rotate %21 by %c18_i32 dim 1 : vector<32x768xf32>, i32 -> vector<32x768xf32>
    %c32 = arith.constant 32 : index
    %c0_20 = arith.constant 0 : index
    %25 = vector.load %arg9[%c32, %c0_20] : memref<288x768xf32, #tpu.memory_space<vmem>>, vector<32x768xf32>
    tpu.vector_store %arg9[%c32, %c0_20], %24 {strides = array<i32>} : memref<288x768xf32, #tpu.memory_space<vmem>>, vector<32x768xf32>,
    %c17_i32 = arith.constant 17 : i32
    %26 = tpu.dynamic_rotate %21 by %c17_i32 dim 1 : vector<32x768xf32>, i32 -> vector<32x768xf32>
    %c64 = arith.constant 64 : index
    %c0_21 = arith.constant 0 : index
    %27 = vector.load %arg9[%c64, %c0_21] : memref<288x768xf32, #tpu.memory_space<vmem>>, vector<32x768xf32>
    tpu.vector_store %arg9[%c64, %c0_21], %26 {strides = array<i32>} : memref<288x768xf32, #tpu.memory_space<vmem>>, vector<32x768xf32>,
    %c1_i32 = arith.constant 1 : i32
    %28 = tpu.dynamic_rotate %21 by %c1_i32 dim 1 : vector<32x768xf32>, i32 -> vector<32x768xf32>
    %c96 = arith.constant 96 : index
    %c0_22 = arith.constant 0 : index
    %29 = vector.load %arg9[%c96, %c0_22] : memref<288x768xf32, #tpu.memory_space<vmem>>, vector<32x768xf32>
    tpu.vector_store %arg9[%c96, %c0_22], %28 {strides = array<i32>} : memref<288x768xf32, #tpu.memory_space<vmem>>, vector<32x768xf32>,
    %c128 = arith.constant 128 : index
    %c0_23 = arith.constant 0 : index
    %30 = vector.load %arg9[%c128, %c0_23] : memref<288x768xf32, #tpu.memory_space<vmem>>, vector<32x768xf32>
    tpu.vector_store %arg9[%c128, %c0_23], %21 {strides = array<i32>} : memref<288x768xf32, #tpu.memory_space<vmem>>, vector<32x768xf32>,
    %c767_i32 = arith.constant 767 : i32
    %31 = tpu.dynamic_rotate %21 by %c767_i32 dim 1 : vector<32x768xf32>, i32 -> vector<32x768xf32>
    %c160 = arith.constant 160 : index
    %c0_24 = arith.constant 0 : index
    %32 = vector.load %arg9[%c160, %c0_24] : memref<288x768xf32, #tpu.memory_space<vmem>>, vector<32x768xf32>
    tpu.vector_store %arg9[%c160, %c0_24], %31 {strides = array<i32>} : memref<288x768xf32, #tpu.memory_space<vmem>>, vector<32x768xf32>,
    %c751_i32 = arith.constant 751 : i32
    %33 = tpu.dynamic_rotate %21 by %c751_i32 dim 1 : vector<32x768xf32>, i32 -> vector<32x768xf32>
    %c192 = arith.constant 192 : index
    %c0_25 = arith.constant 0 : index
    %34 = vector.load %arg9[%c192, %c0_25] : memref<288x768xf32, #tpu.memory_space<vmem>>, vector<32x768xf32>
    tpu.vector_store %arg9[%c192, %c0_25], %33 {strides = array<i32>} : memref<288x768xf32, #tpu.memory_space<vmem>>, vector<32x768xf32>,
    %c750_i32 = arith.constant 750 : i32
    %35 = tpu.dynamic_rotate %21 by %c750_i32 dim 1 : vector<32x768xf32>, i32 -> vector<32x768xf32>
    %c224 = arith.constant 224 : index
    %c0_26 = arith.constant 0 : index
    %36 = vector.load %arg9[%c224, %c0_26] : memref<288x768xf32, #tpu.memory_space<vmem>>, vector<32x768xf32>
    tpu.vector_store %arg9[%c224, %c0_26], %35 {strides = array<i32>} : memref<288x768xf32, #tpu.memory_space<vmem>>, vector<32x768xf32>,
    %c749_i32 = arith.constant 749 : i32
    %37 = tpu.dynamic_rotate %21 by %c749_i32 dim 1 : vector<32x768xf32>, i32 -> vector<32x768xf32>
    %c256 = arith.constant 256 : index
    %c0_27 = arith.constant 0 : index
    %38 = vector.load %arg9[%c256, %c0_27] : memref<288x768xf32, #tpu.memory_space<vmem>>, vector<32x768xf32>
    tpu.vector_store %arg9[%c256, %c0_27], %37 {strides = array<i32>} : memref<288x768xf32, #tpu.memory_space<vmem>>, vector<32x768xf32>,
    %c0_28 = arith.constant 0 : index
    %c0_29 = arith.constant 0 : index
    %c0_30 = arith.constant 0 : index
    %39 = vector.load %arg5[%c0_28, %c0_29, %c0_30] : memref<2x32x288xf32, #tpu.memory_space<vmem>>, vector<1x32x288xf32>
    %40 = vector.shape_cast %39 : vector<1x32x288xf32> to vector<32x288xf32>
    %c0_31 = arith.constant 0 : index
    %c0_32 = arith.constant 0 : index
    %41 = vector.load %arg9[%c0_31, %c0_32] : memref<288x768xf32, #tpu.memory_space<vmem>>, vector<288x768xf32>
    %cst_33 = arith.constant dense<0.000000e+00> : vector<32x768xf32>
    %42 = tpu.matmul %40, %41, %cst_33 {dimension_numbers = #tpu.dot_dimension_numbers<[1], [0], [0], [1], [0, 0, 1, 1], [], []>} : vector<32x288xf32>, vector<288x768xf32>, vector<32x768xf32> -> vector<32x768xf32>
    %c0_34 = arith.constant 0 : index
    %c0_35 = arith.constant 0 : index
    %c0_36 = arith.constant 0 : index
    %43 = vector.load %arg6[%c0_34, %c0_35, %c0_36] : memref<2x32x1xf32, #tpu.memory_space<vmem>>, vector<1x32x1xf32>
    %44 = vector.shape_cast %43 : vector<1x32x1xf32> to vector<32x1xf32>
    %45 = vector.broadcast %44 : vector<32x1xf32> to vector<32x768xf32>
    %46 = arith.addf %42, %45 : vector<32x768xf32>
    %cst_37 = arith.constant 0.000000e+00 : f32
    %47 = vector.broadcast %cst_37 : f32 to vector<32x768xf32>
    %48 = arith.cmpf oge, %46, %47 : vector<32x768xf32>
    %cst_38 = arith.constant 0.00999999977 : f32
    %49 = vector.broadcast %cst_38 : f32 to vector<32x768xf32>
    %50 = arith.mulf %49, %46 : vector<32x768xf32>
    %51 = arith.select %48, %46, %50 : vector<32x768xi1>, vector<32x768xf32>
    %c0_39 = arith.constant 0 : index
    %c0_40 = arith.constant 0 : index
    %c0_41 = arith.constant 0 : index
    %52 = vector.load %arg7[%c0_39, %c0_40, %c0_41] : memref<2x16x32xf32, #tpu.memory_space<vmem>>, vector<1x16x32xf32>
    %53 = vector.shape_cast %52 : vector<1x16x32xf32> to vector<16x32xf32>
    %cst_42 = arith.constant dense<0.000000e+00> : vector<16x768xf32>
    %54 = tpu.matmul %53, %51, %cst_42 {dimension_numbers = #tpu.dot_dimension_numbers<[1], [0], [0], [1], [0, 0, 1, 1], [], []>} : vector<16x32xf32>, vector<32x768xf32>, vector<16x768xf32> -> vector<16x768xf32>
    %c0_43 = arith.constant 0 : index
    %c0_44 = arith.constant 0 : index
    %c0_45 = arith.constant 0 : index
    %55 = vector.load %arg8[%c0_43, %c0_44, %c0_45] : memref<1x16x768xf32, #tpu.memory_space<vmem>>, vector<1x16x768xf32>
    %56 = vector.shape_cast %55 : vector<1x16x768xf32> to vector<16x768xf32>
    %57 = arith.addf %54, %56 : vector<16x768xf32>
    %c0_46 = arith.constant 0 : index
    %c0_47 = arith.constant 0 : index
    %c0_48 = arith.constant 0 : index
    %58 = vector.load %arg8[%c0_46, %c0_47, %c0_48] : memref<1x16x768xf32, #tpu.memory_space<vmem>>, vector<1x16x768xf32>
    %59 = vector.shape_cast %58 : vector<1x16x768xf32> to vector<16x768xf32>
    %60 = vector.shape_cast %57 : vector<16x768xf32> to vector<1x16x768xf32>
    tpu.vector_store %arg8[%c0_46, %c0_47, %c0_48], %60 {strides = array<i32>} : memref<1x16x768xf32, #tpu.memory_space<vmem>>, vector<1x16x768xf32>,
    %c0_49 = arith.constant 0 : index
    %c0_50 = arith.constant 0 : index
    %c0_51 = arith.constant 0 : index
    %61 = vector.load %arg8[%c0_49, %c0_50, %c0_51] : memref<1x16x768xf32, #tpu.memory_space<vmem>>, vector<1x16x768xf32>
    %62 = vector.shape_cast %61 : vector<1x16x768xf32> to vector<16x768xf32>
    %c1 = arith.constant 1 : index
    %c0_52 = arith.constant 0 : index
    %c0_53 = arith.constant 0 : index
    %63 = vector.load %arg3[%c1, %c0_52, %c0_53] : memref<2x32x16xf32, #tpu.memory_space<vmem>>, vector<1x32x16xf32>
    %64 = vector.shape_cast %63 : vector<1x32x16xf32> to vector<32x16xf32>
    %cst_54 = arith.constant dense<0.000000e+00> : vector<32x768xf32>
    %65 = tpu.matmul %64, %62, %cst_54 {dimension_numbers = #tpu.dot_dimension_numbers<[1], [0], [0], [1], [0, 0, 1, 1], [], []>} : vector<32x16xf32>, vector<16x768xf32>, vector<32x768xf32> -> vector<32x768xf32>
    %c1_55 = arith.constant 1 : index
    %c0_56 = arith.constant 0 : index
    %c0_57 = arith.constant 0 : index
    %66 = vector.load %arg4[%c1_55, %c0_56, %c0_57] : memref<2x32x1xf32, #tpu.memory_space<vmem>>, vector<1x32x1xf32>
    %67 = vector.shape_cast %66 : vector<1x32x1xf32> to vector<32x1xf32>
    %68 = vector.broadcast %67 : vector<32x1xf32> to vector<32x768xf32>
    %69 = arith.addf %65, %68 : vector<32x768xf32>
    %cst_58 = arith.constant 0.000000e+00 : f32
    %70 = vector.broadcast %cst_58 : f32 to vector<32x768xf32>
    %71 = arith.cmpf oge, %69, %70 : vector<32x768xf32>
    %cst_59 = arith.constant 0.00999999977 : f32
    %72 = vector.broadcast %cst_59 : f32 to vector<32x768xf32>
    %73 = arith.mulf %72, %69 : vector<32x768xf32>
    %74 = arith.select %71, %69, %73 : vector<32x768xi1>, vector<32x768xf32>
    %75 = vector.broadcast %0 : vector<1x768xf32> to vector<32x768xf32>
    %76 = arith.mulf %74, %75 : vector<32x768xf32>
    %c19_i32_60 = arith.constant 19 : i32
    %77 = tpu.dynamic_rotate %76 by %c19_i32_60 dim 1 : vector<32x768xf32>, i32 -> vector<32x768xf32>
    %c0_61 = arith.constant 0 : index
    %c0_62 = arith.constant 0 : index
    %78 = vector.load %arg9[%c0_61, %c0_62] : memref<288x768xf32, #tpu.memory_space<vmem>>, vector<32x768xf32>
    tpu.vector_store %arg9[%c0_61, %c0_62], %77 {strides = array<i32>} : memref<288x768xf32, #tpu.memory_space<vmem>>, vector<32x768xf32>,
    %c18_i32_63 = arith.constant 18 : i32
    %79 = tpu.dynamic_rotate %76 by %c18_i32_63 dim 1 : vector<32x768xf32>, i32 -> vector<32x768xf32>
    %c32_64 = arith.constant 32 : index
    %c0_65 = arith.constant 0 : index
    %80 = vector.load %arg9[%c32_64, %c0_65] : memref<288x768xf32, #tpu.memory_space<vmem>>, vector<32x768xf32>
    tpu.vector_store %arg9[%c32_64, %c0_65], %79 {strides = array<i32>} : memref<288x768xf32, #tpu.memory_space<vmem>>, vector<32x768xf32>,
    %c17_i32_66 = arith.constant 17 : i32
    %81 = tpu.dynamic_rotate %76 by %c17_i32_66 dim 1 : vector<32x768xf32>, i32 -> vector<32x768xf32>
    %c64_67 = arith.constant 64 : index
    %c0_68 = arith.constant 0 : index
    %82 = vector.load %arg9[%c64_67, %c0_68] : memref<288x768xf32, #tpu.memory_space<vmem>>, vector<32x768xf32>
    tpu.vector_store %arg9[%c64_67, %c0_68], %81 {strides = array<i32>} : memref<288x768xf32, #tpu.memory_space<vmem>>, vector<32x768xf32>,
    %c1_i32_69 = arith.constant 1 : i32
    %83 = tpu.dynamic_rotate %76 by %c1_i32_69 dim 1 : vector<32x768xf32>, i32 -> vector<32x768xf32>
    %c96_70 = arith.constant 96 : index
    %c0_71 = arith.constant 0 : index
    %84 = vector.load %arg9[%c96_70, %c0_71] : memref<288x768xf32, #tpu.memory_space<vmem>>, vector<32x768xf32>
    tpu.vector_store %arg9[%c96_70, %c0_71], %83 {strides = array<i32>} : memref<288x768xf32, #tpu.memory_space<vmem>>, vector<32x768xf32>,
    %c128_72 = arith.constant 128 : index
    %c0_73 = arith.constant 0 : index
    %85 = vector.load %arg9[%c128_72, %c0_73] : memref<288x768xf32, #tpu.memory_space<vmem>>, vector<32x768xf32>
    tpu.vector_store %arg9[%c128_72, %c0_73], %76 {strides = array<i32>} : memref<288x768xf32, #tpu.memory_space<vmem>>, vector<32x768xf32>,
    %c767_i32_74 = arith.constant 767 : i32
    %86 = tpu.dynamic_rotate %76 by %c767_i32_74 dim 1 : vector<32x768xf32>, i32 -> vector<32x768xf32>
    %c160_75 = arith.constant 160 : index
    %c0_76 = arith.constant 0 : index
    %87 = vector.load %arg9[%c160_75, %c0_76] : memref<288x768xf32, #tpu.memory_space<vmem>>, vector<32x768xf32>
    tpu.vector_store %arg9[%c160_75, %c0_76], %86 {strides = array<i32>} : memref<288x768xf32, #tpu.memory_space<vmem>>, vector<32x768xf32>,
    %c751_i32_77 = arith.constant 751 : i32
    %88 = tpu.dynamic_rotate %76 by %c751_i32_77 dim 1 : vector<32x768xf32>, i32 -> vector<32x768xf32>
    %c192_78 = arith.constant 192 : index
    %c0_79 = arith.constant 0 : index
    %89 = vector.load %arg9[%c192_78, %c0_79] : memref<288x768xf32, #tpu.memory_space<vmem>>, vector<32x768xf32>
    tpu.vector_store %arg9[%c192_78, %c0_79], %88 {strides = array<i32>} : memref<288x768xf32, #tpu.memory_space<vmem>>, vector<32x768xf32>,
    %c750_i32_80 = arith.constant 750 : i32
    %90 = tpu.dynamic_rotate %76 by %c750_i32_80 dim 1 : vector<32x768xf32>, i32 -> vector<32x768xf32>
    %c224_81 = arith.constant 224 : index
    %c0_82 = arith.constant 0 : index
    %91 = vector.load %arg9[%c224_81, %c0_82] : memref<288x768xf32, #tpu.memory_space<vmem>>, vector<32x768xf32>
    tpu.vector_store %arg9[%c224_81, %c0_82], %90 {strides = array<i32>} : memref<288x768xf32, #tpu.memory_space<vmem>>, vector<32x768xf32>,
    %c749_i32_83 = arith.constant 749 : i32
    %92 = tpu.dynamic_rotate %76 by %c749_i32_83 dim 1 : vector<32x768xf32>, i32 -> vector<32x768xf32>
    %c256_84 = arith.constant 256 : index
    %c0_85 = arith.constant 0 : index
    %93 = vector.load %arg9[%c256_84, %c0_85] : memref<288x768xf32, #tpu.memory_space<vmem>>, vector<32x768xf32>
    tpu.vector_store %arg9[%c256_84, %c0_85], %92 {strides = array<i32>} : memref<288x768xf32, #tpu.memory_space<vmem>>, vector<32x768xf32>,
    %c1_86 = arith.constant 1 : index
    %c0_87 = arith.constant 0 : index
    %c0_88 = arith.constant 0 : index
    %94 = vector.load %arg5[%c1_86, %c0_87, %c0_88] : memref<2x32x288xf32, #tpu.memory_space<vmem>>, vector<1x32x288xf32>
    %95 = vector.shape_cast %94 : vector<1x32x288xf32> to vector<32x288xf32>
    %c0_89 = arith.constant 0 : index
    %c0_90 = arith.constant 0 : index
    %96 = vector.load %arg9[%c0_89, %c0_90] : memref<288x768xf32, #tpu.memory_space<vmem>>, vector<288x768xf32>
    %cst_91 = arith.constant dense<0.000000e+00> : vector<32x768xf32>
    %97 = tpu.matmul %95, %96, %cst_91 {dimension_numbers = #tpu.dot_dimension_numbers<[1], [0], [0], [1], [0, 0, 1, 1], [], []>} : vector<32x288xf32>, vector<288x768xf32>, vector<32x768xf32> -> vector<32x768xf32>
    %c1_92 = arith.constant 1 : index
    %c0_93 = arith.constant 0 : index
    %c0_94 = arith.constant 0 : index
    %98 = vector.load %arg6[%c1_92, %c0_93, %c0_94] : memref<2x32x1xf32, #tpu.memory_space<vmem>>, vector<1x32x1xf32>
    %99 = vector.shape_cast %98 : vector<1x32x1xf32> to vector<32x1xf32>
    %100 = vector.broadcast %99 : vector<32x1xf32> to vector<32x768xf32>
    %101 = arith.addf %97, %100 : vector<32x768xf32>
    %cst_95 = arith.constant 0.000000e+00 : f32
    %102 = vector.broadcast %cst_95 : f32 to vector<32x768xf32>
    %103 = arith.cmpf oge, %101, %102 : vector<32x768xf32>
    %cst_96 = arith.constant 0.00999999977 : f32
    %104 = vector.broadcast %cst_96 : f32 to vector<32x768xf32>
    %105 = arith.mulf %104, %101 : vector<32x768xf32>
    %106 = arith.select %103, %101, %105 : vector<32x768xi1>, vector<32x768xf32>
    %c1_97 = arith.constant 1 : index
    %c0_98 = arith.constant 0 : index
    %c0_99 = arith.constant 0 : index
    %107 = vector.load %arg7[%c1_97, %c0_98, %c0_99] : memref<2x16x32xf32, #tpu.memory_space<vmem>>, vector<1x16x32xf32>
    %108 = vector.shape_cast %107 : vector<1x16x32xf32> to vector<16x32xf32>
    %cst_100 = arith.constant dense<0.000000e+00> : vector<16x768xf32>
    %109 = tpu.matmul %108, %106, %cst_100 {dimension_numbers = #tpu.dot_dimension_numbers<[1], [0], [0], [1], [0, 0, 1, 1], [], []>} : vector<16x32xf32>, vector<32x768xf32>, vector<16x768xf32> -> vector<16x768xf32>
    %c0_101 = arith.constant 0 : index
    %c0_102 = arith.constant 0 : index
    %c0_103 = arith.constant 0 : index
    %110 = vector.load %arg8[%c0_101, %c0_102, %c0_103] : memref<1x16x768xf32, #tpu.memory_space<vmem>>, vector<1x16x768xf32>
    %111 = vector.shape_cast %110 : vector<1x16x768xf32> to vector<16x768xf32>
    %112 = arith.addf %109, %111 : vector<16x768xf32>
    %c0_104 = arith.constant 0 : index
    %c0_105 = arith.constant 0 : index
    %c0_106 = arith.constant 0 : index
    %113 = vector.load %arg8[%c0_104, %c0_105, %c0_106] : memref<1x16x768xf32, #tpu.memory_space<vmem>>, vector<1x16x768xf32>
    %114 = vector.shape_cast %113 : vector<1x16x768xf32> to vector<16x768xf32>
    %115 = vector.shape_cast %112 : vector<16x768xf32> to vector<1x16x768xf32>
    tpu.vector_store %arg8[%c0_104, %c0_105, %c0_106], %115 {strides = array<i32>} : memref<1x16x768xf32, #tpu.memory_space<vmem>>, vector<1x16x768xf32>,
    return
  }
  func.func @transform_0(%arg0: i32) -> (i32, i32) {
    %c0_i32 = arith.constant 0 : i32
    %c0_i32_0 = arith.constant 0 : i32
    %c0_i32_1 = arith.constant 0 : i32
    return %c0_i32, %c0_i32_0 : i32, i32
  }
  func.func @transform_1(%arg0: i32) -> (i32, i32, i32) {
    %c0_i32 = arith.constant 0 : i32
    %c0_i32_0 = arith.constant 0 : i32
    %c0_i32_1 = arith.constant 0 : i32
    return %arg0, %c0_i32, %c0_i32_0 : i32, i32, i32
  }
  func.func @transform_2(%arg0: i32) -> (i32, i32, i32) {
    %c0_i32 = arith.constant 0 : i32
    %c0_i32_0 = arith.constant 0 : i32
    %c0_i32_1 = arith.constant 0 : i32
    %c0_i32_2 = arith.constant 0 : i32
    return %c0_i32, %c0_i32_0, %c0_i32_1 : i32, i32, i32
  }
  func.func @transform_3(%arg0: i32) -> (i32, i32, i32) {
    %c0_i32 = arith.constant 0 : i32
    %c0_i32_0 = arith.constant 0 : i32
    %c0_i32_1 = arith.constant 0 : i32
    %c0_i32_2 = arith.constant 0 : i32
    return %c0_i32, %c0_i32_0, %c0_i32_1 : i32, i32, i32
  }
  func.func @transform_4(%arg0: i32) -> (i32, i32, i32) {
    %c0_i32 = arith.constant 0 : i32
    %c0_i32_0 = arith.constant 0 : i32
    %c0_i32_1 = arith.constant 0 : i32
    %c0_i32_2 = arith.constant 0 : i32
    return %c0_i32, %c0_i32_0, %c0_i32_1 : i32, i32, i32
  }
  func.func @transform_5(%arg0: i32) -> (i32, i32, i32) {
    %c0_i32 = arith.constant 0 : i32
    %c0_i32_0 = arith.constant 0 : i32
    %c0_i32_1 = arith.constant 0 : i32
    %c0_i32_2 = arith.constant 0 : i32
    return %c0_i32, %c0_i32_0, %c0_i32_1 : i32, i32, i32
  }
  func.func @transform_6(%arg0: i32) -> (i32, i32, i32) {
    %c0_i32 = arith.constant 0 : i32
    %c0_i32_0 = arith.constant 0 : i32
    %c0_i32_1 = arith.constant 0 : i32
    %c0_i32_2 = arith.constant 0 : i32
    return %c0_i32, %c0_i32_0, %c0_i32_1 : i32, i32, i32
  }
  func.func @transform_7(%arg0: i32) -> (i32, i32, i32) {
    %c0_i32 = arith.constant 0 : i32
    %c0_i32_0 = arith.constant 0 : i32
    %c0_i32_1 = arith.constant 0 : i32
    return %arg0, %c0_i32, %c0_i32_0 : i32, i32, i32
  }
}

</mosaic_0001>

<llo_original>
// kernel: tpu_custom_call.1
$region0: #{tpu_custom_call.1}
  #allocation0 [shape = 'u32[]', space=smem, size = 0x4, offset = 0x4, fixed_abs, tag = 'smem constant byte address 0x4 - core index']
  #allocation1 [shape = 'u32[72,128]{1,0:T(1,128)}', space=vmem, size = 0x9000, scoped, tag = 'internal scratch']
  #allocation2 [shape = 'f32[288,768]{1,0:T(8,128)}', space=vmem, size = 0xd8000, scoped, tag = 'scratch operand']
  %s0 = inlined_call_operand.vmem [shape: f32[1,768], index: 0, kind: input, shape index: {}]
  %s1 = inlined_call_operand.vmem [shape: f32[1,16,768], index: 1, kind: input, shape index: {}]
  %s2 = inlined_call_operand.vmem [shape: f32[2,32,16], index: 2, kind: input, shape index: {}]
  %s3 = inlined_call_operand.vmem [shape: f32[2,32,1], index: 3, kind: input, shape index: {}]
  %s4 = inlined_call_operand.hbm [shape: f32[2,32,288], index: 4, kind: input, shape index: {}]
  %s5 = inlined_call_operand.vmem [shape: f32[2,32,1], index: 5, kind: input, shape index: {}]
  %s6 = inlined_call_operand.vmem [shape: f32[2,16,32], index: 6, kind: input, shape index: {}]
  %s7 = inlined_call_operand.hbm [shape: f32[1,16,768], index: 7, kind: output, shape index: {}]
  %s8 = sld [smem:[#allocation0]]
  $region42: #{tpu_custom_call.1} parent=0
    _
  %s10 = ssub.s32 1, %s8
  %s11 = scalar_select 0, %s10, %s8
  $region1: #{tpu_custom_call.1} parent=0
    #allocation3 [shape = 'u8[98304]{0}', space=vmem, size = 0x18000, scoped, tag = 'input window, operand 4, single buffered']
    #allocation4 [shape = 's32[1]{0}', space=sflag, size = 0x4, scoped, tag = 'scoped memory for tpu_custom_call.1']
    #allocation5 [shape = 's32[1]{0}', space=sflag, size = 0x4, scoped, tag = 'scoped memory for tpu_custom_call.1']
    #allocation6 [shape = 'u8[49152]{0}', space=vmem, size = 0xc000, scoped, tag = 'output window, operand 0, single buffered']
    %12 = vsyncpa [#allocation4], 0
    %13 = vsyncpa [#allocation5], 0
    // Predicated region
    $region2: #{tpu_custom_call.1} parent=1 // pred_check
      _
    $region3: #{tpu_custom_call.1} parent=1 // pred_check_branch
      %15 = sbr.rel (0) target = $region5
    $region4: #{tpu_custom_call.1} parent=1 // pred_region
      _
    $region5: #{tpu_custom_call.1} parent=1 // pred_fallthru
      _
    // Predicated region
    $region6: #{tpu_custom_call.1} parent=1 // pred_check
      _
    $region7: #{tpu_custom_call.1} parent=1 // pred_check_branch
      %17 = sbr.rel (0) target = $region9
    $region8: #{tpu_custom_call.1} parent=1 // pred_region
      _
    $region9: #{tpu_custom_call.1} parent=1 // pred_fallthru
      _
    // Predicated region
    $region10: #{tpu_custom_call.1} parent=1 // pred_check
      _
    $region11: #{tpu_custom_call.1} parent=1 // pred_check_branch
      %19 = sbr.rel (0) target = $region13
    $region12: #{tpu_custom_call.1} parent=1 // pred_region
      _
    $region13: #{tpu_custom_call.1} parent=1 // pred_fallthru
      _
    // Predicated region
    $region14: #{tpu_custom_call.1} parent=1 // pred_check
      _
    $region15: #{tpu_custom_call.1} parent=1 // pred_check_branch
      %21 = sbr.rel (0) target = $region17
    $region16: #{tpu_custom_call.1} parent=1 // pred_region
      _
    $region17: #{tpu_custom_call.1} parent=1 // pred_fallthru
      _
    // Predicated region
    $region18: #{tpu_custom_call.1} parent=1 // pred_check
      _
    $region19: #{tpu_custom_call.1} parent=1 // pred_check_branch
      %23 = sbr.rel (0) target = $region21
    $region20: #{tpu_custom_call.1} parent=1 // pred_region
      %25 = vsyncadd [#allocation4], 0
      %s26 = sshll.u32 %s4, 4
      %s27 = int_to_ptr.hbm [resolvable:$true] %s26
      %s28 = sshll.u32 [#allocation3], 4
      %s29 = int_to_ptr.vmem [resolvable:$true] %s28
      %34 = dma.hbm_to_vmem [thread:$0]  %s27, 3072, %s29, [#allocation4], 384, 384, 24
    $region21: #{tpu_custom_call.1} parent=1 // pred_fallthru
      _
    // Predicated region
    $region22: #{tpu_custom_call.1} parent=1 // pred_check
      _
    $region23: #{tpu_custom_call.1} parent=1 // pred_check_branch
      %36 = sbr.rel (0) target = $region25
    $region24: #{tpu_custom_call.1} parent=1 // pred_region
      _
    $region25: #{tpu_custom_call.1} parent=1 // pred_fallthru
      _
    // Predicated region
    $region26: #{tpu_custom_call.1} parent=1 // pred_check
      _
    $region27: #{tpu_custom_call.1} parent=1 // pred_check_branch
      %38 = sbr.rel (0) target = $region29
    $region28: #{tpu_custom_call.1} parent=1 // pred_region
      _
    $region29: #{tpu_custom_call.1} parent=1 // pred_fallthru
      _
    // Predicated region
    $region30: #{tpu_custom_call.1} parent=1 // pred_check
      _
    $region31: #{tpu_custom_call.1} parent=1 // pred_check_branch
      %40 = sbr.rel (0) target = $region33
    $region32: #{tpu_custom_call.1} parent=1 // pred_region
      %42 = dma.done [#allocation4], 3072
    $region33: #{tpu_custom_call.1} parent=1 // pred_fallthru
      _
    %v43 = vld [vmem:[%s0] sm:$0x3f]
    %v44 = vld [vmem:[%s1] sm:$0xff]
    %v45 = vld [vmem:[%s1 + $0x8] sm:$0xff]
    %v46 = vld [vmem:[%s1 + $0x10] sm:$0xff]
    %v47 = vld [vmem:[%s1 + $0x18] sm:$0xff]
    %v48 = vld [vmem:[%s1 + $0x20] sm:$0xff]
    %v49 = vld [vmem:[%s1 + $0x28] sm:$0xff]
    %v50 = vld [vmem:[%s1 + $0x30] sm:$0xff]
    %v51 = vld [vmem:[%s1 + $0x38] sm:$0xff]
    %v52 = vld [vmem:[%s1 + $0x40] sm:$0xff]
    %v53 = vld [vmem:[%s1 + $0x48] sm:$0xff]
    %v54 = vld [vmem:[%s1 + $0x50] sm:$0xff]
    %v55 = vld [vmem:[%s1 + $0x58] sm:$0xff]
    %56 = vst [vmem:[#allocation6] sm:$0xff] %v44
    %57 = vst [vmem:[#allocation6 + $0x8] sm:$0xff] %v45
    %58 = vst [vmem:[#allocation6 + $0x10] sm:$0xff] %v46
    %59 = vst [vmem:[#allocation6 + $0x18] sm:$0xff] %v47
    %60 = vst [vmem:[#allocation6 + $0x20] sm:$0xff] %v48
    %61 = vst [vmem:[#allocation6 + $0x28] sm:$0xff] %v49
    %62 = vst [vmem:[#allocation6 + $0x30] sm:$0xff] %v50
    %63 = vst [vmem:[#allocation6 + $0x38] sm:$0xff] %v51
    %64 = vst [vmem:[#allocation6 + $0x40] sm:$0xff] %v52
    %65 = vst [vmem:[#allocation6 + $0x48] sm:$0xff] %v53
    %66 = vst [vmem:[#allocation6 + $0x50] sm:$0xff] %v54
    %67 = vst [vmem:[#allocation6 + $0x58] sm:$0xff] %v55
    %v68 = vld [vmem:[#allocation6] sm:$0xff]
    %v69 = vld [vmem:[#allocation6 + $0x8] sm:$0xff]
    %v70 = vld [vmem:[#allocation6 + $0x10] sm:$0xff]
    %v71 = vld [vmem:[#allocation6 + $0x18] sm:$0xff]
    %v72 = vld [vmem:[#allocation6 + $0x20] sm:$0xff]
    %v73 = vld [vmem:[#allocation6 + $0x28] sm:$0xff]
    %v74 = vld [vmem:[#allocation6 + $0x30] sm:$0xff]
    %v75 = vld [vmem:[#allocation6 + $0x38] sm:$0xff]
    %v76 = vld [vmem:[#allocation6 + $0x40] sm:$0xff]
    %v77 = vld [vmem:[#allocation6 + $0x48] sm:$0xff]
    %v78 = vld [vmem:[#allocation6 + $0x50] sm:$0xff]
    %v79 = vld [vmem:[#allocation6 + $0x58] sm:$0xff]
    %v80 = vld [vmem:[%s2] sm:$0xff]
    %v81 = vld [vmem:[%s2 + $0x8] sm:$0xff]
    %v82 = vld [vmem:[%s2 + $0x10] sm:$0xff]
    %v83 = vld [vmem:[%s2 + $0x18] sm:$0xff]
    %v84 = vld [vmem:[%s3] sm:$0xff]
    %v85 = vld [vmem:[%s3 + $0x8] sm:$0xff]
    %v86 = vld [vmem:[%s3 + $0x10] sm:$0xff]
    %v87 = vld [vmem:[%s3 + $0x18] sm:$0xff]
    %89 = vset.pattern.permute.xlu0 0
    %90 = vperm.xlu0 %89, %v84
    %v91 = vpop.permute.xlu0 %90
    %94 = vset.pattern.permute.xlu0 0
    %95 = vperm.xlu0 %94, %v85
    %v96 = vpop.permute.xlu0 %95
    %99 = vset.pattern.permute.xlu0 0
    %100 = vperm.xlu0 %99, %v86
    %v101 = vpop.permute.xlu0 %100
    %104 = vset.pattern.permute.xlu0 0
    %105 = vperm.xlu0 %104, %v87
    %v106 = vpop.permute.xlu0 %105
    %vm108 = vcmask 130048
    %v110 = vsel %vm108, %v80, 0
    %v113 = vsel %vm108, %v81, 0
    %v116 = vsel %vm108, %v82, 0
    %v119 = vsel %vm108, %v83, 0
    %121 = vmatpush.msra.mxu0 0.0
    %122 = vmatpush.msra.mxu0 0.0
    %123 = vmatpush.msra.mxu0 0.0
    %124 = vmatpush.msra.mxu0 0.0
    %125 = vmatpush.msra.mxu0 0.0
    %126 = vmatpush.msra.mxu0 0.0
    %127 = vmatpush.msra.mxu0 0.0
    %128 = vmatpush.msra.mxu0 0.0
    %129 = vmatpush.msra.mxu0 0.0
    %130 = vmatpush.msra.mxu0 0.0
    %131 = vmatpush.msra.mxu0 0.0
    %132 = vmatpush.msra.mxu0 0.0
    %133 = vmatpush.msra.mxu0 0.0
    %134 = vmatpush.msra.mxu0 0.0
    %135 = vmatpush.msra.mxu0 %v74
    %136 = vmatpush.msra.mxu0 %v68
    %137 = vmatmul.f32.gmra.mxu0 %v110
    %v138 = vpop.f32.mrf.mxu0
    %v139 = vadd.f32 %v91, %v138
    %140 = vmatmul.f32.gmra.mxu0 %v113
    %v141 = vpop.f32.mrf.mxu0
    %v142 = vadd.f32 %v96, %v141
    %143 = vmatmul.f32.gmra.mxu0 %v116
    %v144 = vpop.f32.mrf.mxu0
    %v145 = vadd.f32 %v101, %v144
    %146 = vmatmul.f32.gmra.mxu0 %v119
    %v147 = vpop.f32.mrf.mxu0
    %v148 = vadd.f32 %v106, %v147
    %149 = vdwg.mxu0
    %150 = vmatpush.msra.mxu0 0.0
    %151 = vmatpush.msra.mxu0 0.0
    %152 = vmatpush.msra.mxu0 0.0
    %153 = vmatpush.msra.mxu0 0.0
    %154 = vmatpush.msra.mxu0 0.0
    %155 = vmatpush.msra.mxu0 0.0
    %156 = vmatpush.msra.mxu0 0.0
    %157 = vmatpush.msra.mxu0 0.0
    %158 = vmatpush.msra.mxu0 0.0
    %159 = vmatpush.msra.mxu0 0.0
    %160 = vmatpush.msra.mxu0 0.0
    %161 = vmatpush.msra.mxu0 0.0
    %162 = vmatpush.msra.mxu0 0.0
    %163 = vmatpush.msra.mxu0 0.0
    %164 = vmatpush.msra.mxu0 %v75
    %165 = vmatpush.msra.mxu0 %v69
    %166 = vmatmul.f32.gmra.mxu0 %v110
    %v167 = vpop.f32.mrf.mxu0
    %v168 = vadd.f32 %v91, %v167
    %169 = vmatmul.f32.gmra.mxu0 %v113
    %v170 = vpop.f32.mrf.mxu0
    %v171 = vadd.f32 %v96, %v170
    %172 = vmatmul.f32.gmra.mxu0 %v116
    %v173 = vpop.f32.mrf.mxu0
    %v174 = vadd.f32 %v101, %v173
    %175 = vmatmul.f32.gmra.mxu0 %v119
    %v176 = vpop.f32.mrf.mxu0
    %v177 = vadd.f32 %v106, %v176
    %178 = vdwg.mxu0
    %179 = vmatpush.msra.mxu0 0.0
    %180 = vmatpush.msra.mxu0 0.0
    %181 = vmatpush.msra.mxu0 0.0
    %182 = vmatpush.msra.mxu0 0.0
    %183 = vmatpush.msra.mxu0 0.0
    %184 = vmatpush.msra.mxu0 0.0
    %185 = vmatpush.msra.mxu0 0.0
    %186 = vmatpush.msra.mxu0 0.0
    %187 = vmatpush.msra.mxu0 0.0
    %188 = vmatpush.msra.mxu0 0.0
    %189 = vmatpush.msra.mxu0 0.0
    %190 = vmatpush.msra.mxu0 0.0
    %191 = vmatpush.msra.mxu0 0.0
    %192 = vmatpush.msra.mxu0 0.0
    %193 = vmatpush.msra.mxu0 %v76
    %194 = vmatpush.msra.mxu0 %v70
    %195 = vmatmul.f32.gmra.mxu0 %v110
    %v196 = vpop.f32.mrf.mxu0
    %v197 = vadd.f32 %v91, %v196
    %198 = vmatmul.f32.gmra.mxu0 %v113
    %v199 = vpop.f32.mrf.mxu0
    %v200 = vadd.f32 %v96, %v199
    %201 = vmatmul.f32.gmra.mxu0 %v116
    %v202 = vpop.f32.mrf.mxu0
    %v203 = vadd.f32 %v101, %v202
    %204 = vmatmul.f32.gmra.mxu0 %v119
    %v205 = vpop.f32.mrf.mxu0
    %v206 = vadd.f32 %v106, %v205
    %207 = vdwg.mxu0
    %208 = vmatpush.msra.mxu0 0.0
    %209 = vmatpush.msra.mxu0 0.0
    %210 = vmatpush.msra.mxu0 0.0
    %211 = vmatpush.msra.mxu0 0.0
    %212 = vmatpush.msra.mxu0 0.0
    %213 = vmatpush.msra.mxu0 0.0
    %214 = vmatpush.msra.mxu0 0.0
    %215 = vmatpush.msra.mxu0 0.0
    %216 = vmatpush.msra.mxu0 0.0
    %217 = vmatpush.msra.mxu0 0.0
    %218 = vmatpush.msra.mxu0 0.0
    %219 = vmatpush.msra.mxu0 0.0
    %220 = vmatpush.msra.mxu0 0.0
    %221 = vmatpush.msra.mxu0 0.0
    %222 = vmatpush.msra.mxu0 %v77
    %223 = vmatpush.msra.mxu0 %v71
    %224 = vmatmul.f32.gmra.mxu0 %v110
    %v225 = vpop.f32.mrf.mxu0
    %v226 = vadd.f32 %v91, %v225
    %227 = vmatmul.f32.gmra.mxu0 %v113
    %v228 = vpop.f32.mrf.mxu0
    %v229 = vadd.f32 %v96, %v228
    %230 = vmatmul.f32.gmra.mxu0 %v116
    %v231 = vpop.f32.mrf.mxu0
    %v232 = vadd.f32 %v101, %v231
    %233 = vmatmul.f32.gmra.mxu0 %v119
    %v234 = vpop.f32.mrf.mxu0
    %v235 = vadd.f32 %v106, %v234
    %236 = vdwg.mxu0
    %237 = vmatpush.msra.mxu0 0.0
    %238 = vmatpush.msra.mxu0 0.0
    %239 = vmatpush.msra.mxu0 0.0
    %240 = vmatpush.msra.mxu0 0.0
    %241 = vmatpush.msra.mxu0 0.0
    %242 = vmatpush.msra.mxu0 0.0
    %243 = vmatpush.msra.mxu0 0.0
    %244 = vmatpush.msra.mxu0 0.0
    %245 = vmatpush.msra.mxu0 0.0
    %246 = vmatpush.msra.mxu0 0.0
    %247 = vmatpush.msra.mxu0 0.0
    %248 = vmatpush.msra.mxu0 0.0
    %249 = vmatpush.msra.mxu0 0.0
    %250 = vmatpush.msra.mxu0 0.0
    %251 = vmatpush.msra.mxu0 %v78
    %252 = vmatpush.msra.mxu0 %v72
    %253 = vmatmul.f32.gmra.mxu0 %v110
    %v254 = vpop.f32.mrf.mxu0
    %v255 = vadd.f32 %v91, %v254
    %256 = vmatmul.f32.gmra.mxu0 %v113
    %v257 = vpop.f32.mrf.mxu0
    %v258 = vadd.f32 %v96, %v257
    %259 = vmatmul.f32.gmra.mxu0 %v116
    %v260 = vpop.f32.mrf.mxu0
    %v261 = vadd.f32 %v101, %v260
    %262 = vmatmul.f32.gmra.mxu0 %v119
    %v263 = vpop.f32.mrf.mxu0
    %v264 = vadd.f32 %v106, %v263
    %265 = vdwg.mxu0
    %266 = vmatpush.msra.mxu0 0.0
    %267 = vmatpush.msra.mxu0 0.0
    %268 = vmatpush.msra.mxu0 0.0
    %269 = vmatpush.msra.mxu0 0.0
    %270 = vmatpush.msra.mxu0 0.0
    %271 = vmatpush.msra.mxu0 0.0
    %272 = vmatpush.msra.mxu0 0.0
    %273 = vmatpush.msra.mxu0 0.0
    %274 = vmatpush.msra.mxu0 0.0
    %275 = vmatpush.msra.mxu0 0.0
    %276 = vmatpush.msra.mxu0 0.0
    %277 = vmatpush.msra.mxu0 0.0
    %278 = vmatpush.msra.mxu0 0.0
    %279 = vmatpush.msra.mxu0 0.0
    %280 = vmatpush.msra.mxu0 %v79
    %281 = vmatpush.msra.mxu0 %v73
    %282 = vmatmul.f32.gmra.mxu0 %v110
    %v283 = vpop.f32.mrf.mxu0
    %v284 = vadd.f32 %v91, %v283
    %285 = vmatmul.f32.gmra.mxu0 %v113
    %v286 = vpop.f32.mrf.mxu0
    %v287 = vadd.f32 %v96, %v286
    %288 = vmatmul.f32.gmra.mxu0 %v116
    %v289 = vpop.f32.mrf.mxu0
    %v290 = vadd.f32 %v101, %v289
    %291 = vmatmul.f32.gmra.mxu0 %v119
    %v292 = vpop.f32.mrf.mxu0
    %v293 = vadd.f32 %v106, %v292
    %294 = vdwg.mxu0
    %vm295 = vcmp.ge.f32.partialorder %v139, 0.0
    %vm296 = vcmp.ge.f32.partialorder %v168, 0.0
    %vm297 = vcmp.ge.f32.partialorder %v197, 0.0
    %vm298 = vcmp.ge.f32.partialorder %v226, 0.0
    %vm299 = vcmp.ge.f32.partialorder %v255, 0.0
    %vm300 = vcmp.ge.f32.partialorder %v284, 0.0
    %vm301 = vcmp.ge.f32.partialorder %v142, 0.0
    %vm302 = vcmp.ge.f32.partialorder %v171, 0.0
    %vm303 = vcmp.ge.f32.partialorder %v200, 0.0
    %vm304 = vcmp.ge.f32.partialorder %v229, 0.0
    %vm305 = vcmp.ge.f32.partialorder %v258, 0.0
    %vm306 = vcmp.ge.f32.partialorder %v287, 0.0
    %vm307 = vcmp.ge.f32.partialorder %v145, 0.0
    %vm308 = vcmp.ge.f32.partialorder %v174, 0.0
    %vm309 = vcmp.ge.f32.partialorder %v203, 0.0
    %vm310 = vcmp.ge.f32.partialorder %v232, 0.0
    %vm311 = vcmp.ge.f32.partialorder %v261, 0.0
    %vm312 = vcmp.ge.f32.partialorder %v290, 0.0
    %vm313 = vcmp.ge.f32.partialorder %v148, 0.0
    %vm314 = vcmp.ge.f32.partialorder %v177, 0.0
    %vm315 = vcmp.ge.f32.partialorder %v206, 0.0
    %vm316 = vcmp.ge.f32.partialorder %v235, 0.0
    %vm317 = vcmp.ge.f32.partialorder %v264, 0.0
    %vm318 = vcmp.ge.f32.partialorder %v293, 0.0
    %v319 = vmul.f32 %v139, 0.01
    %v320 = vmul.f32 %v168, 0.01
    %v321 = vmul.f32 %v197, 0.01
    %v322 = vmul.f32 %v226, 0.01
    %v323 = vmul.f32 %v255, 0.01
    %v324 = vmul.f32 %v284, 0.01
    %v325 = vmul.f32 %v142, 0.01
    %v326 = vmul.f32 %v171, 0.01
    %v327 = vmul.f32 %v200, 0.01
    %v328 = vmul.f32 %v229, 0.01
    %v329 = vmul.f32 %v258, 0.01
    %v330 = vmul.f32 %v287, 0.01
    %v331 = vmul.f32 %v145, 0.01
    %v332 = vmul.f32 %v174, 0.01
    %v333 = vmul.f32 %v203, 0.01
    %v334 = vmul.f32 %v232, 0.01
    %v335 = vmul.f32 %v261, 0.01
    %v336 = vmul.f32 %v290, 0.01
    %v337 = vmul.f32 %v148, 0.01
    %v338 = vmul.f32 %v177, 0.01
    %v339 = vmul.f32 %v206, 0.01
    %v340 = vmul.f32 %v235, 0.01
    %v341 = vmul.f32 %v264, 0.01
    %v342 = vmul.f32 %v293, 0.01
    %v343 = vsel %vm295, %v139, %v319
    %v344 = vsel %vm296, %v168, %v320
    %v345 = vsel %vm297, %v197, %v321
    %v346 = vsel %vm298, %v226, %v322
    %v347 = vsel %vm299, %v255, %v323
    %v348 = vsel %vm300, %v284, %v324
    %v349 = vsel %vm301, %v142, %v325
    %v350 = vsel %vm302, %v171, %v326
    %v351 = vsel %vm303, %v200, %v327
    %v352 = vsel %vm304, %v229, %v328
    %v353 = vsel %vm305, %v258, %v329
    %v354 = vsel %vm306, %v287, %v330
    %v355 = vsel %vm307, %v145, %v331
    %v356 = vsel %vm308, %v174, %v332
    %v357 = vsel %vm309, %v203, %v333
    %v358 = vsel %vm310, %v232, %v334
    %v359 = vsel %vm311, %v261, %v335
    %v360 = vsel %vm312, %v290, %v336
    %v361 = vsel %vm313, %v148, %v337
    %v362 = vsel %vm314, %v177, %v338
    %v363 = vsel %vm315, %v206, %v339
    %v364 = vsel %vm316, %v235, %v340
    %v365 = vsel %vm317, %v264, %v341
    %v366 = vsel %vm318, %v293, %v342
    %v368 = vperm.slane %v43, 0
    %v369 = vperm.slane %v43, 1
    %v370 = vperm.slane %v43, 2
    %v371 = vperm.slane %v43, 3
    %v372 = vperm.slane %v43, 4
    %v373 = vperm.slane %v43, 5
    %v380 = vmul.f32 %v343, %v368
    %v381 = vmul.f32 %v344, %v369
    %v382 = vmul.f32 %v345, %v370
    %v383 = vmul.f32 %v346, %v371
    %v384 = vmul.f32 %v347, %v372
    %v385 = vmul.f32 %v348, %v373
    %v386 = vmul.f32 %v349, %v368
    %v387 = vmul.f32 %v350, %v369
    %v388 = vmul.f32 %v351, %v370
    %v389 = vmul.f32 %v352, %v371
    %v390 = vmul.f32 %v353, %v372
    %v391 = vmul.f32 %v354, %v373
    %v392 = vmul.f32 %v355, %v368
    %v393 = vmul.f32 %v356, %v369
    %v394 = vmul.f32 %v357, %v370
    %v395 = vmul.f32 %v358, %v371
    %v396 = vmul.f32 %v359, %v372
    %v397 = vmul.f32 %v360, %v373
    %v398 = vmul.f32 %v361, %v368
    %v399 = vmul.f32 %v362, %v369
    %v400 = vmul.f32 %v363, %v370
    %v401 = vmul.f32 %v364, %v371
    %v402 = vmul.f32 %v365, %v372
    %v403 = vmul.f32 %v366, %v373
    %404 = vrot.lane.b32.xlu0 %v380, 19
    %v405 = vpop.permute.xlu0 %404
    %406 = vrot.lane.b32.xlu0 %v386, 19
    %v407 = vpop.permute.xlu0 %406
    %408 = vrot.lane.b32.xlu0 %v392, 19
    %v409 = vpop.permute.xlu0 %408
    %410 = vrot.lane.b32.xlu0 %v398, 19
    %v411 = vpop.permute.xlu0 %410
    %412 = vrot.lane.b32.xlu0 %v381, 19
    %v413 = vpop.permute.xlu0 %412
    %414 = vrot.lane.b32.xlu0 %v387, 19
    %v415 = vpop.permute.xlu0 %414
    %416 = vrot.lane.b32.xlu0 %v393, 19
    %v417 = vpop.permute.xlu0 %416
    %418 = vrot.lane.b32.xlu0 %v399, 19
    %v419 = vpop.permute.xlu0 %418
    %420 = vrot.lane.b32.xlu0 %v382, 19
    %v421 = vpop.permute.xlu0 %420
    %422 = vrot.lane.b32.xlu0 %v388, 19
    %v423 = vpop.permute.xlu0 %422
    %424 = vrot.lane.b32.xlu0 %v394, 19
    %v425 = vpop.permute.xlu0 %424
    %426 = vrot.lane.b32.xlu0 %v400, 19
    %v427 = vpop.permute.xlu0 %426
    %428 = vrot.lane.b32.xlu0 %v383, 19
    %v429 = vpop.permute.xlu0 %428
    %430 = vrot.lane.b32.xlu0 %v389, 19
    %v431 = vpop.permute.xlu0 %430
    %432 = vrot.lane.b32.xlu0 %v395, 19
    %v433 = vpop.permute.xlu0 %432
    %434 = vrot.lane.b32.xlu0 %v401, 19
    %v435 = vpop.permute.xlu0 %434
    %436 = vrot.lane.b32.xlu0 %v384, 19
    %v437 = vpop.permute.xlu0 %436
    %438 = vrot.lane.b32.xlu0 %v390, 19
    %v439 = vpop.permute.xlu0 %438
    %440 = vrot.lane.b32.xlu0 %v396, 19
    %v441 = vpop.permute.xlu0 %440
    %442 = vrot.lane.b32.xlu0 %v402, 19
    %v443 = vpop.permute.xlu0 %442
    %444 = vrot.lane.b32.xlu0 %v385, 19
    %v445 = vpop.permute.xlu0 %444
    %446 = vrot.lane.b32.xlu0 %v391, 19
    %v447 = vpop.permute.xlu0 %446
    %448 = vrot.lane.b32.xlu0 %v397, 19
    %v449 = vpop.permute.xlu0 %448
    %450 = vrot.lane.b32.xlu0 %v403, 19
    %v451 = vpop.permute.xlu0 %450
    %v452 = vlaneseq
    %v453 = vand.u32 %v452, 127
    %vm454 = vcmp.lt.s32.totalorder %v453, 19
    %v455 = vsel %vm454, %v437, %v445
    %v456 = vsel %vm454, %v439, %v447
    %v457 = vsel %vm454, %v441, %v449
    %v458 = vsel %vm454, %v443, %v451
    %v459 = vsel %vm454, %v429, %v437
    %v460 = vsel %vm454, %v431, %v439
    %v461 = vsel %vm454, %v433, %v441
    %v462 = vsel %vm454, %v435, %v443
    %v463 = vsel %vm454, %v421, %v429
    %v464 = vsel %vm454, %v423, %v431
    %v465 = vsel %vm454, %v425, %v433
    %v466 = vsel %vm454, %v427, %v435
    %v467 = vsel %vm454, %v413, %v421
    %v468 = vsel %vm454, %v415, %v423
    %v469 = vsel %vm454, %v417, %v425
    %v470 = vsel %vm454, %v419, %v427
    %v471 = vsel %vm454, %v405, %v413
    %v472 = vsel %vm454, %v407, %v415
    %v473 = vsel %vm454, %v409, %v417
    %v474 = vsel %vm454, %v411, %v419
    %v475 = vsel %vm454, %v445, %v405
    %v476 = vsel %vm454, %v447, %v407
    %v477 = vsel %vm454, %v449, %v409
    %v478 = vsel %vm454, %v451, %v411
    %479 = vst [vmem:[#allocation2] sm:$0xff] %v475
    %480 = vst [vmem:[#allocation2 + $0x8] sm:$0xff] %v471
    %481 = vst [vmem:[#allocation2 + $0x10] sm:$0xff] %v467
    %482 = vst [vmem:[#allocation2 + $0x18] sm:$0xff] %v463
    %483 = vst [vmem:[#allocation2 + $0x20] sm:$0xff] %v459
    %484 = vst [vmem:[#allocation2 + $0x28] sm:$0xff] %v455
    %485 = vst [vmem:[#allocation2 + $0x30] sm:$0xff] %v476
    %486 = vst [vmem:[#allocation2 + $0x38] sm:$0xff] %v472
    %487 = vst [vmem:[#allocation2 + $0x40] sm:$0xff] %v468
    %488 = vst [vmem:[#allocation2 + $0x48] sm:$0xff] %v464
    %489 = vst [vmem:[#allocation2 + $0x50] sm:$0xff] %v460
    %490 = vst [vmem:[#allocation2 + $0x58] sm:$0xff] %v456
    %491 = vst [vmem:[#allocation2 + $0x60] sm:$0xff] %v477
    %492 = vst [vmem:[#allocation2 + $0x68] sm:$0xff] %v473
    %493 = vst [vmem:[#allocation2 + $0x70] sm:$0xff] %v469
    %494 = vst [vmem:[#allocation2 + $0x78] sm:$0xff] %v465
    %495 = vst [vmem:[#allocation2 + $0x80] sm:$0xff] %v461
    %496 = vst [vmem:[#allocation2 + $0x88] sm:$0xff] %v457
    %497 = vst [vmem:[#allocation2 + $0x90] sm:$0xff] %v478
    %498 = vst [vmem:[#allocation2 + $0x98] sm:$0xff] %v474
    %499 = vst [vmem:[#allocation2 + $0xa0] sm:$0xff] %v470
    %500 = vst [vmem:[#allocation2 + $0xa8] sm:$0xff] %v466
    %501 = vst [vmem:[#allocation2 + $0xb0] sm:$0xff] %v462
    %502 = vst [vmem:[#allocation2 + $0xb8] sm:$0xff] %v458
    %503 = vrot.lane.b32.xlu0 %v380, 18
    %v504 = vpop.permute.xlu0 %503
    %505 = vrot.lane.b32.xlu0 %v386, 18
    %v506 = vpop.permute.xlu0 %505
    %507 = vrot.lane.b32.xlu0 %v392, 18
    %v508 = vpop.permute.xlu0 %507
    %509 = vrot.lane.b32.xlu0 %v398, 18
    %v510 = vpop.permute.xlu0 %509
    %511 = vrot.lane.b32.xlu0 %v381, 18
    %v512 = vpop.permute.xlu0 %511
    %513 = vrot.lane.b32.xlu0 %v387, 18
    %v514 = vpop.permute.xlu0 %513
    %515 = vrot.lane.b32.xlu0 %v393, 18
    %v516 = vpop.permute.xlu0 %515
    %517 = vrot.lane.b32.xlu0 %v399, 18
    %v518 = vpop.permute.xlu0 %517
    %519 = vrot.lane.b32.xlu0 %v382, 18
    %v520 = vpop.permute.xlu0 %519
    %521 = vrot.lane.b32.xlu0 %v388, 18
    %v522 = vpop.permute.xlu0 %521
    %523 = vrot.lane.b32.xlu0 %v394, 18
    %v524 = vpop.permute.xlu0 %523
    %525 = vrot.lane.b32.xlu0 %v400, 18
    %v526 = vpop.permute.xlu0 %525
    %527 = vrot.lane.b32.xlu0 %v383, 18
    %v528 = vpop.permute.xlu0 %527
    %529 = vrot.lane.b32.xlu0 %v389, 18
    %v530 = vpop.permute.xlu0 %529
    %531 = vrot.lane.b32.xlu0 %v395, 18
    %v532 = vpop.permute.xlu0 %531
    %533 = vrot.lane.b32.xlu0 %v401, 18
    %v534 = vpop.permute.xlu0 %533
    %535 = vrot.lane.b32.xlu0 %v384, 18
    %v536 = vpop.permute.xlu0 %535
    %537 = vrot.lane.b32.xlu0 %v390, 18
    %v538 = vpop.permute.xlu0 %537
    %539 = vrot.lane.b32.xlu0 %v396, 18
    %v540 = vpop.permute.xlu0 %539
    %541 = vrot.lane.b32.xlu0 %v402, 18
    %v542 = vpop.permute.xlu0 %541
    %543 = vrot.lane.b32.xlu0 %v385, 18
    %v544 = vpop.permute.xlu0 %543
    %545 = vrot.lane.b32.xlu0 %v391, 18
    %v546 = vpop.permute.xlu0 %545
    %547 = vrot.lane.b32.xlu0 %v397, 18
    %v548 = vpop.permute.xlu0 %547
    %549 = vrot.lane.b32.xlu0 %v403, 18
    %v550 = vpop.permute.xlu0 %549
    %vm551 = vcmp.lt.s32.totalorder %v453, 18
    %v552 = vsel %vm551, %v536, %v544
    %v553 = vsel %vm551, %v538, %v546
    %v554 = vsel %vm551, %v540, %v548
    %v555 = vsel %vm551, %v542, %v550
    %v556 = vsel %vm551, %v528, %v536
    %v557 = vsel %vm551, %v530, %v538
    %v558 = vsel %vm551, %v532, %v540
    %v559 = vsel %vm551, %v534, %v542
    %v560 = vsel %vm551, %v520, %v528
    %v561 = vsel %vm551, %v522, %v530
    %v562 = vsel %vm551, %v524, %v532
    %v563 = vsel %vm551, %v526, %v534
    %v564 = vsel %vm551, %v512, %v520
    %v565 = vsel %vm551, %v514, %v522
    %v566 = vsel %vm551, %v516, %v524
    %v567 = vsel %vm551, %v518, %v526
    %v568 = vsel %vm551, %v504, %v512
    %v569 = vsel %vm551, %v506, %v514
    %v570 = vsel %vm551, %v508, %v516
    %v571 = vsel %vm551, %v510, %v518
    %v572 = vsel %vm551, %v544, %v504
    %v573 = vsel %vm551, %v546, %v506
    %v574 = vsel %vm551, %v548, %v508
    %v575 = vsel %vm551, %v550, %v510
    %576 = vst [vmem:[#allocation2 + $0xc0] sm:$0xff] %v572
    %577 = vst [vmem:[#allocation2 + $0xc8] sm:$0xff] %v568
    %578 = vst [vmem:[#allocation2 + $0xd0] sm:$0xff] %v564
    %579 = vst [vmem:[#allocation2 + $0xd8] sm:$0xff] %v560
    %580 = vst [vmem:[#allocation2 + $0xe0] sm:$0xff] %v556
    %581 = vst [vmem:[#allocation2 + $0xe8] sm:$0xff] %v552
    %582 = vst [vmem:[#allocation2 + $0xf0] sm:$0xff] %v573
    %583 = vst [vmem:[#allocation2 + $0xf8] sm:$0xff] %v569
    %584 = vst [vmem:[#allocation2 + $0x100] sm:$0xff] %v565
    %585 = vst [vmem:[#allocation2 + $0x108] sm:$0xff] %v561
    %586 = vst [vmem:[#allocation2 + $0x110] sm:$0xff] %v557
    %587 = vst [vmem:[#allocation2 + $0x118] sm:$0xff] %v553
    %588 = vst [vmem:[#allocation2 + $0x120] sm:$0xff] %v574
    %589 = vst [vmem:[#allocation2 + $0x128] sm:$0xff] %v570
    %590 = vst [vmem:[#allocation2 + $0x130] sm:$0xff] %v566
    %591 = vst [vmem:[#allocation2 + $0x138] sm:$0xff] %v562
    %592 = vst [vmem:[#allocation2 + $0x140] sm:$0xff] %v558
    %593 = vst [vmem:[#allocation2 + $0x148] sm:$0xff] %v554
    %594 = vst [vmem:[#allocation2 + $0x150] sm:$0xff] %v575
    %595 = vst [vmem:[#allocation2 + $0x158] sm:$0xff] %v571
    %596 = vst [vmem:[#allocation2 + $0x160] sm:$0xff] %v567
    %597 = vst [vmem:[#allocation2 + $0x168] sm:$0xff] %v563
    %598 = vst [vmem:[#allocation2 + $0x170] sm:$0xff] %v559
    %599 = vst [vmem:[#allocation2 + $0x178] sm:$0xff] %v555
    %600 = vrot.lane.b32.xlu0 %v380, 17
    %v601 = vpop.permute.xlu0 %600
    %602 = vrot.lane.b32.xlu0 %v386, 17
    %v603 = vpop.permute.xlu0 %602
    %604 = vrot.lane.b32.xlu0 %v392, 17
    %v605 = vpop.permute.xlu0 %604
    %606 = vrot.lane.b32.xlu0 %v398, 17
    %v607 = vpop.permute.xlu0 %606
    %608 = vrot.lane.b32.xlu0 %v381, 17
    %v609 = vpop.permute.xlu0 %608
    %610 = vrot.lane.b32.xlu0 %v387, 17
    %v611 = vpop.permute.xlu0 %610
    %612 = vrot.lane.b32.xlu0 %v393, 17
    %v613 = vpop.permute.xlu0 %612
    %614 = vrot.lane.b32.xlu0 %v399, 17
    %v615 = vpop.permute.xlu0 %614
    %616 = vrot.lane.b32.xlu0 %v382, 17
    %v617 = vpop.permute.xlu0 %616
    %618 = vrot.lane.b32.xlu0 %v388, 17
    %v619 = vpop.permute.xlu0 %618
    %620 = vrot.lane.b32.xlu0 %v394, 17
    %v621 = vpop.permute.xlu0 %620
    %622 = vrot.lane.b32.xlu0 %v400, 17
    %v623 = vpop.permute.xlu0 %622
    %624 = vrot.lane.b32.xlu0 %v383, 17
    %v625 = vpop.permute.xlu0 %624
    %626 = vrot.lane.b32.xlu0 %v389, 17
    %v627 = vpop.permute.xlu0 %626
    %628 = vrot.lane.b32.xlu0 %v395, 17
    %v629 = vpop.permute.xlu0 %628
    %630 = vrot.lane.b32.xlu0 %v401, 17
    %v631 = vpop.permute.xlu0 %630
    %632 = vrot.lane.b32.xlu0 %v384, 17
    %v633 = vpop.permute.xlu0 %632
    %634 = vrot.lane.b32.xlu0 %v390, 17
    %v635 = vpop.permute.xlu0 %634
    %636 = vrot.lane.b32.xlu0 %v396, 17
    %v637 = vpop.permute.xlu0 %636
    %638 = vrot.lane.b32.xlu0 %v402, 17
    %v639 = vpop.permute.xlu0 %638
    %640 = vrot.lane.b32.xlu0 %v385, 17
    %v641 = vpop.permute.xlu0 %640
    %642 = vrot.lane.b32.xlu0 %v391, 17
    %v643 = vpop.permute.xlu0 %642
    %644 = vrot.lane.b32.xlu0 %v397, 17
    %v645 = vpop.permute.xlu0 %644
    %646 = vrot.lane.b32.xlu0 %v403, 17
    %v647 = vpop.permute.xlu0 %646
    %vm648 = vcmp.lt.s32.totalorder %v453, 17
    %v649 = vsel %vm648, %v633, %v641
    %v650 = vsel %vm648, %v635, %v643
    %v651 = vsel %vm648, %v637, %v645
    %v652 = vsel %vm648, %v639, %v647
    %v653 = vsel %vm648, %v625, %v633
    %v654 = vsel %vm648, %v627, %v635
    %v655 = vsel %vm648, %v629, %v637
    %v656 = vsel %vm648, %v631, %v639
    %v657 = vsel %vm648, %v617, %v625
    %v658 = vsel %vm648, %v619, %v627
    %v659 = vsel %vm648, %v621, %v629
    %v660 = vsel %vm648, %v623, %v631
    %v661 = vsel %vm648, %v609, %v617
    %v662 = vsel %vm648, %v611, %v619
    %v663 = vsel %vm648, %v613, %v621
    %v664 = vsel %vm648, %v615, %v623
    %v665 = vsel %vm648, %v601, %v609
    %v666 = vsel %vm648, %v603, %v611
    %v667 = vsel %vm648, %v605, %v613
    %v668 = vsel %vm648, %v607, %v615
    %v669 = vsel %vm648, %v641, %v601
    %v670 = vsel %vm648, %v643, %v603
    %v671 = vsel %vm648, %v645, %v605
    %v672 = vsel %vm648, %v647, %v607
    %673 = vst [vmem:[#allocation2 + $0x180] sm:$0xff] %v669
    %674 = vst [vmem:[#allocation2 + $0x188] sm:$0xff] %v665
    %675 = vst [vmem:[#allocation2 + $0x190] sm:$0xff] %v661
    %676 = vst [vmem:[#allocation2 + $0x198] sm:$0xff] %v657
    %677 = vst [vmem:[#allocation2 + $0x1a0] sm:$0xff] %v653
    %678 = vst [vmem:[#allocation2 + $0x1a8] sm:$0xff] %v649
    %679 = vst [vmem:[#allocation2 + $0x1b0] sm:$0xff] %v670
    %680 = vst [vmem:[#allocation2 + $0x1b8] sm:$0xff] %v666
    %681 = vst [vmem:[#allocation2 + $0x1c0] sm:$0xff] %v662
    %682 = vst [vmem:[#allocation2 + $0x1c8] sm:$0xff] %v658
    %683 = vst [vmem:[#allocation2 + $0x1d0] sm:$0xff] %v654
    %684 = vst [vmem:[#allocation2 + $0x1d8] sm:$0xff] %v650
    %685 = vst [vmem:[#allocation2 + $0x1e0] sm:$0xff] %v671
    %686 = vst [vmem:[#allocation2 + $0x1e8] sm:$0xff] %v667
    %687 = vst [vmem:[#allocation2 + $0x1f0] sm:$0xff] %v663
    %688 = vst [vmem:[#allocation2 + $0x1f8] sm:$0xff] %v659
    %689 = vst [vmem:[#allocation2 + $0x200] sm:$0xff] %v655
    %690 = vst [vmem:[#allocation2 + $0x208] sm:$0xff] %v651
    %691 = vst [vmem:[#allocation2 + $0x210] sm:$0xff] %v672
    %692 = vst [vmem:[#allocation2 + $0x218] sm:$0xff] %v668
    %693 = vst [vmem:[#allocation2 + $0x220] sm:$0xff] %v664
    %694 = vst [vmem:[#allocation2 + $0x228] sm:$0xff] %v660
    %695 = vst [vmem:[#allocation2 + $0x230] sm:$0xff] %v656
    %696 = vst [vmem:[#allocation2 + $0x238] sm:$0xff] %v652
    %697 = vrot.lane.b32.xlu0 %v380, 1
    %v698 = vpop.permute.xlu0 %697
    %699 = vrot.lane.b32.xlu0 %v386, 1
    %v700 = vpop.permute.xlu0 %699
    %701 = vrot.lane.b32.xlu0 %v392, 1
    %v702 = vpop.permute.xlu0 %701
    %703 = vrot.lane.b32.xlu0 %v398, 1
    %v704 = vpop.permute.xlu0 %703
    %705 = vrot.lane.b32.xlu0 %v381, 1
    %v706 = vpop.permute.xlu0 %705
    %707 = vrot.lane.b32.xlu0 %v387, 1
    %v708 = vpop.permute.xlu0 %707
    %709 = vrot.lane.b32.xlu0 %v393, 1
    %v710 = vpop.permute.xlu0 %709
    %711 = vrot.lane.b32.xlu0 %v399, 1
    %v712 = vpop.permute.xlu0 %711
    %713 = vrot.lane.b32.xlu0 %v382, 1
    %v714 = vpop.permute.xlu0 %713
    %715 = vrot.lane.b32.xlu0 %v388, 1
    %v716 = vpop.permute.xlu0 %715
    %717 = vrot.lane.b32.xlu0 %v394, 1
    %v718 = vpop.permute.xlu0 %717
    %719 = vrot.lane.b32.xlu0 %v400, 1
    %v720 = vpop.permute.xlu0 %719
    %721 = vrot.lane.b32.xlu0 %v383, 1
    %v722 = vpop.permute.xlu0 %721
    %723 = vrot.lane.b32.xlu0 %v389, 1
    %v724 = vpop.permute.xlu0 %723
    %725 = vrot.lane.b32.xlu0 %v395, 1
    %v726 = vpop.permute.xlu0 %725
    %727 = vrot.lane.b32.xlu0 %v401, 1
    %v728 = vpop.permute.xlu0 %727
    %729 = vrot.lane.b32.xlu0 %v384, 1
    %v730 = vpop.permute.xlu0 %729
    %731 = vrot.lane.b32.xlu0 %v390, 1
    %v732 = vpop.permute.xlu0 %731
    %733 = vrot.lane.b32.xlu0 %v396, 1
    %v734 = vpop.permute.xlu0 %733
    %735 = vrot.lane.b32.xlu0 %v402, 1
    %v736 = vpop.permute.xlu0 %735
    %737 = vrot.lane.b32.xlu0 %v385, 1
    %v738 = vpop.permute.xlu0 %737
    %739 = vrot.lane.b32.xlu0 %v391, 1
    %v740 = vpop.permute.xlu0 %739
    %741 = vrot.lane.b32.xlu0 %v397, 1
    %v742 = vpop.permute.xlu0 %741
    %743 = vrot.lane.b32.xlu0 %v403, 1
    %v744 = vpop.permute.xlu0 %743
    %vm745 = vcmp.lt.s32.totalorder %v453, 1
    %v746 = vsel %vm745, %v730, %v738
    %v747 = vsel %vm745, %v732, %v740
    %v748 = vsel %vm745, %v734, %v742
    %v749 = vsel %vm745, %v736, %v744
    %v750 = vsel %vm745, %v722, %v730
    %v751 = vsel %vm745, %v724, %v732
    %v752 = vsel %vm745, %v726, %v734
    %v753 = vsel %vm745, %v728, %v736
    %v754 = vsel %vm745, %v714, %v722
    %v755 = vsel %vm745, %v716, %v724
    %v756 = vsel %vm745, %v718, %v726
    %v757 = vsel %vm745, %v720, %v728
    %v758 = vsel %vm745, %v706, %v714
    %v759 = vsel %vm745, %v708, %v716
    %v760 = vsel %vm745, %v710, %v718
    %v761 = vsel %vm745, %v712, %v720
    %v762 = vsel %vm745, %v698, %v706
    %v763 = vsel %vm745, %v700, %v708
    %v764 = vsel %vm745, %v702, %v710
    %v765 = vsel %vm745, %v704, %v712
    %v766 = vsel %vm745, %v738, %v698
    %v767 = vsel %vm745, %v740, %v700
    %v768 = vsel %vm745, %v742, %v702
    %v769 = vsel %vm745, %v744, %v704
    %770 = vst [vmem:[#allocation2 + $0x240] sm:$0xff] %v766
    %771 = vst [vmem:[#allocation2 + $0x248] sm:$0xff] %v762
    %772 = vst [vmem:[#allocation2 + $0x250] sm:$0xff] %v758
    %773 = vst [vmem:[#allocation2 + $0x258] sm:$0xff] %v754
    %774 = vst [vmem:[#allocation2 + $0x260] sm:$0xff] %v750
    %775 = vst [vmem:[#allocation2 + $0x268] sm:$0xff] %v746
    %776 = vst [vmem:[#allocation2 + $0x270] sm:$0xff] %v767
    %777 = vst [vmem:[#allocation2 + $0x278] sm:$0xff] %v763
    %778 = vst [vmem:[#allocation2 + $0x280] sm:$0xff] %v759
    %779 = vst [vmem:[#allocation2 + $0x288] sm:$0xff] %v755
    %780 = vst [vmem:[#allocation2 + $0x290] sm:$0xff] %v751
    %781 = vst [vmem:[#allocation2 + $0x298] sm:$0xff] %v747
    %782 = vst [vmem:[#allocation2 + $0x2a0] sm:$0xff] %v768
    %783 = vst [vmem:[#allocation2 + $0x2a8] sm:$0xff] %v764
    %784 = vst [vmem:[#allocation2 + $0x2b0] sm:$0xff] %v760
    %785 = vst [vmem:[#allocation2 + $0x2b8] sm:$0xff] %v756
    %786 = vst [vmem:[#allocation2 + $0x2c0] sm:$0xff] %v752
    %787 = vst [vmem:[#allocation2 + $0x2c8] sm:$0xff] %v748
    %788 = vst [vmem:[#allocation2 + $0x2d0] sm:$0xff] %v769
    %789 = vst [vmem:[#allocation2 + $0x2d8] sm:$0xff] %v765
    %790 = vst [vmem:[#allocation2 + $0x2e0] sm:$0xff] %v761
    %791 = vst [vmem:[#allocation2 + $0x2e8] sm:$0xff] %v757
    %792 = vst [vmem:[#allocation2 + $0x2f0] sm:$0xff] %v753
    %793 = vst [vmem:[#allocation2 + $0x2f8] sm:$0xff] %v749
    %794 = vst [vmem:[#allocation2 + $0x300] sm:$0xff] %v380
    %795 = vst [vmem:[#allocation2 + $0x308] sm:$0xff] %v381
    %796 = vst [vmem:[#allocation2 + $0x310] sm:$0xff] %v382
    %797 = vst [vmem:[#allocation2 + $0x318] sm:$0xff] %v383
    %798 = vst [vmem:[#allocation2 + $0x320] sm:$0xff] %v384
    %799 = vst [vmem:[#allocation2 + $0x328] sm:$0xff] %v385
    %800 = vst [vmem:[#allocation2 + $0x330] sm:$0xff] %v386
    %801 = vst [vmem:[#allocation2 + $0x338] sm:$0xff] %v387
    %802 = vst [vmem:[#allocation2 + $0x340] sm:$0xff] %v388
    %803 = vst [vmem:[#allocation2 + $0x348] sm:$0xff] %v389
    %804 = vst [vmem:[#allocation2 + $0x350] sm:$0xff] %v390
    %805 = vst [vmem:[#allocation2 + $0x358] sm:$0xff] %v391
    %806 = vst [vmem:[#allocation2 + $0x360] sm:$0xff] %v392
    %807 = vst [vmem:[#allocation2 + $0x368] sm:$0xff] %v393
    %808 = vst [vmem:[#allocation2 + $0x370] sm:$0xff] %v394
    %809 = vst [vmem:[#allocation2 + $0x378] sm:$0xff] %v395
    %810 = vst [vmem:[#allocation2 + $0x380] sm:$0xff] %v396
    %811 = vst [vmem:[#allocation2 + $0x388] sm:$0xff] %v397
    %812 = vst [vmem:[#allocation2 + $0x390] sm:$0xff] %v398
    %813 = vst [vmem:[#allocation2 + $0x398] sm:$0xff] %v399
    %814 = vst [vmem:[#allocation2 + $0x3a0] sm:$0xff] %v400
    %815 = vst [vmem:[#allocation2 + $0x3a8] sm:$0xff] %v401
    %816 = vst [vmem:[#allocation2 + $0x3b0] sm:$0xff] %v402
    %817 = vst [vmem:[#allocation2 + $0x3b8] sm:$0xff] %v403
    %818 = vrot.lane.b32.xlu0 %v380, 127
    %v819 = vpop.permute.xlu0 %818
    %820 = vrot.lane.b32.xlu0 %v386, 127
    %v821 = vpop.permute.xlu0 %820
    %822 = vrot.lane.b32.xlu0 %v392, 127
    %v823 = vpop.permute.xlu0 %822
    %824 = vrot.lane.b32.xlu0 %v398, 127
    %v825 = vpop.permute.xlu0 %824
    %826 = vrot.lane.b32.xlu0 %v381, 127
    %v827 = vpop.permute.xlu0 %826
    %828 = vrot.lane.b32.xlu0 %v387, 127
    %v829 = vpop.permute.xlu0 %828
    %830 = vrot.lane.b32.xlu0 %v393, 127
    %v831 = vpop.permute.xlu0 %830
    %832 = vrot.lane.b32.xlu0 %v399, 127
    %v833 = vpop.permute.xlu0 %832
    %834 = vrot.lane.b32.xlu0 %v382, 127
    %v835 = vpop.permute.xlu0 %834
    %836 = vrot.lane.b32.xlu0 %v388, 127
    %v837 = vpop.permute.xlu0 %836
    %838 = vrot.lane.b32.xlu0 %v394, 127
    %v839 = vpop.permute.xlu0 %838
    %840 = vrot.lane.b32.xlu0 %v400, 127
    %v841 = vpop.permute.xlu0 %840
    %842 = vrot.lane.b32.xlu0 %v383, 127
    %v843 = vpop.permute.xlu0 %842
    %844 = vrot.lane.b32.xlu0 %v389, 127
    %v845 = vpop.permute.xlu0 %844
    %846 = vrot.lane.b32.xlu0 %v395, 127
    %v847 = vpop.permute.xlu0 %846
    %848 = vrot.lane.b32.xlu0 %v401, 127
    %v849 = vpop.permute.xlu0 %848
    %850 = vrot.lane.b32.xlu0 %v384, 127
    %v851 = vpop.permute.xlu0 %850
    %852 = vrot.lane.b32.xlu0 %v390, 127
    %v853 = vpop.permute.xlu0 %852
    %854 = vrot.lane.b32.xlu0 %v396, 127
    %v855 = vpop.permute.xlu0 %854
    %856 = vrot.lane.b32.xlu0 %v402, 127
    %v857 = vpop.permute.xlu0 %856
    %858 = vrot.lane.b32.xlu0 %v385, 127
    %v859 = vpop.permute.xlu0 %858
    %860 = vrot.lane.b32.xlu0 %v391, 127
    %v861 = vpop.permute.xlu0 %860
    %862 = vrot.lane.b32.xlu0 %v397, 127
    %v863 = vpop.permute.xlu0 %862
    %864 = vrot.lane.b32.xlu0 %v403, 127
    %v865 = vpop.permute.xlu0 %864
    %vm866 = vcmp.lt.s32.totalorder %v453, 127
    %v867 = vsel %vm866, %v851, %v859
    %v868 = vsel %vm866, %v853, %v861
    %v869 = vsel %vm866, %v855, %v863
    %v870 = vsel %vm866, %v857, %v865
    %v871 = vsel %vm866, %v843, %v851
    %v872 = vsel %vm866, %v845, %v853
    %v873 = vsel %vm866, %v847, %v855
    %v874 = vsel %vm866, %v849, %v857
    %v875 = vsel %vm866, %v835, %v843
    %v876 = vsel %vm866, %v837, %v845
    %v877 = vsel %vm866, %v839, %v847
    %v878 = vsel %vm866, %v841, %v849
    %v879 = vsel %vm866, %v827, %v835
    %v880 = vsel %vm866, %v829, %v837
    %v881 = vsel %vm866, %v831, %v839
    %v882 = vsel %vm866, %v833, %v841
    %v883 = vsel %vm866, %v819, %v827
    %v884 = vsel %vm866, %v821, %v829
    %v885 = vsel %vm866, %v823, %v831
    %v886 = vsel %vm866, %v825, %v833
    %v887 = vsel %vm866, %v859, %v819
    %v888 = vsel %vm866, %v861, %v821
    %v889 = vsel %vm866, %v863, %v823
    %v890 = vsel %vm866, %v865, %v825
    %891 = vst [vmem:[#allocation2 + $0x3c0] sm:$0xff] %v883
    %892 = vst [vmem:[#allocation2 + $0x3c8] sm:$0xff] %v879
    %893 = vst [vmem:[#allocation2 + $0x3d0] sm:$0xff] %v875
    %894 = vst [vmem:[#allocation2 + $0x3d8] sm:$0xff] %v871
    %895 = vst [vmem:[#allocation2 + $0x3e0] sm:$0xff] %v867
    %896 = vst [vmem:[#allocation2 + $0x3e8] sm:$0xff] %v887
    %897 = vst [vmem:[#allocation2 + $0x3f0] sm:$0xff] %v884
    %898 = vst [vmem:[#allocation2 + $0x3f8] sm:$0xff] %v880
    %899 = vst [vmem:[#allocation2 + $0x400] sm:$0xff] %v876
    %900 = vst [vmem:[#allocation2 + $0x408] sm:$0xff] %v872
    %901 = vst [vmem:[#allocation2 + $0x410] sm:$0xff] %v868
    %902 = vst [vmem:[#allocation2 + $0x418] sm:$0xff] %v888
    %903 = vst [vmem:[#allocation2 + $0x420] sm:$0xff] %v885
    %904 = vst [vmem:[#allocation2 + $0x428] sm:$0xff] %v881
    %905 = vst [vmem:[#allocation2 + $0x430] sm:$0xff] %v877
    %906 = vst [vmem:[#allocation2 + $0x438] sm:$0xff] %v873
    %907 = vst [vmem:[#allocation2 + $0x440] sm:$0xff] %v869
    %908 = vst [vmem:[#allocation2 + $0x448] sm:$0xff] %v889
    %909 = vst [vmem:[#allocation2 + $0x450] sm:$0xff] %v886
    %910 = vst [vmem:[#allocation2 + $0x458] sm:$0xff] %v882
    %911 = vst [vmem:[#allocation2 + $0x460] sm:$0xff] %v878
    %912 = vst [vmem:[#allocation2 + $0x468] sm:$0xff] %v874
    %913 = vst [vmem:[#allocation2 + $0x470] sm:$0xff] %v870
    %914 = vst [vmem:[#allocation2 + $0x478] sm:$0xff] %v890
    %915 = vrot.lane.b32.xlu0 %v380, 111
    %v916 = vpop.permute.xlu0 %915
    %917 = vrot.lane.b32.xlu0 %v386, 111
    %v918 = vpop.permute.xlu0 %917
    %919 = vrot.lane.b32.xlu0 %v392, 111
    %v920 = vpop.permute.xlu0 %919
    %921 = vrot.lane.b32.xlu0 %v398, 111
    %v922 = vpop.permute.xlu0 %921
    %923 = vrot.lane.b32.xlu0 %v381, 111
    %v924 = vpop.permute.xlu0 %923
    %925 = vrot.lane.b32.xlu0 %v387, 111
    %v926 = vpop.permute.xlu0 %925
    %927 = vrot.lane.b32.xlu0 %v393, 111
    %v928 = vpop.permute.xlu0 %927
    %929 = vrot.lane.b32.xlu0 %v399, 111
    %v930 = vpop.permute.xlu0 %929
    %931 = vrot.lane.b32.xlu0 %v382, 111
    %v932 = vpop.permute.xlu0 %931
    %933 = vrot.lane.b32.xlu0 %v388, 111
    %v934 = vpop.permute.xlu0 %933
    %935 = vrot.lane.b32.xlu0 %v394, 111
    %v936 = vpop.permute.xlu0 %935
    %937 = vrot.lane.b32.xlu0 %v400, 111
    %v938 = vpop.permute.xlu0 %937
    %939 = vrot.lane.b32.xlu0 %v383, 111
    %v940 = vpop.permute.xlu0 %939
    %941 = vrot.lane.b32.xlu0 %v389, 111
    %v942 = vpop.permute.xlu0 %941
    %943 = vrot.lane.b32.xlu0 %v395, 111
    %v944 = vpop.permute.xlu0 %943
    %945 = vrot.lane.b32.xlu0 %v401, 111
    %v946 = vpop.permute.xlu0 %945
    %947 = vrot.lane.b32.xlu0 %v384, 111
    %v948 = vpop.permute.xlu0 %947
    %949 = vrot.lane.b32.xlu0 %v390, 111
    %v950 = vpop.permute.xlu0 %949
    %951 = vrot.lane.b32.xlu0 %v396, 111
    %v952 = vpop.permute.xlu0 %951
    %953 = vrot.lane.b32.xlu0 %v402, 111
    %v954 = vpop.permute.xlu0 %953
    %955 = vrot.lane.b32.xlu0 %v385, 111
    %v956 = vpop.permute.xlu0 %955
    %957 = vrot.lane.b32.xlu0 %v391, 111
    %v958 = vpop.permute.xlu0 %957
    %959 = vrot.lane.b32.xlu0 %v397, 111
    %v960 = vpop.permute.xlu0 %959
    %961 = vrot.lane.b32.xlu0 %v403, 111
    %v962 = vpop.permute.xlu0 %961
    %vm963 = vcmp.lt.s32.totalorder %v453, 111
    %v964 = vsel %vm963, %v948, %v956
    %v965 = vsel %vm963, %v950, %v958
    %v966 = vsel %vm963, %v952, %v960
    %v967 = vsel %vm963, %v954, %v962
    %v968 = vsel %vm963, %v940, %v948
    %v969 = vsel %vm963, %v942, %v950
    %v970 = vsel %vm963, %v944, %v952
    %v971 = vsel %vm963, %v946, %v954
    %v972 = vsel %vm963, %v932, %v940
    %v973 = vsel %vm963, %v934, %v942
    %v974 = vsel %vm963, %v936, %v944
    %v975 = vsel %vm963, %v938, %v946
    %v976 = vsel %vm963, %v924, %v932
    %v977 = vsel %vm963, %v926, %v934
    %v978 = vsel %vm963, %v928, %v936
    %v979 = vsel %vm963, %v930, %v938
    %v980 = vsel %vm963, %v916, %v924
    %v981 = vsel %vm963, %v918, %v926
    %v982 = vsel %vm963, %v920, %v928
    %v983 = vsel %vm963, %v922, %v930
    %v984 = vsel %vm963, %v956, %v916
    %v985 = vsel %vm963, %v958, %v918
    %v986 = vsel %vm963, %v960, %v920
    %v987 = vsel %vm963, %v962, %v922
    %988 = vst [vmem:[#allocation2 + $0x480] sm:$0xff] %v980
    %989 = vst [vmem:[#allocation2 + $0x488] sm:$0xff] %v976
    %990 = vst [vmem:[#allocation2 + $0x490] sm:$0xff] %v972
    %991 = vst [vmem:[#allocation2 + $0x498] sm:$0xff] %v968
    %992 = vst [vmem:[#allocation2 + $0x4a0] sm:$0xff] %v964
    %993 = vst [vmem:[#allocation2 + $0x4a8] sm:$0xff] %v984
    %994 = vst [vmem:[#allocation2 + $0x4b0] sm:$0xff] %v981
    %995 = vst [vmem:[#allocation2 + $0x4b8] sm:$0xff] %v977
    %996 = vst [vmem:[#allocation2 + $0x4c0] sm:$0xff] %v973
    %997 = vst [vmem:[#allocation2 + $0x4c8] sm:$0xff] %v969
    %998 = vst [vmem:[#allocation2 + $0x4d0] sm:$0xff] %v965
    %999 = vst [vmem:[#allocation2 + $0x4d8] sm:$0xff] %v985
    %1000 = vst [vmem:[#allocation2 + $0x4e0] sm:$0xff] %v982
    %1001 = vst [vmem:[#allocation2 + $0x4e8] sm:$0xff] %v978
    %1002 = vst [vmem:[#allocation2 + $0x4f0] sm:$0xff] %v974
    %1003 = vst [vmem:[#allocation2 + $0x4f8] sm:$0xff] %v970
    %1004 = vst [vmem:[#allocation2 + $0x500] sm:$0xff] %v966
    %1005 = vst [vmem:[#allocation2 + $0x508] sm:$0xff] %v986
    %1006 = vst [vmem:[#allocation2 + $0x510] sm:$0xff] %v983
    %1007 = vst [vmem:[#allocation2 + $0x518] sm:$0xff] %v979
    %1008 = vst [vmem:[#allocation2 + $0x520] sm:$0xff] %v975
    %1009 = vst [vmem:[#allocation2 + $0x528] sm:$0xff] %v971
    %1010 = vst [vmem:[#allocation2 + $0x530] sm:$0xff] %v967
    %1011 = vst [vmem:[#allocation2 + $0x538] sm:$0xff] %v987
    %1012 = vrot.lane.b32.xlu0 %v380, 110
    %v1013 = vpop.permute.xlu0 %1012
    %1014 = vrot.lane.b32.xlu0 %v386, 110
    %v1015 = vpop.permute.xlu0 %1014
    %1016 = vrot.lane.b32.xlu0 %v392, 110
    %v1017 = vpop.permute.xlu0 %1016
    %1018 = vrot.lane.b32.xlu0 %v398, 110
    %v1019 = vpop.permute.xlu0 %1018
    %1020 = vrot.lane.b32.xlu0 %v381, 110
    %v1021 = vpop.permute.xlu0 %1020
    %1022 = vrot.lane.b32.xlu0 %v387, 110
    %v1023 = vpop.permute.xlu0 %1022
    %1024 = vrot.lane.b32.xlu0 %v393, 110
    %v1025 = vpop.permute.xlu0 %1024
    %1026 = vrot.lane.b32.xlu0 %v399, 110
    %v1027 = vpop.permute.xlu0 %1026
    %1028 = vrot.lane.b32.xlu0 %v382, 110
    %v1029 = vpop.permute.xlu0 %1028
    %1030 = vrot.lane.b32.xlu0 %v388, 110
    %v1031 = vpop.permute.xlu0 %1030
    %1032 = vrot.lane.b32.xlu0 %v394, 110
    %v1033 = vpop.permute.xlu0 %1032
    %1034 = vrot.lane.b32.xlu0 %v400, 110
    %v1035 = vpop.permute.xlu0 %1034
    %1036 = vrot.lane.b32.xlu0 %v383, 110
    %v1037 = vpop.permute.xlu0 %1036
    %1038 = vrot.lane.b32.xlu0 %v389, 110
    %v1039 = vpop.permute.xlu0 %1038
    %1040 = vrot.lane.b32.xlu0 %v395, 110
    %v1041 = vpop.permute.xlu0 %1040
    %1042 = vrot.lane.b32.xlu0 %v401, 110
    %v1043 = vpop.permute.xlu0 %1042
    %1044 = vrot.lane.b32.xlu0 %v384, 110
    %v1045 = vpop.permute.xlu0 %1044
    %1046 = vrot.lane.b32.xlu0 %v390, 110
    %v1047 = vpop.permute.xlu0 %1046
    %1048 = vrot.lane.b32.xlu0 %v396, 110
    %v1049 = vpop.permute.xlu0 %1048
    %1050 = vrot.lane.b32.xlu0 %v402, 110
    %v1051 = vpop.permute.xlu0 %1050
    %1052 = vrot.lane.b32.xlu0 %v385, 110
    %v1053 = vpop.permute.xlu0 %1052
    %1054 = vrot.lane.b32.xlu0 %v391, 110
    %v1055 = vpop.permute.xlu0 %1054
    %1056 = vrot.lane.b32.xlu0 %v397, 110
    %v1057 = vpop.permute.xlu0 %1056
    %1058 = vrot.lane.b32.xlu0 %v403, 110
    %v1059 = vpop.permute.xlu0 %1058
    %vm1060 = vcmp.lt.s32.totalorder %v453, 110
    %v1061 = vsel %vm1060, %v1045, %v1053
    %v1062 = vsel %vm1060, %v1047, %v1055
    %v1063 = vsel %vm1060, %v1049, %v1057
    %v1064 = vsel %vm1060, %v1051, %v1059
    %v1065 = vsel %vm1060, %v1037, %v1045
    %v1066 = vsel %vm1060, %v1039, %v1047
    %v1067 = vsel %vm1060, %v1041, %v1049
    %v1068 = vsel %vm1060, %v1043, %v1051
    %v1069 = vsel %vm1060, %v1029, %v1037
    %v1070 = vsel %vm1060, %v1031, %v1039
    %v1071 = vsel %vm1060, %v1033, %v1041
    %v1072 = vsel %vm1060, %v1035, %v1043
    %v1073 = vsel %vm1060, %v1021, %v1029
    %v1074 = vsel %vm1060, %v1023, %v1031
    %v1075 = vsel %vm1060, %v1025, %v1033
    %v1076 = vsel %vm1060, %v1027, %v1035
    %v1077 = vsel %vm1060, %v1013, %v1021
    %v1078 = vsel %vm1060, %v1015, %v1023
    %v1079 = vsel %vm1060, %v1017, %v1025
    %v1080 = vsel %vm1060, %v1019, %v1027
    %v1081 = vsel %vm1060, %v1053, %v1013
    %v1082 = vsel %vm1060, %v1055, %v1015
    %v1083 = vsel %vm1060, %v1057, %v1017
    %v1084 = vsel %vm1060, %v1059, %v1019
    %1085 = vst [vmem:[#allocation2 + $0x540] sm:$0xff] %v1077
    %1086 = vst [vmem:[#allocation2 + $0x548] sm:$0xff] %v1073
    %1087 = vst [vmem:[#allocation2 + $0x550] sm:$0xff] %v1069
    %1088 = vst [vmem:[#allocation2 + $0x558] sm:$0xff] %v1065
    %1089 = vst [vmem:[#allocation2 + $0x560] sm:$0xff] %v1061
    %1090 = vst [vmem:[#allocation2 + $0x568] sm:$0xff] %v1081
    %1091 = vst [vmem:[#allocation2 + $0x570] sm:$0xff] %v1078
    %1092 = vst [vmem:[#allocation2 + $0x578] sm:$0xff] %v1074
    %1093 = vst [vmem:[#allocation2 + $0x580] sm:$0xff] %v1070
    %1094 = vst [vmem:[#allocation2 + $0x588] sm:$0xff] %v1066
    %1095 = vst [vmem:[#allocation2 + $0x590] sm:$0xff] %v1062
    %1096 = vst [vmem:[#allocation2 + $0x598] sm:$0xff] %v1082
    %1097 = vst [vmem:[#allocation2 + $0x5a0] sm:$0xff] %v1079
    %1098 = vst [vmem:[#allocation2 + $0x5a8] sm:$0xff] %v1075
    %1099 = vst [vmem:[#allocation2 + $0x5b0] sm:$0xff] %v1071
    %1100 = vst [vmem:[#allocation2 + $0x5b8] sm:$0xff] %v1067
    %1101 = vst [vmem:[#allocation2 + $0x5c0] sm:$0xff] %v1063
    %1102 = vst [vmem:[#allocation2 + $0x5c8] sm:$0xff] %v1083
    %1103 = vst [vmem:[#allocation2 + $0x5d0] sm:$0xff] %v1080
    %1104 = vst [vmem:[#allocation2 + $0x5d8] sm:$0xff] %v1076
    %1105 = vst [vmem:[#allocation2 + $0x5e0] sm:$0xff] %v1072
    %1106 = vst [vmem:[#allocation2 + $0x5e8] sm:$0xff] %v1068
    %1107 = vst [vmem:[#allocation2 + $0x5f0] sm:$0xff] %v1064
    %1108 = vst [vmem:[#allocation2 + $0x5f8] sm:$0xff] %v1084
    %1109 = vrot.lane.b32.xlu0 %v380, 109
    %v1110 = vpop.permute.xlu0 %1109
    %1111 = vrot.lane.b32.xlu0 %v386, 109
    %v1112 = vpop.permute.xlu0 %1111
    %1113 = vrot.lane.b32.xlu0 %v392, 109
    %v1114 = vpop.permute.xlu0 %1113
    %1115 = vrot.lane.b32.xlu0 %v398, 109
    %v1116 = vpop.permute.xlu0 %1115
    %1117 = vrot.lane.b32.xlu0 %v381, 109
    %v1118 = vpop.permute.xlu0 %1117
    %1119 = vrot.lane.b32.xlu0 %v387, 109
    %v1120 = vpop.permute.xlu0 %1119
    %1121 = vrot.lane.b32.xlu0 %v393, 109
    %v1122 = vpop.permute.xlu0 %1121
    %1123 = vrot.lane.b32.xlu0 %v399, 109
    %v1124 = vpop.permute.xlu0 %1123
    %1125 = vrot.lane.b32.xlu0 %v382, 109
    %v1126 = vpop.permute.xlu0 %1125
    %1127 = vrot.lane.b32.xlu0 %v388, 109
    %v1128 = vpop.permute.xlu0 %1127
    %1129 = vrot.lane.b32.xlu0 %v394, 109
    %v1130 = vpop.permute.xlu0 %1129
    %1131 = vrot.lane.b32.xlu0 %v400, 109
    %v1132 = vpop.permute.xlu0 %1131
    %1133 = vrot.lane.b32.xlu0 %v383, 109
    %v1134 = vpop.permute.xlu0 %1133
    %1135 = vrot.lane.b32.xlu0 %v389, 109
    %v1136 = vpop.permute.xlu0 %1135
    %1137 = vrot.lane.b32.xlu0 %v395, 109
    %v1138 = vpop.permute.xlu0 %1137
    %1139 = vrot.lane.b32.xlu0 %v401, 109
    %v1140 = vpop.permute.xlu0 %1139
    %1141 = vrot.lane.b32.xlu0 %v384, 109
    %v1142 = vpop.permute.xlu0 %1141
    %1143 = vrot.lane.b32.xlu0 %v390, 109
    %v1144 = vpop.permute.xlu0 %1143
    %1145 = vrot.lane.b32.xlu0 %v396, 109
    %v1146 = vpop.permute.xlu0 %1145
    %1147 = vrot.lane.b32.xlu0 %v402, 109
    %v1148 = vpop.permute.xlu0 %1147
    %1149 = vrot.lane.b32.xlu0 %v385, 109
    %v1150 = vpop.permute.xlu0 %1149
    %1151 = vrot.lane.b32.xlu0 %v391, 109
    %v1152 = vpop.permute.xlu0 %1151
    %1153 = vrot.lane.b32.xlu0 %v397, 109
    %v1154 = vpop.permute.xlu0 %1153
    %1155 = vrot.lane.b32.xlu0 %v403, 109
    %v1156 = vpop.permute.xlu0 %1155
    %vm1157 = vcmp.lt.s32.totalorder %v453, 109
    %v1158 = vsel %vm1157, %v1142, %v1150
    %v1159 = vsel %vm1157, %v1144, %v1152
    %v1160 = vsel %vm1157, %v1146, %v1154
    %v1161 = vsel %vm1157, %v1148, %v1156
    %v1162 = vsel %vm1157, %v1134, %v1142
    %v1163 = vsel %vm1157, %v1136, %v1144
    %v1164 = vsel %vm1157, %v1138, %v1146
    %v1165 = vsel %vm1157, %v1140, %v1148
    %v1166 = vsel %vm1157, %v1126, %v1134
    %v1167 = vsel %vm1157, %v1128, %v1136
    %v1168 = vsel %vm1157, %v1130, %v1138
    %v1169 = vsel %vm1157, %v1132, %v1140
    %v1170 = vsel %vm1157, %v1118, %v1126
    %v1171 = vsel %vm1157, %v1120, %v1128
    %v1172 = vsel %vm1157, %v1122, %v1130
    %v1173 = vsel %vm1157, %v1124, %v1132
    %v1174 = vsel %vm1157, %v1110, %v1118
    %v1175 = vsel %vm1157, %v1112, %v1120
    %v1176 = vsel %vm1157, %v1114, %v1122
    %v1177 = vsel %vm1157, %v1116, %v1124
    %v1178 = vsel %vm1157, %v1150, %v1110
    %v1179 = vsel %vm1157, %v1152, %v1112
    %v1180 = vsel %vm1157, %v1154, %v1114
    %v1181 = vsel %vm1157, %v1156, %v1116
    %1182 = vst [vmem:[#allocation2 + $0x600] sm:$0xff] %v1174
    %1183 = vst [vmem:[#allocation2 + $0x608] sm:$0xff] %v1170
    %1184 = vst [vmem:[#allocation2 + $0x610] sm:$0xff] %v1166
    %1185 = vst [vmem:[#allocation2 + $0x618] sm:$0xff] %v1162
    %1186 = vst [vmem:[#allocation2 + $0x620] sm:$0xff] %v1158
    %1187 = vst [vmem:[#allocation2 + $0x628] sm:$0xff] %v1178
    %1188 = vst [vmem:[#allocation2 + $0x630] sm:$0xff] %v1175
    %1189 = vst [vmem:[#allocation2 + $0x638] sm:$0xff] %v1171
    %1190 = vst [vmem:[#allocation2 + $0x640] sm:$0xff] %v1167
    %1191 = vst [vmem:[#allocation2 + $0x648] sm:$0xff] %v1163
    %1192 = vst [vmem:[#allocation2 + $0x650] sm:$0xff] %v1159
    %1193 = vst [vmem:[#allocation2 + $0x658] sm:$0xff] %v1179
    %1194 = vst [vmem:[#allocation2 + $0x660] sm:$0xff] %v1176
    %1195 = vst [vmem:[#allocation2 + $0x668] sm:$0xff] %v1172
    %1196 = vst [vmem:[#allocation2 + $0x670] sm:$0xff] %v1168
    %1197 = vst [vmem:[#allocation2 + $0x678] sm:$0xff] %v1164
    %1198 = vst [vmem:[#allocation2 + $0x680] sm:$0xff] %v1160
    %1199 = vst [vmem:[#allocation2 + $0x688] sm:$0xff] %v1180
    %1200 = vst [vmem:[#allocation2 + $0x690] sm:$0xff] %v1177
    %1201 = vst [vmem:[#allocation2 + $0x698] sm:$0xff] %v1173
    %1202 = vst [vmem:[#allocation2 + $0x6a0] sm:$0xff] %v1169
    %1203 = vst [vmem:[#allocation2 + $0x6a8] sm:$0xff] %v1165
    %1204 = vst [vmem:[#allocation2 + $0x6b0] sm:$0xff] %v1161
    %1205 = vst [vmem:[#allocation2 + $0x6b8] sm:$0xff] %v1181
    %v1206 = vld [vmem:[#allocation3] sm:$0xff]
    %v1207 = vld [vmem:[#allocation3 + $0x8] sm:$0xff]
    %v1208 = vld [vmem:[#allocation3 + $0x10] sm:$0xff]
    %v1209 = vld [vmem:[#allocation3 + $0x18] sm:$0xff]
    %v1210 = vld [vmem:[#allocation3 + $0x20] sm:$0xff]
    %v1211 = vld [vmem:[#allocation3 + $0x28] sm:$0xff]
    %v1212 = vld [vmem:[#allocation3 + $0x30] sm:$0xff]
    %v1213 = vld [vmem:[#allocation3 + $0x38] sm:$0xff]
    %v1214 = vld [vmem:[#allocation3 + $0x40] sm:$0xff]
    %v1215 = vld [vmem:[#allocation3 + $0x48] sm:$0xff]
    %v1216 = vld [vmem:[#allocation3 + $0x50] sm:$0xff]
    %v1217 = vld [vmem:[#allocation3 + $0x58] sm:$0xff]
    %v1218 = vld [vmem:[#allocation2] sm:$0xff]
    %v1219 = vld [vmem:[#allocation2 + $0x8] sm:$0xff]
    %v1220 = vld [vmem:[#allocation2 + $0x10] sm:$0xff]
    %v1221 = vld [vmem:[#allocation2 + $0x18] sm:$0xff]
    %v1222 = vld [vmem:[#allocation2 + $0x20] sm:$0xff]
    %v1223 = vld [vmem:[#allocation2 + $0x28] sm:$0xff]
    %v1224 = vld [vmem:[#allocation2 + $0x30] sm:$0xff]
    %v1225 = vld [vmem:[#allocation2 + $0x38] sm:$0xff]
    %v1226 = vld [vmem:[#allocation2 + $0x40] sm:$0xff]
    %v1227 = vld [vmem:[#allocation2 + $0x48] sm:$0xff]
    %v1228 = vld [vmem:[#allocation2 + $0x50] sm:$0xff]
    %v1229 = vld [vmem:[#allocation2 + $0x58] sm:$0xff]
    %v1230 = vld [vmem:[#allocation2 + $0x60] sm:$0xff]
    %v1231 = vld [vmem:[#allocation2 + $0x68] sm:$0xff]
    %v1232 = vld [vmem:[#allocation2 + $0x70] sm:$0xff]
    %v1233 = vld [vmem:[#allocation2 + $0x78] sm:$0xff]
    %v1234 = vld [vmem:[#allocation2 + $0x80] sm:$0xff]
    %v1235 = vld [vmem:[#allocation2 + $0x88] sm:$0xff]
    %v1236 = vld [vmem:[#allocation2 + $0x90] sm:$0xff]
    %v1237 = vld [vmem:[#allocation2 + $0x98] sm:$0xff]
    %v1238 = vld [vmem:[#allocation2 + $0xa0] sm:$0xff]
    %v1239 = vld [vmem:[#allocation2 + $0xa8] sm:$0xff]
    %v1240 = vld [vmem:[#allocation2 + $0xb0] sm:$0xff]
    %v1241 = vld [vmem:[#allocation2 + $0xb8] sm:$0xff]
    %v1242 = vld [vmem:[#allocation2 + $0xc0] sm:$0xff]
    %v1243 = vld [vmem:[#allocation2 + $0xc8] sm:$0xff]
    %v1244 = vld [vmem:[#allocation2 + $0xd0] sm:$0xff]
    %v1245 = vld [vmem:[#allocation2 + $0xd8] sm:$0xff]
    %v1246 = vld [vmem:[#allocation2 + $0xe0] sm:$0xff]
    %v1247 = vld [vmem:[#allocation2 + $0xe8] sm:$0xff]
    %v1248 = vld [vmem:[#allocation2 + $0xf0] sm:$0xff]
    %v1249 = vld [vmem:[#allocation2 + $0xf8] sm:$0xff]
    %v1250 = vld [vmem:[#allocation2 + $0x100] sm:$0xff]
    %v1251 = vld [vmem:[#allocation2 + $0x108] sm:$0xff]
    %v1252 = vld [vmem:[#allocation2 + $0x110] sm:$0xff]
    %v1253 = vld [vmem:[#allocation2 + $0x118] sm:$0xff]
    %v1254 = vld [vmem:[#allocation2 + $0x120] sm:$0xff]
    %v1255 = vld [vmem:[#allocation2 + $0x128] sm:$0xff]
    %v1256 = vld [vmem:[#allocation2 + $0x130] sm:$0xff]
    %v1257 = vld [vmem:[#allocation2 + $0x138] sm:$0xff]
    %v1258 = vld [vmem:[#allocation2 + $0x140] sm:$0xff]
    %v1259 = vld [vmem:[#allocation2 + $0x148] sm:$0xff]
    %v1260 = vld [vmem:[#allocation2 + $0x150] sm:$0xff]
    %v1261 = vld [vmem:[#allocation2 + $0x158] sm:$0xff]
    %v1262 = vld [vmem:[#allocation2 + $0x160] sm:$0xff]
    %v1263 = vld [vmem:[#allocation2 + $0x168] sm:$0xff]
    %v1264 = vld [vmem:[#allocation2 + $0x170] sm:$0xff]
    %v1265 = vld [vmem:[#allocation2 + $0x178] sm:$0xff]
    %v1266 = vld [vmem:[#allocation2 + $0x180] sm:$0xff]
    %v1267 = vld [vmem:[#allocation2 + $0x188] sm:$0xff]
    %v1268 = vld [vmem:[#allocation2 + $0x190] sm:$0xff]
    %v1269 = vld [vmem:[#allocation2 + $0x198] sm:$0xff]
    %v1270 = vld [vmem:[#allocation2 + $0x1a0] sm:$0xff]
    %v1271 = vld [vmem:[#allocation2 + $0x1a8] sm:$0xff]
    %v1272 = vld [vmem:[#allocation2 + $0x1b0] sm:$0xff]
    %v1273 = vld [vmem:[#allocation2 + $0x1b8] sm:$0xff]
    %v1274 = vld [vmem:[#allocation2 + $0x1c0] sm:$0xff]
    %v1275 = vld [vmem:[#allocation2 + $0x1c8] sm:$0xff]
    %v1276 = vld [vmem:[#allocation2 + $0x1d0] sm:$0xff]
    %v1277 = vld [vmem:[#allocation2 + $0x1d8] sm:$0xff]
    %v1278 = vld [vmem:[#allocation2 + $0x1e0] sm:$0xff]
    %v1279 = vld [vmem:[#allocation2 + $0x1e8] sm:$0xff]
    %v1280 = vld [vmem:[#allocation2 + $0x1f0] sm:$0xff]
    %v1281 = vld [vmem:[#allocation2 + $0x1f8] sm:$0xff]
    %v1282 = vld [vmem:[#allocation2 + $0x200] sm:$0xff]
    %v1283 = vld [vmem:[#allocation2 + $0x208] sm:$0xff]
    %v1284 = vld [vmem:[#allocation2 + $0x210] sm:$0xff]
    %v1285 = vld [vmem:[#allocation2 + $0x218] sm:$0xff]
    %v1286 = vld [vmem:[#allocation2 + $0x220] sm:$0xff]
    %v1287 = vld [vmem:[#allocation2 + $0x228] sm:$0xff]
    %v1288 = vld [vmem:[#allocation2 + $0x230] sm:$0xff]
    %v1289 = vld [vmem:[#allocation2 + $0x238] sm:$0xff]
    %v1290 = vld [vmem:[#allocation2 + $0x240] sm:$0xff]
    %v1291 = vld [vmem:[#allocation2 + $0x248] sm:$0xff]
    %v1292 = vld [vmem:[#allocation2 + $0x250] sm:$0xff]
    %v1293 = vld [vmem:[#allocation2 + $0x258] sm:$0xff]
    %v1294 = vld [vmem:[#allocation2 + $0x260] sm:$0xff]
    %v1295 = vld [vmem:[#allocation2 + $0x268] sm:$0xff]
    %v1296 = vld [vmem:[#allocation2 + $0x270] sm:$0xff]
    %v1297 = vld [vmem:[#allocation2 + $0x278] sm:$0xff]
    %v1298 = vld [vmem:[#allocation2 + $0x280] sm:$0xff]
    %v1299 = vld [vmem:[#allocation2 + $0x288] sm:$0xff]
    %v1300 = vld [vmem:[#allocation2 + $0x290] sm:$0xff]
    %v1301 = vld [vmem:[#allocation2 + $0x298] sm:$0xff]
    %v1302 = vld [vmem:[#allocation2 + $0x2a0] sm:$0xff]
    %v1303 = vld [vmem:[#allocation2 + $0x2a8] sm:$0xff]
    %v1304 = vld [vmem:[#allocation2 + $0x2b0] sm:$0xff]
    %v1305 = vld [vmem:[#allocation2 + $0x2b8] sm:$0xff]
    %v1306 = vld [vmem:[#allocation2 + $0x2c0] sm:$0xff]
    %v1307 = vld [vmem:[#allocation2 + $0x2c8] sm:$0xff]
    %v1308 = vld [vmem:[#allocation2 + $0x2d0] sm:$0xff]
    %v1309 = vld [vmem:[#allocation2 + $0x2d8] sm:$0xff]
    %v1310 = vld [vmem:[#allocation2 + $0x2e0] sm:$0xff]
    %v1311 = vld [vmem:[#allocation2 + $0x2e8] sm:$0xff]
    %v1312 = vld [vmem:[#allocation2 + $0x2f0] sm:$0xff]
    %v1313 = vld [vmem:[#allocation2 + $0x2f8] sm:$0xff]
    %v1314 = vld [vmem:[#allocation2 + $0x300] sm:$0xff]
    %v1315 = vld [vmem:[#allocation2 + $0x308] sm:$0xff]
    %v1316 = vld [vmem:[#allocation2 + $0x310] sm:$0xff]
    %v1317 = vld [vmem:[#allocation2 + $0x318] sm:$0xff]
    %v1318 = vld [vmem:[#allocation2 + $0x320] sm:$0xff]
    %v1319 = vld [vmem:[#allocation2 + $0x328] sm:$0xff]
    %v1320 = vld [vmem:[#allocation2 + $0x330] sm:$0xff]
    %v1321 = vld [vmem:[#allocation2 + $0x338] sm:$0xff]
    %v1322 = vld [vmem:[#allocation2 + $0x340] sm:$0xff]
    %v1323 = vld [vmem:[#allocation2 + $0x348] sm:$0xff]
    %v1324 = vld [vmem:[#allocation2 + $0x350] sm:$0xff]
    %v1325 = vld [vmem:[#allocation2 + $0x358] sm:$0xff]
    %v1326 = vld [vmem:[#allocation2 + $0x360] sm:$0xff]
    %v1327 = vld [vmem:[#allocation2 + $0x368] sm:$0xff]
    %v1328 = vld [vmem:[#allocation2 + $0x370] sm:$0xff]
    %v1329 = vld [vmem:[#allocation2 + $0x378] sm:$0xff]
    %v1330 = vld [vmem:[#allocation2 + $0x380] sm:$0xff]
    %v1331 = vld [vmem:[#allocation2 + $0x388] sm:$0xff]
    %v1332 = vld [vmem:[#allocation2 + $0x390] sm:$0xff]
    %v1333 = vld [vmem:[#allocation2 + $0x398] sm:$0xff]
    %v1334 = vld [vmem:[#allocation2 + $0x3a0] sm:$0xff]
    %v1335 = vld [vmem:[#allocation2 + $0x3a8] sm:$0xff]
    %v1336 = vld [vmem:[#allocation2 + $0x3b0] sm:$0xff]
    %v1337 = vld [vmem:[#allocation2 + $0x3b8] sm:$0xff]
    %v1338 = vld [vmem:[#allocation2 + $0x3c0] sm:$0xff]
    %v1339 = vld [vmem:[#allocation2 + $0x3c8] sm:$0xff]
    %v1340 = vld [vmem:[#allocation2 + $0x3d0] sm:$0xff]
    %v1341 = vld [vmem:[#allocation2 + $0x3d8] sm:$0xff]
    %v1342 = vld [vmem:[#allocation2 + $0x3e0] sm:$0xff]
    %v1343 = vld [vmem:[#allocation2 + $0x3e8] sm:$0xff]
    %v1344 = vld [vmem:[#allocation2 + $0x3f0] sm:$0xff]
    %v1345 = vld [vmem:[#allocation2 + $0x3f8] sm:$0xff]
    %v1346 = vld [vmem:[#allocation2 + $0x400] sm:$0xff]
    %v1347 = vld [vmem:[#allocation2 + $0x408] sm:$0xff]
    %v1348 = vld [vmem:[#allocation2 + $0x410] sm:$0xff]
    %v1349 = vld [vmem:[#allocation2 + $0x418] sm:$0xff]
    %v1350 = vld [vmem:[#allocation2 + $0x420] sm:$0xff]
    %v1351 = vld [vmem:[#allocation2 + $0x428] sm:$0xff]
    %v1352 = vld [vmem:[#allocation2 + $0x430] sm:$0xff]
    %v1353 = vld [vmem:[#allocation2 + $0x438] sm:$0xff]
    %v1354 = vld [vmem:[#allocation2 + $0x440] sm:$0xff]
    %v1355 = vld [vmem:[#allocation2 + $0x448] sm:$0xff]
    %v1356 = vld [vmem:[#allocation2 + $0x450] sm:$0xff]
    %v1357 = vld [vmem:[#allocation2 + $0x458] sm:$0xff]
    %v1358 = vld [vmem:[#allocation2 + $0x460] sm:$0xff]
    %v1359 = vld [vmem:[#allocation2 + $0x468] sm:$0xff]
    %v1360 = vld [vmem:[#allocation2 + $0x470] sm:$0xff]
    %v1361 = vld [vmem:[#allocation2 + $0x478] sm:$0xff]
    %v1362 = vld [vmem:[#allocation2 + $0x480] sm:$0xff]
    %v1363 = vld [vmem:[#allocation2 + $0x488] sm:$0xff]
    %v1364 = vld [vmem:[#allocation2 + $0x490] sm:$0xff]
    %v1365 = vld [vmem:[#allocation2 + $0x498] sm:$0xff]
    %v1366 = vld [vmem:[#allocation2 + $0x4a0] sm:$0xff]
    %v1367 = vld [vmem:[#allocation2 + $0x4a8] sm:$0xff]
    %v1368 = vld [vmem:[#allocation2 + $0x4b0] sm:$0xff]
    %v1369 = vld [vmem:[#allocation2 + $0x4b8] sm:$0xff]
    %v1370 = vld [vmem:[#allocation2 + $0x4c0] sm:$0xff]
    %v1371 = vld [vmem:[#allocation2 + $0x4c8] sm:$0xff]
    %v1372 = vld [vmem:[#allocation2 + $0x4d0] sm:$0xff]
    %v1373 = vld [vmem:[#allocation2 + $0x4d8] sm:$0xff]
    %v1374 = vld [vmem:[#allocation2 + $0x4e0] sm:$0xff]
    %v1375 = vld [vmem:[#allocation2 + $0x4e8] sm:$0xff]
    %v1376 = vld [vmem:[#allocation2 + $0x4f0] sm:$0xff]
    %v1377 = vld [vmem:[#allocation2 + $0x4f8] sm:$0xff]
    %v1378 = vld [vmem:[#allocation2 + $0x500] sm:$0xff]
    %v1379 = vld [vmem:[#allocation2 + $0x508] sm:$0xff]
    %v1380 = vld [vmem:[#allocation2 + $0x510] sm:$0xff]
    %v1381 = vld [vmem:[#allocation2 + $0x518] sm:$0xff]
    %v1382 = vld [vmem:[#allocation2 + $0x520] sm:$0xff]
    %v1383 = vld [vmem:[#allocation2 + $0x528] sm:$0xff]
    %v1384 = vld [vmem:[#allocation2 + $0x530] sm:$0xff]
    %v1385 = vld [vmem:[#allocation2 + $0x538] sm:$0xff]
    %v1386 = vld [vmem:[#allocation2 + $0x540] sm:$0xff]
    %v1387 = vld [vmem:[#allocation2 + $0x548] sm:$0xff]
    %v1388 = vld [vmem:[#allocation2 + $0x550] sm:$0xff]
    %v1389 = vld [vmem:[#allocation2 + $0x558] sm:$0xff]
    %v1390 = vld [vmem:[#allocation2 + $0x560] sm:$0xff]
    %v1391 = vld [vmem:[#allocation2 + $0x568] sm:$0xff]
    %v1392 = vld [vmem:[#allocation2 + $0x570] sm:$0xff]
    %v1393 = vld [vmem:[#allocation2 + $0x578] sm:$0xff]
    %v1394 = vld [vmem:[#allocation2 + $0x580] sm:$0xff]
    %v1395 = vld [vmem:[#allocation2 + $0x588] sm:$0xff]
    %v1396 = vld [vmem:[#allocation2 + $0x590] sm:$0xff]
    %v1397 = vld [vmem:[#allocation2 + $0x598] sm:$0xff]
    %v1398 = vld [vmem:[#allocation2 + $0x5a0] sm:$0xff]
    %v1399 = vld [vmem:[#allocation2 + $0x5a8] sm:$0xff]
    %v1400 = vld [vmem:[#allocation2 + $0x5b0] sm:$0xff]
    %v1401 = vld [vmem:[#allocation2 + $0x5b8] sm:$0xff]
    %v1402 = vld [vmem:[#allocation2 + $0x5c0] sm:$0xff]
    %v1403 = vld [vmem:[#allocation2 + $0x5c8] sm:$0xff]
    %v1404 = vld [vmem:[#allocation2 + $0x5d0] sm:$0xff]
    %v1405 = vld [vmem:[#allocation2 + $0x5d8] sm:$0xff]
    %v1406 = vld [vmem:[#allocation2 + $0x5e0] sm:$0xff]
    %v1407 = vld [vmem:[#allocation2 + $0x5e8] sm:$0xff]
    %v1408 = vld [vmem:[#allocation2 + $0x5f0] sm:$0xff]
    %v1409 = vld [vmem:[#allocation2 + $0x5f8] sm:$0xff]
    %v1410 = vld [vmem:[#allocation2 + $0x600] sm:$0xff]
    %v1411 = vld [vmem:[#allocation2 + $0x608] sm:$0xff]
    %v1412 = vld [vmem:[#allocation2 + $0x610] sm:$0xff]
    %v1413 = vld [vmem:[#allocation2 + $0x618] sm:$0xff]
    %v1414 = vld [vmem:[#allocation2 + $0x620] sm:$0xff]
    %v1415 = vld [vmem:[#allocation2 + $0x628] sm:$0xff]
    %v1416 = vld [vmem:[#allocation2 + $0x630] sm:$0xff]
    %v1417 = vld [vmem:[#allocation2 + $0x638] sm:$0xff]
    %v1418 = vld [vmem:[#allocation2 + $0x640] sm:$0xff]
    %v1419 = vld [vmem:[#allocation2 + $0x648] sm:$0xff]
    %v1420 = vld [vmem:[#allocation2 + $0x650] sm:$0xff]
    %v1421 = vld [vmem:[#allocation2 + $0x658] sm:$0xff]
    %v1422 = vld [vmem:[#allocation2 + $0x660] sm:$0xff]
    %v1423 = vld [vmem:[#allocation2 + $0x668] sm:$0xff]
    %v1424 = vld [vmem:[#allocation2 + $0x670] sm:$0xff]
    %v1425 = vld [vmem:[#allocation2 + $0x678] sm:$0xff]
    %v1426 = vld [vmem:[#allocation2 + $0x680] sm:$0xff]
    %v1427 = vld [vmem:[#allocation2 + $0x688] sm:$0xff]
    %v1428 = vld [vmem:[#allocation2 + $0x690] sm:$0xff]
    %v1429 = vld [vmem:[#allocation2 + $0x698] sm:$0xff]
    %v1430 = vld [vmem:[#allocation2 + $0x6a0] sm:$0xff]
    %v1431 = vld [vmem:[#allocation2 + $0x6a8] sm:$0xff]
    %v1432 = vld [vmem:[#allocation2 + $0x6b0] sm:$0xff]
    %v1433 = vld [vmem:[#allocation2 + $0x6b8] sm:$0xff]
    %v1434 = vld [vmem:[%s5] sm:$0xff]
    %v1435 = vld [vmem:[%s5 + $0x8] sm:$0xff]
    %v1436 = vld [vmem:[%s5 + $0x10] sm:$0xff]
    %v1437 = vld [vmem:[%s5 + $0x18] sm:$0xff]
    %1439 = vset.pattern.permute.xlu0 0
    %1440 = vperm.xlu0 %1439, %v1434
    %v1441 = vpop.permute.xlu0 %1440
    %1444 = vset.pattern.permute.xlu0 0
    %1445 = vperm.xlu0 %1444, %v1435
    %v1446 = vpop.permute.xlu0 %1445
    %1449 = vset.pattern.permute.xlu0 0
    %1450 = vperm.xlu0 %1449, %v1436
    %v1451 = vpop.permute.xlu0 %1450
    %1454 = vset.pattern.permute.xlu0 0
    %1455 = vperm.xlu0 %1454, %v1437
    %v1456 = vpop.permute.xlu0 %1455
    %vm1458 = vcmask 261120
    %v1460 = vsel %vm1458, %v1208, 0
    %v1463 = vsel %vm1458, %v1211, 0
    %v1466 = vsel %vm1458, %v1214, 0
    %v1469 = vsel %vm1458, %v1217, 0
    %1471 = vmatpush.msra.mxu0 %v1308
    %1472 = vmatpush.msra.mxu0 %v1302
    %1473 = vmatpush.msra.mxu0 %v1296
    %1474 = vmatpush.msra.mxu0 %v1290
    %1475 = vmatpush.msra.mxu0 %v1284
    %1476 = vmatpush.msra.mxu0 %v1278
    %1477 = vmatpush.msra.mxu0 %v1272
    %1478 = vmatpush.msra.mxu0 %v1266
    %1479 = vmatpush.msra.mxu0 %v1260
    %1480 = vmatpush.msra.mxu0 %v1254
    %1481 = vmatpush.msra.mxu0 %v1248
    %1482 = vmatpush.msra.mxu0 %v1242
    %1483 = vmatpush.msra.mxu0 %v1236
    %1484 = vmatpush.msra.mxu0 %v1230
    %1485 = vmatpush.msra.mxu0 %v1224
    %1486 = vmatpush.msra.mxu0 %v1218
    %1487 = vmatmul.f32.gmra.mxu0 %v1206
    %v1488 = vpop.f32.mrf.mxu0
    %v1489 = vadd.f32 %v1441, %v1488
    %1490 = vmatmul.f32.gmra.mxu0 %v1209
    %v1491 = vpop.f32.mrf.mxu0
    %v1492 = vadd.f32 %v1446, %v1491
    %1493 = vmatmul.f32.gmra.mxu0 %v1212
    %v1494 = vpop.f32.mrf.mxu0
    %v1495 = vadd.f32 %v1451, %v1494
    %1496 = vmatmul.f32.gmra.mxu0 %v1215
    %v1497 = vpop.f32.mrf.mxu0
    %v1498 = vadd.f32 %v1456, %v1497
    %1499 = vdwg.mxu0
    %1500 = vmatpush.msra.mxu0 %v1404
    %1501 = vmatpush.msra.mxu0 %v1398
    %1502 = vmatpush.msra.mxu0 %v1392
    %1503 = vmatpush.msra.mxu0 %v1386
    %1504 = vmatpush.msra.mxu0 %v1380
    %1505 = vmatpush.msra.mxu0 %v1374
    %1506 = vmatpush.msra.mxu0 %v1368
    %1507 = vmatpush.msra.mxu0 %v1362
    %1508 = vmatpush.msra.mxu0 %v1356
    %1509 = vmatpush.msra.mxu0 %v1350
    %1510 = vmatpush.msra.mxu0 %v1344
    %1511 = vmatpush.msra.mxu0 %v1338
    %1512 = vmatpush.msra.mxu0 %v1332
    %1513 = vmatpush.msra.mxu0 %v1326
    %1514 = vmatpush.msra.mxu0 %v1320
    %1515 = vmatpush.msra.mxu0 %v1314
    %1516 = vmatmul.f32.gmra.mxu0 %v1207
    %v1517 = vpop.f32.mrf.mxu0
    %v1518 = vadd.f32 %v1489, %v1517
    %1519 = vmatmul.f32.gmra.mxu0 %v1210
    %v1520 = vpop.f32.mrf.mxu0
    %v1521 = vadd.f32 %v1492, %v1520
    %1522 = vmatmul.f32.gmra.mxu0 %v1213
    %v1523 = vpop.f32.mrf.mxu0
    %v1524 = vadd.f32 %v1495, %v1523
    %1525 = vmatmul.f32.gmra.mxu0 %v1216
    %v1526 = vpop.f32.mrf.mxu0
    %v1527 = vadd.f32 %v1498, %v1526
    %1528 = vdwg.mxu0
    %1529 = vmatpush.msra.mxu0 0.0
    %1530 = vmatpush.msra.mxu0 0.0
    %1531 = vmatpush.msra.mxu0 0.0
    %1532 = vmatpush.msra.mxu0 0.0
    %1533 = vmatpush.msra.mxu0 0.0
    %1534 = vmatpush.msra.mxu0 0.0
    %1535 = vmatpush.msra.mxu0 0.0
    %1536 = vmatpush.msra.mxu0 0.0
    %1537 = vmatpush.msra.mxu0 0.0
    %1538 = vmatpush.msra.mxu0 0.0
    %1539 = vmatpush.msra.mxu0 0.0
    %1540 = vmatpush.msra.mxu0 0.0
    %1541 = vmatpush.msra.mxu0 %v1428
    %1542 = vmatpush.msra.mxu0 %v1422
    %1543 = vmatpush.msra.mxu0 %v1416
    %1544 = vmatpush.msra.mxu0 %v1410
    %1545 = vmatmul.f32.gmra.mxu0 %v1460
    %v1546 = vpop.f32.mrf.mxu0
    %v1547 = vadd.f32 %v1518, %v1546
    %1548 = vmatmul.f32.gmra.mxu0 %v1463
    %v1549 = vpop.f32.mrf.mxu0
    %v1550 = vadd.f32 %v1521, %v1549
    %1551 = vmatmul.f32.gmra.mxu0 %v1466
    %v1552 = vpop.f32.mrf.mxu0
    %v1553 = vadd.f32 %v1524, %v1552
    %1554 = vmatmul.f32.gmra.mxu0 %v1469
    %v1555 = vpop.f32.mrf.mxu0
    %v1556 = vadd.f32 %v1527, %v1555
    %1557 = vdwg.mxu0
    %1558 = vmatpush.msra.mxu0 %v1309
    %1559 = vmatpush.msra.mxu0 %v1303
    %1560 = vmatpush.msra.mxu0 %v1297
    %1561 = vmatpush.msra.mxu0 %v1291
    %1562 = vmatpush.msra.mxu0 %v1285
    %1563 = vmatpush.msra.mxu0 %v1279
    %1564 = vmatpush.msra.mxu0 %v1273
    %1565 = vmatpush.msra.mxu0 %v1267
    %1566 = vmatpush.msra.mxu0 %v1261
    %1567 = vmatpush.msra.mxu0 %v1255
    %1568 = vmatpush.msra.mxu0 %v1249
    %1569 = vmatpush.msra.mxu0 %v1243
    %1570 = vmatpush.msra.mxu0 %v1237
    %1571 = vmatpush.msra.mxu0 %v1231
    %1572 = vmatpush.msra.mxu0 %v1225
    %1573 = vmatpush.msra.mxu0 %v1219
    %1574 = vmatmul.f32.gmra.mxu0 %v1206
    %v1575 = vpop.f32.mrf.mxu0
    %v1576 = vadd.f32 %v1441, %v1575
    %1577 = vmatmul.f32.gmra.mxu0 %v1209
    %v1578 = vpop.f32.mrf.mxu0
    %v1579 = vadd.f32 %v1446, %v1578
    %1580 = vmatmul.f32.gmra.mxu0 %v1212
    %v1581 = vpop.f32.mrf.mxu0
    %v1582 = vadd.f32 %v1451, %v1581
    %1583 = vmatmul.f32.gmra.mxu0 %v1215
    %v1584 = vpop.f32.mrf.mxu0
    %v1585 = vadd.f32 %v1456, %v1584
    %1586 = vdwg.mxu0
    %1587 = vmatpush.msra.mxu0 %v1405
    %1588 = vmatpush.msra.mxu0 %v1399
    %1589 = vmatpush.msra.mxu0 %v1393
    %1590 = vmatpush.msra.mxu0 %v1387
    %1591 = vmatpush.msra.mxu0 %v1381
    %1592 = vmatpush.msra.mxu0 %v1375
    %1593 = vmatpush.msra.mxu0 %v1369
    %1594 = vmatpush.msra.mxu0 %v1363
    %1595 = vmatpush.msra.mxu0 %v1357
    %1596 = vmatpush.msra.mxu0 %v1351
    %1597 = vmatpush.msra.mxu0 %v1345
    %1598 = vmatpush.msra.mxu0 %v1339
    %1599 = vmatpush.msra.mxu0 %v1333
    %1600 = vmatpush.msra.mxu0 %v1327
    %1601 = vmatpush.msra.mxu0 %v1321
    %1602 = vmatpush.msra.mxu0 %v1315
    %1603 = vmatmul.f32.gmra.mxu0 %v1207
    %v1604 = vpop.f32.mrf.mxu0
    %v1605 = vadd.f32 %v1576, %v1604
    %1606 = vmatmul.f32.gmra.mxu0 %v1210
    %v1607 = vpop.f32.mrf.mxu0
    %v1608 = vadd.f32 %v1579, %v1607
    %1609 = vmatmul.f32.gmra.mxu0 %v1213
    %v1610 = vpop.f32.mrf.mxu0
    %v1611 = vadd.f32 %v1582, %v1610
    %1612 = vmatmul.f32.gmra.mxu0 %v1216
    %v1613 = vpop.f32.mrf.mxu0
    %v1614 = vadd.f32 %v1585, %v1613
    %1615 = vdwg.mxu0
    %1616 = vmatpush.msra.mxu0 0.0
    %1617 = vmatpush.msra.mxu0 0.0
    %1618 = vmatpush.msra.mxu0 0.0
    %1619 = vmatpush.msra.mxu0 0.0
    %1620 = vmatpush.msra.mxu0 0.0
    %1621 = vmatpush.msra.mxu0 0.0
    %1622 = vmatpush.msra.mxu0 0.0
    %1623 = vmatpush.msra.mxu0 0.0
    %1624 = vmatpush.msra.mxu0 0.0
    %1625 = vmatpush.msra.mxu0 0.0
    %1626 = vmatpush.msra.mxu0 0.0
    %1627 = vmatpush.msra.mxu0 0.0
    %1628 = vmatpush.msra.mxu0 %v1429
    %1629 = vmatpush.msra.mxu0 %v1423
    %1630 = vmatpush.msra.mxu0 %v1417
    %1631 = vmatpush.msra.mxu0 %v1411
    %1632 = vmatmul.f32.gmra.mxu0 %v1460
    %v1633 = vpop.f32.mrf.mxu0
    %v1634 = vadd.f32 %v1605, %v1633
    %1635 = vmatmul.f32.gmra.mxu0 %v1463
    %v1636 = vpop.f32.mrf.mxu0
    %v1637 = vadd.f32 %v1608, %v1636
    %1638 = vmatmul.f32.gmra.mxu0 %v1466
    %v1639 = vpop.f32.mrf.mxu0
    %v1640 = vadd.f32 %v1611, %v1639
    %1641 = vmatmul.f32.gmra.mxu0 %v1469
    %v1642 = vpop.f32.mrf.mxu0
    %v1643 = vadd.f32 %v1614, %v1642
    %1644 = vdwg.mxu0
    %1645 = vmatpush.msra.mxu0 %v1310
    %1646 = vmatpush.msra.mxu0 %v1304
    %1647 = vmatpush.msra.mxu0 %v1298
    %1648 = vmatpush.msra.mxu0 %v1292
    %1649 = vmatpush.msra.mxu0 %v1286
    %1650 = vmatpush.msra.mxu0 %v1280
    %1651 = vmatpush.msra.mxu0 %v1274
    %1652 = vmatpush.msra.mxu0 %v1268
    %1653 = vmatpush.msra.mxu0 %v1262
    %1654 = vmatpush.msra.mxu0 %v1256
    %1655 = vmatpush.msra.mxu0 %v1250
    %1656 = vmatpush.msra.mxu0 %v1244
    %1657 = vmatpush.msra.mxu0 %v1238
    %1658 = vmatpush.msra.mxu0 %v1232
    %1659 = vmatpush.msra.mxu0 %v1226
    %1660 = vmatpush.msra.mxu0 %v1220
    %1661 = vmatmul.f32.gmra.mxu0 %v1206
    %v1662 = vpop.f32.mrf.mxu0
    %v1663 = vadd.f32 %v1441, %v1662
    %1664 = vmatmul.f32.gmra.mxu0 %v1209
    %v1665 = vpop.f32.mrf.mxu0
    %v1666 = vadd.f32 %v1446, %v1665
    %1667 = vmatmul.f32.gmra.mxu0 %v1212
    %v1668 = vpop.f32.mrf.mxu0
    %v1669 = vadd.f32 %v1451, %v1668
    %1670 = vmatmul.f32.gmra.mxu0 %v1215
    %v1671 = vpop.f32.mrf.mxu0
    %v1672 = vadd.f32 %v1456, %v1671
    %1673 = vdwg.mxu0
    %1674 = vmatpush.msra.mxu0 %v1406
    %1675 = vmatpush.msra.mxu0 %v1400
    %1676 = vmatpush.msra.mxu0 %v1394
    %1677 = vmatpush.msra.mxu0 %v1388
    %1678 = vmatpush.msra.mxu0 %v1382
    %1679 = vmatpush.msra.mxu0 %v1376
    %1680 = vmatpush.msra.mxu0 %v1370
    %1681 = vmatpush.msra.mxu0 %v1364
    %1682 = vmatpush.msra.mxu0 %v1358
    %1683 = vmatpush.msra.mxu0 %v1352
    %1684 = vmatpush.msra.mxu0 %v1346
    %1685 = vmatpush.msra.mxu0 %v1340
    %1686 = vmatpush.msra.mxu0 %v1334
    %1687 = vmatpush.msra.mxu0 %v1328
    %1688 = vmatpush.msra.mxu0 %v1322
    %1689 = vmatpush.msra.mxu0 %v1316
    %1690 = vmatmul.f32.gmra.mxu0 %v1207
    %v1691 = vpop.f32.mrf.mxu0
    %v1692 = vadd.f32 %v1663, %v1691
    %1693 = vmatmul.f32.gmra.mxu0 %v1210
    %v1694 = vpop.f32.mrf.mxu0
    %v1695 = vadd.f32 %v1666, %v1694
    %1696 = vmatmul.f32.gmra.mxu0 %v1213
    %v1697 = vpop.f32.mrf.mxu0
    %v1698 = vadd.f32 %v1669, %v1697
    %1699 = vmatmul.f32.gmra.mxu0 %v1216
    %v1700 = vpop.f32.mrf.mxu0
    %v1701 = vadd.f32 %v1672, %v1700
    %1702 = vdwg.mxu0
    %1703 = vmatpush.msra.mxu0 0.0
    %1704 = vmatpush.msra.mxu0 0.0
    %1705 = vmatpush.msra.mxu0 0.0
    %1706 = vmatpush.msra.mxu0 0.0
    %1707 = vmatpush.msra.mxu0 0.0
    %1708 = vmatpush.msra.mxu0 0.0
    %1709 = vmatpush.msra.mxu0 0.0
    %1710 = vmatpush.msra.mxu0 0.0
    %1711 = vmatpush.msra.mxu0 0.0
    %1712 = vmatpush.msra.mxu0 0.0
    %1713 = vmatpush.msra.mxu0 0.0
    %1714 = vmatpush.msra.mxu0 0.0
    %1715 = vmatpush.msra.mxu0 %v1430
    %1716 = vmatpush.msra.mxu0 %v1424
    %1717 = vmatpush.msra.mxu0 %v1418
    %1718 = vmatpush.msra.mxu0 %v1412
    %1719 = vmatmul.f32.gmra.mxu0 %v1460
    %v1720 = vpop.f32.mrf.mxu0
    %v1721 = vadd.f32 %v1692, %v1720
    %1722 = vmatmul.f32.gmra.mxu0 %v1463
    %v1723 = vpop.f32.mrf.mxu0
    %v1724 = vadd.f32 %v1695, %v1723
    %1725 = vmatmul.f32.gmra.mxu0 %v1466
    %v1726 = vpop.f32.mrf.mxu0
    %v1727 = vadd.f32 %v1698, %v1726
    %1728 = vmatmul.f32.gmra.mxu0 %v1469
    %v1729 = vpop.f32.mrf.mxu0
    %v1730 = vadd.f32 %v1701, %v1729
    %1731 = vdwg.mxu0
    %1732 = vmatpush.msra.mxu0 %v1311
    %1733 = vmatpush.msra.mxu0 %v1305
    %1734 = vmatpush.msra.mxu0 %v1299
    %1735 = vmatpush.msra.mxu0 %v1293
    %1736 = vmatpush.msra.mxu0 %v1287
    %1737 = vmatpush.msra.mxu0 %v1281
    %1738 = vmatpush.msra.mxu0 %v1275
    %1739 = vmatpush.msra.mxu0 %v1269
    %1740 = vmatpush.msra.mxu0 %v1263
    %1741 = vmatpush.msra.mxu0 %v1257
    %1742 = vmatpush.msra.mxu0 %v1251
    %1743 = vmatpush.msra.mxu0 %v1245
    %1744 = vmatpush.msra.mxu0 %v1239
    %1745 = vmatpush.msra.mxu0 %v1233
    %1746 = vmatpush.msra.mxu0 %v1227
    %1747 = vmatpush.msra.mxu0 %v1221
    %1748 = vmatmul.f32.gmra.mxu0 %v1206
    %v1749 = vpop.f32.mrf.mxu0
    %v1750 = vadd.f32 %v1441, %v1749
    %1751 = vmatmul.f32.gmra.mxu0 %v1209
    %v1752 = vpop.f32.mrf.mxu0
    %v1753 = vadd.f32 %v1446, %v1752
    %1754 = vmatmul.f32.gmra.mxu0 %v1212
    %v1755 = vpop.f32.mrf.mxu0
    %v1756 = vadd.f32 %v1451, %v1755
    %1757 = vmatmul.f32.gmra.mxu0 %v1215
    %v1758 = vpop.f32.mrf.mxu0
    %v1759 = vadd.f32 %v1456, %v1758
    %1760 = vdwg.mxu0
    %1761 = vmatpush.msra.mxu0 %v1407
    %1762 = vmatpush.msra.mxu0 %v1401
    %1763 = vmatpush.msra.mxu0 %v1395
    %1764 = vmatpush.msra.mxu0 %v1389
    %1765 = vmatpush.msra.mxu0 %v1383
    %1766 = vmatpush.msra.mxu0 %v1377
    %1767 = vmatpush.msra.mxu0 %v1371
    %1768 = vmatpush.msra.mxu0 %v1365
    %1769 = vmatpush.msra.mxu0 %v1359
    %1770 = vmatpush.msra.mxu0 %v1353
    %1771 = vmatpush.msra.mxu0 %v1347
    %1772 = vmatpush.msra.mxu0 %v1341
    %1773 = vmatpush.msra.mxu0 %v1335
    %1774 = vmatpush.msra.mxu0 %v1329
    %1775 = vmatpush.msra.mxu0 %v1323
    %1776 = vmatpush.msra.mxu0 %v1317
    %1777 = vmatmul.f32.gmra.mxu0 %v1207
    %v1778 = vpop.f32.mrf.mxu0
    %v1779 = vadd.f32 %v1750, %v1778
    %1780 = vmatmul.f32.gmra.mxu0 %v1210
    %v1781 = vpop.f32.mrf.mxu0
    %v1782 = vadd.f32 %v1753, %v1781
    %1783 = vmatmul.f32.gmra.mxu0 %v1213
    %v1784 = vpop.f32.mrf.mxu0
    %v1785 = vadd.f32 %v1756, %v1784
    %1786 = vmatmul.f32.gmra.mxu0 %v1216
    %v1787 = vpop.f32.mrf.mxu0
    %v1788 = vadd.f32 %v1759, %v1787
    %1789 = vdwg.mxu0
    %1790 = vmatpush.msra.mxu0 0.0
    %1791 = vmatpush.msra.mxu0 0.0
    %1792 = vmatpush.msra.mxu0 0.0
    %1793 = vmatpush.msra.mxu0 0.0
    %1794 = vmatpush.msra.mxu0 0.0
    %1795 = vmatpush.msra.mxu0 0.0
    %1796 = vmatpush.msra.mxu0 0.0
    %1797 = vmatpush.msra.mxu0 0.0
    %1798 = vmatpush.msra.mxu0 0.0
    %1799 = vmatpush.msra.mxu0 0.0
    %1800 = vmatpush.msra.mxu0 0.0
    %1801 = vmatpush.msra.mxu0 0.0
    %1802 = vmatpush.msra.mxu0 %v1431
    %1803 = vmatpush.msra.mxu0 %v1425
    %1804 = vmatpush.msra.mxu0 %v1419
    %1805 = vmatpush.msra.mxu0 %v1413
    %1806 = vmatmul.f32.gmra.mxu0 %v1460
    %v1807 = vpop.f32.mrf.mxu0
    %v1808 = vadd.f32 %v1779, %v1807
    %1809 = vmatmul.f32.gmra.mxu0 %v1463
    %v1810 = vpop.f32.mrf.mxu0
    %v1811 = vadd.f32 %v1782, %v1810
    %1812 = vmatmul.f32.gmra.mxu0 %v1466
    %v1813 = vpop.f32.mrf.mxu0
    %v1814 = vadd.f32 %v1785, %v1813
    %1815 = vmatmul.f32.gmra.mxu0 %v1469
    %v1816 = vpop.f32.mrf.mxu0
    %v1817 = vadd.f32 %v1788, %v1816
    %1818 = vdwg.mxu0
    %1819 = vmatpush.msra.mxu0 %v1312
    %1820 = vmatpush.msra.mxu0 %v1306
    %1821 = vmatpush.msra.mxu0 %v1300
    %1822 = vmatpush.msra.mxu0 %v1294
    %1823 = vmatpush.msra.mxu0 %v1288
    %1824 = vmatpush.msra.mxu0 %v1282
    %1825 = vmatpush.msra.mxu0 %v1276
    %1826 = vmatpush.msra.mxu0 %v1270
    %1827 = vmatpush.msra.mxu0 %v1264
    %1828 = vmatpush.msra.mxu0 %v1258
    %1829 = vmatpush.msra.mxu0 %v1252
    %1830 = vmatpush.msra.mxu0 %v1246
    %1831 = vmatpush.msra.mxu0 %v1240
    %1832 = vmatpush.msra.mxu0 %v1234
    %1833 = vmatpush.msra.mxu0 %v1228
    %1834 = vmatpush.msra.mxu0 %v1222
    %1835 = vmatmul.f32.gmra.mxu0 %v1206
    %v1836 = vpop.f32.mrf.mxu0
    %v1837 = vadd.f32 %v1441, %v1836
    %1838 = vmatmul.f32.gmra.mxu0 %v1209
    %v1839 = vpop.f32.mrf.mxu0
    %v1840 = vadd.f32 %v1446, %v1839
    %1841 = vmatmul.f32.gmra.mxu0 %v1212
    %v1842 = vpop.f32.mrf.mxu0
    %v1843 = vadd.f32 %v1451, %v1842
    %1844 = vmatmul.f32.gmra.mxu0 %v1215
    %v1845 = vpop.f32.mrf.mxu0
    %v1846 = vadd.f32 %v1456, %v1845
    %1847 = vdwg.mxu0
    %1848 = vmatpush.msra.mxu0 %v1408
    %1849 = vmatpush.msra.mxu0 %v1402
    %1850 = vmatpush.msra.mxu0 %v1396
    %1851 = vmatpush.msra.mxu0 %v1390
    %1852 = vmatpush.msra.mxu0 %v1384
    %1853 = vmatpush.msra.mxu0 %v1378
    %1854 = vmatpush.msra.mxu0 %v1372
    %1855 = vmatpush.msra.mxu0 %v1366
    %1856 = vmatpush.msra.mxu0 %v1360
    %1857 = vmatpush.msra.mxu0 %v1354
    %1858 = vmatpush.msra.mxu0 %v1348
    %1859 = vmatpush.msra.mxu0 %v1342
    %1860 = vmatpush.msra.mxu0 %v1336
    %1861 = vmatpush.msra.mxu0 %v1330
    %1862 = vmatpush.msra.mxu0 %v1324
    %1863 = vmatpush.msra.mxu0 %v1318
    %1864 = vmatmul.f32.gmra.mxu0 %v1207
    %v1865 = vpop.f32.mrf.mxu0
    %v1866 = vadd.f32 %v1837, %v1865
    %1867 = vmatmul.f32.gmra.mxu0 %v1210
    %v1868 = vpop.f32.mrf.mxu0
    %v1869 = vadd.f32 %v1840, %v1868
    %1870 = vmatmul.f32.gmra.mxu0 %v1213
    %v1871 = vpop.f32.mrf.mxu0
    %v1872 = vadd.f32 %v1843, %v1871
    %1873 = vmatmul.f32.gmra.mxu0 %v1216
    %v1874 = vpop.f32.mrf.mxu0
    %v1875 = vadd.f32 %v1846, %v1874
    %1876 = vdwg.mxu0
    %1877 = vmatpush.msra.mxu0 0.0
    %1878 = vmatpush.msra.mxu0 0.0
    %1879 = vmatpush.msra.mxu0 0.0
    %1880 = vmatpush.msra.mxu0 0.0
    %1881 = vmatpush.msra.mxu0 0.0
    %1882 = vmatpush.msra.mxu0 0.0
    %1883 = vmatpush.msra.mxu0 0.0
    %1884 = vmatpush.msra.mxu0 0.0
    %1885 = vmatpush.msra.mxu0 0.0
    %1886 = vmatpush.msra.mxu0 0.0
    %1887 = vmatpush.msra.mxu0 0.0
    %1888 = vmatpush.msra.mxu0 0.0
    %1889 = vmatpush.msra.mxu0 %v1432
    %1890 = vmatpush.msra.mxu0 %v1426
    %1891 = vmatpush.msra.mxu0 %v1420
    %1892 = vmatpush.msra.mxu0 %v1414
    %1893 = vmatmul.f32.gmra.mxu0 %v1460
    %v1894 = vpop.f32.mrf.mxu0
    %v1895 = vadd.f32 %v1866, %v1894
    %1896 = vmatmul.f32.gmra.mxu0 %v1463
    %v1897 = vpop.f32.mrf.mxu0
    %v1898 = vadd.f32 %v1869, %v1897
    %1899 = vmatmul.f32.gmra.mxu0 %v1466
    %v1900 = vpop.f32.mrf.mxu0
    %v1901 = vadd.f32 %v1872, %v1900
    %1902 = vmatmul.f32.gmra.mxu0 %v1469
    %v1903 = vpop.f32.mrf.mxu0
    %v1904 = vadd.f32 %v1875, %v1903
    %1905 = vdwg.mxu0
    %1906 = vmatpush.msra.mxu0 %v1313
    %1907 = vmatpush.msra.mxu0 %v1307
    %1908 = vmatpush.msra.mxu0 %v1301
    %1909 = vmatpush.msra.mxu0 %v1295
    %1910 = vmatpush.msra.mxu0 %v1289
    %1911 = vmatpush.msra.mxu0 %v1283
    %1912 = vmatpush.msra.mxu0 %v1277
    %1913 = vmatpush.msra.mxu0 %v1271
    %1914 = vmatpush.msra.mxu0 %v1265
    %1915 = vmatpush.msra.mxu0 %v1259
    %1916 = vmatpush.msra.mxu0 %v1253
    %1917 = vmatpush.msra.mxu0 %v1247
    %1918 = vmatpush.msra.mxu0 %v1241
    %1919 = vmatpush.msra.mxu0 %v1235
    %1920 = vmatpush.msra.mxu0 %v1229
    %1921 = vmatpush.msra.mxu0 %v1223
    %1922 = vmatmul.f32.gmra.mxu0 %v1206
    %v1923 = vpop.f32.mrf.mxu0
    %v1924 = vadd.f32 %v1441, %v1923
    %1925 = vmatmul.f32.gmra.mxu0 %v1209
    %v1926 = vpop.f32.mrf.mxu0
    %v1927 = vadd.f32 %v1446, %v1926
    %1928 = vmatmul.f32.gmra.mxu0 %v1212
    %v1929 = vpop.f32.mrf.mxu0
    %v1930 = vadd.f32 %v1451, %v1929
    %1931 = vmatmul.f32.gmra.mxu0 %v1215
    %v1932 = vpop.f32.mrf.mxu0
    %v1933 = vadd.f32 %v1456, %v1932
    %1934 = vdwg.mxu0
    %1935 = vmatpush.msra.mxu0 %v1409
    %1936 = vmatpush.msra.mxu0 %v1403
    %1937 = vmatpush.msra.mxu0 %v1397
    %1938 = vmatpush.msra.mxu0 %v1391
    %1939 = vmatpush.msra.mxu0 %v1385
    %1940 = vmatpush.msra.mxu0 %v1379
    %1941 = vmatpush.msra.mxu0 %v1373
    %1942 = vmatpush.msra.mxu0 %v1367
    %1943 = vmatpush.msra.mxu0 %v1361
    %1944 = vmatpush.msra.mxu0 %v1355
    %1945 = vmatpush.msra.mxu0 %v1349
    %1946 = vmatpush.msra.mxu0 %v1343
    %1947 = vmatpush.msra.mxu0 %v1337
    %1948 = vmatpush.msra.mxu0 %v1331
    %1949 = vmatpush.msra.mxu0 %v1325
    %1950 = vmatpush.msra.mxu0 %v1319
    %1951 = vmatmul.f32.gmra.mxu0 %v1207
    %v1952 = vpop.f32.mrf.mxu0
    %v1953 = vadd.f32 %v1924, %v1952
    %1954 = vmatmul.f32.gmra.mxu0 %v1210
    %v1955 = vpop.f32.mrf.mxu0
    %v1956 = vadd.f32 %v1927, %v1955
    %1957 = vmatmul.f32.gmra.mxu0 %v1213
    %v1958 = vpop.f32.mrf.mxu0
    %v1959 = vadd.f32 %v1930, %v1958
    %1960 = vmatmul.f32.gmra.mxu0 %v1216
    %v1961 = vpop.f32.mrf.mxu0
    %v1962 = vadd.f32 %v1933, %v1961
    %1963 = vdwg.mxu0
    %1964 = vmatpush.msra.mxu0 0.0
    %1965 = vmatpush.msra.mxu0 0.0
    %1966 = vmatpush.msra.mxu0 0.0
    %1967 = vmatpush.msra.mxu0 0.0
    %1968 = vmatpush.msra.mxu0 0.0
    %1969 = vmatpush.msra.mxu0 0.0
    %1970 = vmatpush.msra.mxu0 0.0
    %1971 = vmatpush.msra.mxu0 0.0
    %1972 = vmatpush.msra.mxu0 0.0
    %1973 = vmatpush.msra.mxu0 0.0
    %1974 = vmatpush.msra.mxu0 0.0
    %1975 = vmatpush.msra.mxu0 0.0
    %1976 = vmatpush.msra.mxu0 %v1433
    %1977 = vmatpush.msra.mxu0 %v1427
    %1978 = vmatpush.msra.mxu0 %v1421
    %1979 = vmatpush.msra.mxu0 %v1415
    %1980 = vmatmul.f32.gmra.mxu0 %v1460
    %v1981 = vpop.f32.mrf.mxu0
    %v1982 = vadd.f32 %v1953, %v1981
    %1983 = vmatmul.f32.gmra.mxu0 %v1463
    %v1984 = vpop.f32.mrf.mxu0
    %v1985 = vadd.f32 %v1956, %v1984
    %1986 = vmatmul.f32.gmra.mxu0 %v1466
    %v1987 = vpop.f32.mrf.mxu0
    %v1988 = vadd.f32 %v1959, %v1987
    %1989 = vmatmul.f32.gmra.mxu0 %v1469
    %v1990 = vpop.f32.mrf.mxu0
    %v1991 = vadd.f32 %v1962, %v1990
    %1992 = vdwg.mxu0
    %vm1993 = vcmp.ge.f32.partialorder %v1547, 0.0
    %vm1994 = vcmp.ge.f32.partialorder %v1634, 0.0
    %vm1995 = vcmp.ge.f32.partialorder %v1721, 0.0
    %vm1996 = vcmp.ge.f32.partialorder %v1808, 0.0
    %vm1997 = vcmp.ge.f32.partialorder %v1895, 0.0
    %vm1998 = vcmp.ge.f32.partialorder %v1982, 0.0
    %vm1999 = vcmp.ge.f32.partialorder %v1550, 0.0
    %vm2000 = vcmp.ge.f32.partialorder %v1637, 0.0
    %vm2001 = vcmp.ge.f32.partialorder %v1724, 0.0
    %vm2002 = vcmp.ge.f32.partialorder %v1811, 0.0
    %vm2003 = vcmp.ge.f32.partialorder %v1898, 0.0
    %vm2004 = vcmp.ge.f32.partialorder %v1985, 0.0
    %vm2005 = vcmp.ge.f32.partialorder %v1553, 0.0
    %vm2006 = vcmp.ge.f32.partialorder %v1640, 0.0
    %vm2007 = vcmp.ge.f32.partialorder %v1727, 0.0
    %vm2008 = vcmp.ge.f32.partialorder %v1814, 0.0
    %vm2009 = vcmp.ge.f32.partialorder %v1901, 0.0
    %vm2010 = vcmp.ge.f32.partialorder %v1988, 0.0
    %vm2011 = vcmp.ge.f32.partialorder %v1556, 0.0
    %vm2012 = vcmp.ge.f32.partialorder %v1643, 0.0
    %vm2013 = vcmp.ge.f32.partialorder %v1730, 0.0
    %vm2014 = vcmp.ge.f32.partialorder %v1817, 0.0
    %vm2015 = vcmp.ge.f32.partialorder %v1904, 0.0
    %vm2016 = vcmp.ge.f32.partialorder %v1991, 0.0
    %v2017 = vmul.f32 %v1547, 0.01
    %v2018 = vmul.f32 %v1634, 0.01
    %v2019 = vmul.f32 %v1721, 0.01
    %v2020 = vmul.f32 %v1808, 0.01
    %v2021 = vmul.f32 %v1895, 0.01
    %v2022 = vmul.f32 %v1982, 0.01
    %v2023 = vmul.f32 %v1550, 0.01
    %v2024 = vmul.f32 %v1637, 0.01
    %v2025 = vmul.f32 %v1724, 0.01
    %v2026 = vmul.f32 %v1811, 0.01
    %v2027 = vmul.f32 %v1898, 0.01
    %v2028 = vmul.f32 %v1985, 0.01
    %v2029 = vmul.f32 %v1553, 0.01
    %v2030 = vmul.f32 %v1640, 0.01
    %v2031 = vmul.f32 %v1727, 0.01
    %v2032 = vmul.f32 %v1814, 0.01
    %v2033 = vmul.f32 %v1901, 0.01
    %v2034 = vmul.f32 %v1988, 0.01
    %v2035 = vmul.f32 %v1556, 0.01
    %v2036 = vmul.f32 %v1643, 0.01
    %v2037 = vmul.f32 %v1730, 0.01
    %v2038 = vmul.f32 %v1817, 0.01
    %v2039 = vmul.f32 %v1904, 0.01
    %v2040 = vmul.f32 %v1991, 0.01
    %v2041 = vsel %vm1993, %v1547, %v2017
    %v2042 = vsel %vm1994, %v1634, %v2018
    %v2043 = vsel %vm1995, %v1721, %v2019
    %v2044 = vsel %vm1996, %v1808, %v2020
    %v2045 = vsel %vm1997, %v1895, %v2021
    %v2046 = vsel %vm1998, %v1982, %v2022
    %v2047 = vsel %vm1999, %v1550, %v2023
    %v2048 = vsel %vm2000, %v1637, %v2024
    %v2049 = vsel %vm2001, %v1724, %v2025
    %v2050 = vsel %vm2002, %v1811, %v2026
    %v2051 = vsel %vm2003, %v1898, %v2027
    %v2052 = vsel %vm2004, %v1985, %v2028
    %v2053 = vsel %vm2005, %v1553, %v2029
    %v2054 = vsel %vm2006, %v1640, %v2030
    %v2055 = vsel %vm2007, %v1727, %v2031
    %v2056 = vsel %vm2008, %v1814, %v2032
    %v2057 = vsel %vm2009, %v1901, %v2033
    %v2058 = vsel %vm2010, %v1988, %v2034
    %v2059 = vsel %vm2011, %v1556, %v2035
    %v2060 = vsel %vm2012, %v1643, %v2036
    %v2061 = vsel %vm2013, %v1730, %v2037
    %v2062 = vsel %vm2014, %v1817, %v2038
    %v2063 = vsel %vm2015, %v1904, %v2039
    %v2064 = vsel %vm2016, %v1991, %v2040
    %v2065 = vld [vmem:[%s6] sm:$0xff]
    %v2066 = vld [vmem:[%s6 + $0x8] sm:$0xff]
    %v2067 = vld [vmem:[#allocation6] sm:$0xff]
    %v2068 = vld [vmem:[#allocation6 + $0x8] sm:$0xff]
    %v2069 = vld [vmem:[#allocation6 + $0x10] sm:$0xff]
    %v2070 = vld [vmem:[#allocation6 + $0x18] sm:$0xff]
    %v2071 = vld [vmem:[#allocation6 + $0x20] sm:$0xff]
    %v2072 = vld [vmem:[#allocation6 + $0x28] sm:$0xff]
    %v2073 = vld [vmem:[#allocation6 + $0x30] sm:$0xff]
    %v2074 = vld [vmem:[#allocation6 + $0x38] sm:$0xff]
    %v2075 = vld [vmem:[#allocation6 + $0x40] sm:$0xff]
    %v2076 = vld [vmem:[#allocation6 + $0x48] sm:$0xff]
    %v2077 = vld [vmem:[#allocation6 + $0x50] sm:$0xff]
    %v2078 = vld [vmem:[#allocation6 + $0x58] sm:$0xff]
    %v2080 = vsel %vm1458, %v2065, 0
    %v2083 = vsel %vm1458, %v2066, 0
    %2085 = vmatpush.msra.mxu0 0.0
    %2086 = vmatpush.msra.mxu0 0.0
    %2087 = vmatpush.msra.mxu0 0.0
    %2088 = vmatpush.msra.mxu0 0.0
    %2089 = vmatpush.msra.mxu0 0.0
    %2090 = vmatpush.msra.mxu0 0.0
    %2091 = vmatpush.msra.mxu0 0.0
    %2092 = vmatpush.msra.mxu0 0.0
    %2093 = vmatpush.msra.mxu0 0.0
    %2094 = vmatpush.msra.mxu0 0.0
    %2095 = vmatpush.msra.mxu0 0.0
    %2096 = vmatpush.msra.mxu0 0.0
    %2097 = vmatpush.msra.mxu0 %v2059
    %2098 = vmatpush.msra.mxu0 %v2053
    %2099 = vmatpush.msra.mxu0 %v2047
    %2100 = vmatpush.msra.mxu0 %v2041
    %2101 = vmatmul.f32.gmra.mxu0 %v2080
    %v2102 = vpop.f32.mrf.mxu0
    %v2103 = vadd.f32 %v2067, %v2102
    %2104 = vmatmul.f32.gmra.mxu0 %v2083
    %v2105 = vpop.f32.mrf.mxu0
    %v2106 = vadd.f32 %v2073, %v2105
    %2107 = vdwg.mxu0
    %2108 = vmatpush.msra.mxu0 0.0
    %2109 = vmatpush.msra.mxu0 0.0
    %2110 = vmatpush.msra.mxu0 0.0
    %2111 = vmatpush.msra.mxu0 0.0
    %2112 = vmatpush.msra.mxu0 0.0
    %2113 = vmatpush.msra.mxu0 0.0
    %2114 = vmatpush.msra.mxu0 0.0
    %2115 = vmatpush.msra.mxu0 0.0
    %2116 = vmatpush.msra.mxu0 0.0
    %2117 = vmatpush.msra.mxu0 0.0
    %2118 = vmatpush.msra.mxu0 0.0
    %2119 = vmatpush.msra.mxu0 0.0
    %2120 = vmatpush.msra.mxu0 %v2060
    %2121 = vmatpush.msra.mxu0 %v2054
    %2122 = vmatpush.msra.mxu0 %v2048
    %2123 = vmatpush.msra.mxu0 %v2042
    %2124 = vmatmul.f32.gmra.mxu0 %v2080
    %v2125 = vpop.f32.mrf.mxu0
    %v2126 = vadd.f32 %v2068, %v2125
    %2127 = vmatmul.f32.gmra.mxu0 %v2083
    %v2128 = vpop.f32.mrf.mxu0
    %v2129 = vadd.f32 %v2074, %v2128
    %2130 = vdwg.mxu0
    %2131 = vmatpush.msra.mxu0 0.0
    %2132 = vmatpush.msra.mxu0 0.0
    %2133 = vmatpush.msra.mxu0 0.0
    %2134 = vmatpush.msra.mxu0 0.0
    %2135 = vmatpush.msra.mxu0 0.0
    %2136 = vmatpush.msra.mxu0 0.0
    %2137 = vmatpush.msra.mxu0 0.0
    %2138 = vmatpush.msra.mxu0 0.0
    %2139 = vmatpush.msra.mxu0 0.0
    %2140 = vmatpush.msra.mxu0 0.0
    %2141 = vmatpush.msra.mxu0 0.0
    %2142 = vmatpush.msra.mxu0 0.0
    %2143 = vmatpush.msra.mxu0 %v2061
    %2144 = vmatpush.msra.mxu0 %v2055
    %2145 = vmatpush.msra.mxu0 %v2049
    %2146 = vmatpush.msra.mxu0 %v2043
    %2147 = vmatmul.f32.gmra.mxu0 %v2080
    %v2148 = vpop.f32.mrf.mxu0
    %v2149 = vadd.f32 %v2069, %v2148
    %2150 = vmatmul.f32.gmra.mxu0 %v2083
    %v2151 = vpop.f32.mrf.mxu0
    %v2152 = vadd.f32 %v2075, %v2151
    %2153 = vdwg.mxu0
    %2154 = vmatpush.msra.mxu0 0.0
    %2155 = vmatpush.msra.mxu0 0.0
    %2156 = vmatpush.msra.mxu0 0.0
    %2157 = vmatpush.msra.mxu0 0.0
    %2158 = vmatpush.msra.mxu0 0.0
    %2159 = vmatpush.msra.mxu0 0.0
    %2160 = vmatpush.msra.mxu0 0.0
    %2161 = vmatpush.msra.mxu0 0.0
    %2162 = vmatpush.msra.mxu0 0.0
    %2163 = vmatpush.msra.mxu0 0.0
    %2164 = vmatpush.msra.mxu0 0.0
    %2165 = vmatpush.msra.mxu0 0.0
    %2166 = vmatpush.msra.mxu0 %v2062
    %2167 = vmatpush.msra.mxu0 %v2056
    %2168 = vmatpush.msra.mxu0 %v2050
    %2169 = vmatpush.msra.mxu0 %v2044
    %2170 = vmatmul.f32.gmra.mxu0 %v2080
    %v2171 = vpop.f32.mrf.mxu0
    %v2172 = vadd.f32 %v2070, %v2171
    %2173 = vmatmul.f32.gmra.mxu0 %v2083
    %v2174 = vpop.f32.mrf.mxu0
    %v2175 = vadd.f32 %v2076, %v2174
    %2176 = vdwg.mxu0
    %2177 = vmatpush.msra.mxu0 0.0
    %2178 = vmatpush.msra.mxu0 0.0
    %2179 = vmatpush.msra.mxu0 0.0
    %2180 = vmatpush.msra.mxu0 0.0
    %2181 = vmatpush.msra.mxu0 0.0
    %2182 = vmatpush.msra.mxu0 0.0
    %2183 = vmatpush.msra.mxu0 0.0
    %2184 = vmatpush.msra.mxu0 0.0
    %2185 = vmatpush.msra.mxu0 0.0
    %2186 = vmatpush.msra.mxu0 0.0
    %2187 = vmatpush.msra.mxu0 0.0
    %2188 = vmatpush.msra.mxu0 0.0
    %2189 = vmatpush.msra.mxu0 %v2063
    %2190 = vmatpush.msra.mxu0 %v2057
    %2191 = vmatpush.msra.mxu0 %v2051
    %2192 = vmatpush.msra.mxu0 %v2045
    %2193 = vmatmul.f32.gmra.mxu0 %v2080
    %v2194 = vpop.f32.mrf.mxu0
    %v2195 = vadd.f32 %v2071, %v2194
    %2196 = vmatmul.f32.gmra.mxu0 %v2083
    %v2197 = vpop.f32.mrf.mxu0
    %v2198 = vadd.f32 %v2077, %v2197
    %2199 = vdwg.mxu0
    %2200 = vmatpush.msra.mxu0 0.0
    %2201 = vmatpush.msra.mxu0 0.0
    %2202 = vmatpush.msra.mxu0 0.0
    %2203 = vmatpush.msra.mxu0 0.0
    %2204 = vmatpush.msra.mxu0 0.0
    %2205 = vmatpush.msra.mxu0 0.0
    %2206 = vmatpush.msra.mxu0 0.0
    %2207 = vmatpush.msra.mxu0 0.0
    %2208 = vmatpush.msra.mxu0 0.0
    %2209 = vmatpush.msra.mxu0 0.0
    %2210 = vmatpush.msra.mxu0 0.0
    %2211 = vmatpush.msra.mxu0 0.0
    %2212 = vmatpush.msra.mxu0 %v2064
    %2213 = vmatpush.msra.mxu0 %v2058
    %2214 = vmatpush.msra.mxu0 %v2052
    %2215 = vmatpush.msra.mxu0 %v2046
    %2216 = vmatmul.f32.gmra.mxu0 %v2080
    %v2217 = vpop.f32.mrf.mxu0
    %v2218 = vadd.f32 %v2072, %v2217
    %2219 = vmatmul.f32.gmra.mxu0 %v2083
    %v2220 = vpop.f32.mrf.mxu0
    %v2221 = vadd.f32 %v2078, %v2220
    %2222 = vdwg.mxu0
    %2223 = vst [vmem:[#allocation6] sm:$0xff] %v2103
    %2224 = vst [vmem:[#allocation6 + $0x8] sm:$0xff] %v2126
    %2225 = vst [vmem:[#allocation6 + $0x10] sm:$0xff] %v2149
    %2226 = vst [vmem:[#allocation6 + $0x18] sm:$0xff] %v2172
    %2227 = vst [vmem:[#allocation6 + $0x20] sm:$0xff] %v2195
    %2228 = vst [vmem:[#allocation6 + $0x28] sm:$0xff] %v2218
    %2229 = vst [vmem:[#allocation6 + $0x30] sm:$0xff] %v2106
    %2230 = vst [vmem:[#allocation6 + $0x38] sm:$0xff] %v2129
    %2231 = vst [vmem:[#allocation6 + $0x40] sm:$0xff] %v2152
    %2232 = vst [vmem:[#allocation6 + $0x48] sm:$0xff] %v2175
    %2233 = vst [vmem:[#allocation6 + $0x50] sm:$0xff] %v2198
    %2234 = vst [vmem:[#allocation6 + $0x58] sm:$0xff] %v2221
    %v2235 = vld [vmem:[#allocation6] sm:$0xff]
    %v2236 = vld [vmem:[#allocation6 + $0x8] sm:$0xff]
    %v2237 = vld [vmem:[#allocation6 + $0x10] sm:$0xff]
    %v2238 = vld [vmem:[#allocation6 + $0x18] sm:$0xff]
    %v2239 = vld [vmem:[#allocation6 + $0x20] sm:$0xff]
    %v2240 = vld [vmem:[#allocation6 + $0x28] sm:$0xff]
    %v2241 = vld [vmem:[#allocation6 + $0x30] sm:$0xff]
    %v2242 = vld [vmem:[#allocation6 + $0x38] sm:$0xff]
    %v2243 = vld [vmem:[#allocation6 + $0x40] sm:$0xff]
    %v2244 = vld [vmem:[#allocation6 + $0x48] sm:$0xff]
    %v2245 = vld [vmem:[#allocation6 + $0x50] sm:$0xff]
    %v2246 = vld [vmem:[#allocation6 + $0x58] sm:$0xff]
    %s2247 = scalar_lea.vmem %s2, 32
    %v2248 = vld [vmem:[%s2247] sm:$0xff]
    %v2249 = vld [vmem:[%s2247 + $0x8] sm:$0xff]
    %v2250 = vld [vmem:[%s2247 + $0x10] sm:$0xff]
    %v2251 = vld [vmem:[%s2247 + $0x18] sm:$0xff]
    %s2252 = scalar_lea.vmem %s3, 32
    %v2253 = vld [vmem:[%s2252] sm:$0xff]
    %v2254 = vld [vmem:[%s2252 + $0x8] sm:$0xff]
    %v2255 = vld [vmem:[%s2252 + $0x10] sm:$0xff]
    %v2256 = vld [vmem:[%s2252 + $0x18] sm:$0xff]
    %2258 = vset.pattern.permute.xlu0 0
    %2259 = vperm.xlu0 %2258, %v2253
    %v2260 = vpop.permute.xlu0 %2259
    %2263 = vset.pattern.permute.xlu0 0
    %2264 = vperm.xlu0 %2263, %v2254
    %v2265 = vpop.permute.xlu0 %2264
    %2268 = vset.pattern.permute.xlu0 0
    %2269 = vperm.xlu0 %2268, %v2255
    %v2270 = vpop.permute.xlu0 %2269
    %2273 = vset.pattern.permute.xlu0 0
    %2274 = vperm.xlu0 %2273, %v2256
    %v2275 = vpop.permute.xlu0 %2274
    %v2278 = vsel %vm108, %v2248, 0
    %v2281 = vsel %vm108, %v2249, 0
    %v2284 = vsel %vm108, %v2250, 0
    %v2287 = vsel %vm108, %v2251, 0
    %2289 = vmatpush.msra.mxu0 0.0
    %2290 = vmatpush.msra.mxu0 0.0
    %2291 = vmatpush.msra.mxu0 0.0
    %2292 = vmatpush.msra.mxu0 0.0
    %2293 = vmatpush.msra.mxu0 0.0
    %2294 = vmatpush.msra.mxu0 0.0
    %2295 = vmatpush.msra.mxu0 0.0
    %2296 = vmatpush.msra.mxu0 0.0
    %2297 = vmatpush.msra.mxu0 0.0
    %2298 = vmatpush.msra.mxu0 0.0
    %2299 = vmatpush.msra.mxu0 0.0
    %2300 = vmatpush.msra.mxu0 0.0
    %2301 = vmatpush.msra.mxu0 0.0
    %2302 = vmatpush.msra.mxu0 0.0
    %2303 = vmatpush.msra.mxu0 %v2241
    %2304 = vmatpush.msra.mxu0 %v2235
    %2305 = vmatmul.f32.gmra.mxu0 %v2278
    %v2306 = vpop.f32.mrf.mxu0
    %v2307 = vadd.f32 %v2260, %v2306
    %2308 = vmatmul.f32.gmra.mxu0 %v2281
    %v2309 = vpop.f32.mrf.mxu0
    %v2310 = vadd.f32 %v2265, %v2309
    %2311 = vmatmul.f32.gmra.mxu0 %v2284
    %v2312 = vpop.f32.mrf.mxu0
    %v2313 = vadd.f32 %v2270, %v2312
    %2314 = vmatmul.f32.gmra.mxu0 %v2287
    %v2315 = vpop.f32.mrf.mxu0
    %v2316 = vadd.f32 %v2275, %v2315
    %2317 = vdwg.mxu0
    %2318 = vmatpush.msra.mxu0 0.0
    %2319 = vmatpush.msra.mxu0 0.0
    %2320 = vmatpush.msra.mxu0 0.0
    %2321 = vmatpush.msra.mxu0 0.0
    %2322 = vmatpush.msra.mxu0 0.0
    %2323 = vmatpush.msra.mxu0 0.0
    %2324 = vmatpush.msra.mxu0 0.0
    %2325 = vmatpush.msra.mxu0 0.0
    %2326 = vmatpush.msra.mxu0 0.0
    %2327 = vmatpush.msra.mxu0 0.0
    %2328 = vmatpush.msra.mxu0 0.0
    %2329 = vmatpush.msra.mxu0 0.0
    %2330 = vmatpush.msra.mxu0 0.0
    %2331 = vmatpush.msra.mxu0 0.0
    %2332 = vmatpush.msra.mxu0 %v2242
    %2333 = vmatpush.msra.mxu0 %v2236
    %2334 = vmatmul.f32.gmra.mxu0 %v2278
    %v2335 = vpop.f32.mrf.mxu0
    %v2336 = vadd.f32 %v2260, %v2335
    %2337 = vmatmul.f32.gmra.mxu0 %v2281
    %v2338 = vpop.f32.mrf.mxu0
    %v2339 = vadd.f32 %v2265, %v2338
    %2340 = vmatmul.f32.gmra.mxu0 %v2284
    %v2341 = vpop.f32.mrf.mxu0
    %v2342 = vadd.f32 %v2270, %v2341
    %2343 = vmatmul.f32.gmra.mxu0 %v2287
    %v2344 = vpop.f32.mrf.mxu0
    %v2345 = vadd.f32 %v2275, %v2344
    %2346 = vdwg.mxu0
    %2347 = vmatpush.msra.mxu0 0.0
    %2348 = vmatpush.msra.mxu0 0.0
    %2349 = vmatpush.msra.mxu0 0.0
    %2350 = vmatpush.msra.mxu0 0.0
    %2351 = vmatpush.msra.mxu0 0.0
    %2352 = vmatpush.msra.mxu0 0.0
    %2353 = vmatpush.msra.mxu0 0.0
    %2354 = vmatpush.msra.mxu0 0.0
    %2355 = vmatpush.msra.mxu0 0.0
    %2356 = vmatpush.msra.mxu0 0.0
    %2357 = vmatpush.msra.mxu0 0.0
    %2358 = vmatpush.msra.mxu0 0.0
    %2359 = vmatpush.msra.mxu0 0.0
    %2360 = vmatpush.msra.mxu0 0.0
    %2361 = vmatpush.msra.mxu0 %v2243
    %2362 = vmatpush.msra.mxu0 %v2237
    %2363 = vmatmul.f32.gmra.mxu0 %v2278
    %v2364 = vpop.f32.mrf.mxu0
    %v2365 = vadd.f32 %v2260, %v2364
    %2366 = vmatmul.f32.gmra.mxu0 %v2281
    %v2367 = vpop.f32.mrf.mxu0
    %v2368 = vadd.f32 %v2265, %v2367
    %2369 = vmatmul.f32.gmra.mxu0 %v2284
    %v2370 = vpop.f32.mrf.mxu0
    %v2371 = vadd.f32 %v2270, %v2370
    %2372 = vmatmul.f32.gmra.mxu0 %v2287
    %v2373 = vpop.f32.mrf.mxu0
    %v2374 = vadd.f32 %v2275, %v2373
    %2375 = vdwg.mxu0
    %2376 = vmatpush.msra.mxu0 0.0
    %2377 = vmatpush.msra.mxu0 0.0
    %2378 = vmatpush.msra.mxu0 0.0
    %2379 = vmatpush.msra.mxu0 0.0
    %2380 = vmatpush.msra.mxu0 0.0
    %2381 = vmatpush.msra.mxu0 0.0
    %2382 = vmatpush.msra.mxu0 0.0
    %2383 = vmatpush.msra.mxu0 0.0
    %2384 = vmatpush.msra.mxu0 0.0
    %2385 = vmatpush.msra.mxu0 0.0
    %2386 = vmatpush.msra.mxu0 0.0
    %2387 = vmatpush.msra.mxu0 0.0
    %2388 = vmatpush.msra.mxu0 0.0
    %2389 = vmatpush.msra.mxu0 0.0
    %2390 = vmatpush.msra.mxu0 %v2244
    %2391 = vmatpush.msra.mxu0 %v2238
    %2392 = vmatmul.f32.gmra.mxu0 %v2278
    %v2393 = vpop.f32.mrf.mxu0
    %v2394 = vadd.f32 %v2260, %v2393
    %2395 = vmatmul.f32.gmra.mxu0 %v2281
    %v2396 = vpop.f32.mrf.mxu0
    %v2397 = vadd.f32 %v2265, %v2396
    %2398 = vmatmul.f32.gmra.mxu0 %v2284
    %v2399 = vpop.f32.mrf.mxu0
    %v2400 = vadd.f32 %v2270, %v2399
    %2401 = vmatmul.f32.gmra.mxu0 %v2287
    %v2402 = vpop.f32.mrf.mxu0
    %v2403 = vadd.f32 %v2275, %v2402
    %2404 = vdwg.mxu0
    %2405 = vmatpush.msra.mxu0 0.0
    %2406 = vmatpush.msra.mxu0 0.0
    %2407 = vmatpush.msra.mxu0 0.0
    %2408 = vmatpush.msra.mxu0 0.0
    %2409 = vmatpush.msra.mxu0 0.0
    %2410 = vmatpush.msra.mxu0 0.0
    %2411 = vmatpush.msra.mxu0 0.0
    %2412 = vmatpush.msra.mxu0 0.0
    %2413 = vmatpush.msra.mxu0 0.0
    %2414 = vmatpush.msra.mxu0 0.0
    %2415 = vmatpush.msra.mxu0 0.0
    %2416 = vmatpush.msra.mxu0 0.0
    %2417 = vmatpush.msra.mxu0 0.0
    %2418 = vmatpush.msra.mxu0 0.0
    %2419 = vmatpush.msra.mxu0 %v2245
    %2420 = vmatpush.msra.mxu0 %v2239
    %2421 = vmatmul.f32.gmra.mxu0 %v2278
    %v2422 = vpop.f32.mrf.mxu0
    %v2423 = vadd.f32 %v2260, %v2422
    %2424 = vmatmul.f32.gmra.mxu0 %v2281
    %v2425 = vpop.f32.mrf.mxu0
    %v2426 = vadd.f32 %v2265, %v2425
    %2427 = vmatmul.f32.gmra.mxu0 %v2284
    %v2428 = vpop.f32.mrf.mxu0
    %v2429 = vadd.f32 %v2270, %v2428
    %2430 = vmatmul.f32.gmra.mxu0 %v2287
    %v2431 = vpop.f32.mrf.mxu0
    %v2432 = vadd.f32 %v2275, %v2431
    %2433 = vdwg.mxu0
    %2434 = vmatpush.msra.mxu0 0.0
    %2435 = vmatpush.msra.mxu0 0.0
    %2436 = vmatpush.msra.mxu0 0.0
    %2437 = vmatpush.msra.mxu0 0.0
    %2438 = vmatpush.msra.mxu0 0.0
    %2439 = vmatpush.msra.mxu0 0.0
    %2440 = vmatpush.msra.mxu0 0.0
    %2441 = vmatpush.msra.mxu0 0.0
    %2442 = vmatpush.msra.mxu0 0.0
    %2443 = vmatpush.msra.mxu0 0.0
    %2444 = vmatpush.msra.mxu0 0.0
    %2445 = vmatpush.msra.mxu0 0.0
    %2446 = vmatpush.msra.mxu0 0.0
    %2447 = vmatpush.msra.mxu0 0.0
    %2448 = vmatpush.msra.mxu0 %v2246
    %2449 = vmatpush.msra.mxu0 %v2240
    %2450 = vmatmul.f32.gmra.mxu0 %v2278
    %v2451 = vpop.f32.mrf.mxu0
    %v2452 = vadd.f32 %v2260, %v2451
    %2453 = vmatmul.f32.gmra.mxu0 %v2281
    %v2454 = vpop.f32.mrf.mxu0
    %v2455 = vadd.f32 %v2265, %v2454
    %2456 = vmatmul.f32.gmra.mxu0 %v2284
    %v2457 = vpop.f32.mrf.mxu0
    %v2458 = vadd.f32 %v2270, %v2457
    %2459 = vmatmul.f32.gmra.mxu0 %v2287
    %v2460 = vpop.f32.mrf.mxu0
    %v2461 = vadd.f32 %v2275, %v2460
    %2462 = vdwg.mxu0
    %vm2463 = vcmp.ge.f32.partialorder %v2307, 0.0
    %vm2464 = vcmp.ge.f32.partialorder %v2336, 0.0
    %vm2465 = vcmp.ge.f32.partialorder %v2365, 0.0
    %vm2466 = vcmp.ge.f32.partialorder %v2394, 0.0
    %vm2467 = vcmp.ge.f32.partialorder %v2423, 0.0
    %vm2468 = vcmp.ge.f32.partialorder %v2452, 0.0
    %vm2469 = vcmp.ge.f32.partialorder %v2310, 0.0
    %vm2470 = vcmp.ge.f32.partialorder %v2339, 0.0
    %vm2471 = vcmp.ge.f32.partialorder %v2368, 0.0
    %vm2472 = vcmp.ge.f32.partialorder %v2397, 0.0
    %vm2473 = vcmp.ge.f32.partialorder %v2426, 0.0
    %vm2474 = vcmp.ge.f32.partialorder %v2455, 0.0
    %vm2475 = vcmp.ge.f32.partialorder %v2313, 0.0
    %vm2476 = vcmp.ge.f32.partialorder %v2342, 0.0
    %vm2477 = vcmp.ge.f32.partialorder %v2371, 0.0
    %vm2478 = vcmp.ge.f32.partialorder %v2400, 0.0
    %vm2479 = vcmp.ge.f32.partialorder %v2429, 0.0
    %vm2480 = vcmp.ge.f32.partialorder %v2458, 0.0
    %vm2481 = vcmp.ge.f32.partialorder %v2316, 0.0
    %vm2482 = vcmp.ge.f32.partialorder %v2345, 0.0
    %vm2483 = vcmp.ge.f32.partialorder %v2374, 0.0
    %vm2484 = vcmp.ge.f32.partialorder %v2403, 0.0
    %vm2485 = vcmp.ge.f32.partialorder %v2432, 0.0
    %vm2486 = vcmp.ge.f32.partialorder %v2461, 0.0
    %v2487 = vmul.f32 %v2307, 0.01
    %v2488 = vmul.f32 %v2336, 0.01
    %v2489 = vmul.f32 %v2365, 0.01
    %v2490 = vmul.f32 %v2394, 0.01
    %v2491 = vmul.f32 %v2423, 0.01
    %v2492 = vmul.f32 %v2452, 0.01
    %v2493 = vmul.f32 %v2310, 0.01
    %v2494 = vmul.f32 %v2339, 0.01
    %v2495 = vmul.f32 %v2368, 0.01
    %v2496 = vmul.f32 %v2397, 0.01
    %v2497 = vmul.f32 %v2426, 0.01
    %v2498 = vmul.f32 %v2455, 0.01
    %v2499 = vmul.f32 %v2313, 0.01
    %v2500 = vmul.f32 %v2342, 0.01
    %v2501 = vmul.f32 %v2371, 0.01
    %v2502 = vmul.f32 %v2400, 0.01
    %v2503 = vmul.f32 %v2429, 0.01
    %v2504 = vmul.f32 %v2458, 0.01
    %v2505 = vmul.f32 %v2316, 0.01
    %v2506 = vmul.f32 %v2345, 0.01
    %v2507 = vmul.f32 %v2374, 0.01
    %v2508 = vmul.f32 %v2403, 0.01
    %v2509 = vmul.f32 %v2432, 0.01
    %v2510 = vmul.f32 %v2461, 0.01
    %v2511 = vsel %vm2463, %v2307, %v2487
    %v2512 = vsel %vm2464, %v2336, %v2488
    %v2513 = vsel %vm2465, %v2365, %v2489
    %v2514 = vsel %vm2466, %v2394, %v2490
    %v2515 = vsel %vm2467, %v2423, %v2491
    %v2516 = vsel %vm2468, %v2452, %v2492
    %v2517 = vsel %vm2469, %v2310, %v2493
    %v2518 = vsel %vm2470, %v2339, %v2494
    %v2519 = vsel %vm2471, %v2368, %v2495
    %v2520 = vsel %vm2472, %v2397, %v2496
    %v2521 = vsel %vm2473, %v2426, %v2497
    %v2522 = vsel %vm2474, %v2455, %v2498
    %v2523 = vsel %vm2475, %v2313, %v2499
    %v2524 = vsel %vm2476, %v2342, %v2500
    %v2525 = vsel %vm2477, %v2371, %v2501
    %v2526 = vsel %vm2478, %v2400, %v2502
    %v2527 = vsel %vm2479, %v2429, %v2503
    %v2528 = vsel %vm2480, %v2458, %v2504
    %v2529 = vsel %vm2481, %v2316, %v2505
    %v2530 = vsel %vm2482, %v2345, %v2506
    %v2531 = vsel %vm2483, %v2374, %v2507
    %v2532 = vsel %vm2484, %v2403, %v2508
    %v2533 = vsel %vm2485, %v2432, %v2509
    %v2534 = vsel %vm2486, %v2461, %v2510
    %v2535 = vmul.f32 %v2511, %v368
    %v2536 = vmul.f32 %v2512, %v369
    %v2537 = vmul.f32 %v2513, %v370
    %v2538 = vmul.f32 %v2514, %v371
    %v2539 = vmul.f32 %v2515, %v372
    %v2540 = vmul.f32 %v2516, %v373
    %v2541 = vmul.f32 %v2517, %v368
    %v2542 = vmul.f32 %v2518, %v369
    %v2543 = vmul.f32 %v2519, %v370
    %v2544 = vmul.f32 %v2520, %v371
    %v2545 = vmul.f32 %v2521, %v372
    %v2546 = vmul.f32 %v2522, %v373
    %v2547 = vmul.f32 %v2523, %v368
    %v2548 = vmul.f32 %v2524, %v369
    %v2549 = vmul.f32 %v2525, %v370
    %v2550 = vmul.f32 %v2526, %v371
    %v2551 = vmul.f32 %v2527, %v372
    %v2552 = vmul.f32 %v2528, %v373
    %v2553 = vmul.f32 %v2529, %v368
    %v2554 = vmul.f32 %v2530, %v369
    %v2555 = vmul.f32 %v2531, %v370
    %v2556 = vmul.f32 %v2532, %v371
    %v2557 = vmul.f32 %v2533, %v372
    %v2558 = vmul.f32 %v2534, %v373
    %2559 = vrot.lane.b32.xlu0 %v2535, 19
    %v2560 = vpop.permute.xlu0 %2559
    %2561 = vrot.lane.b32.xlu0 %v2541, 19
    %v2562 = vpop.permute.xlu0 %2561
    %2563 = vrot.lane.b32.xlu0 %v2547, 19
    %v2564 = vpop.permute.xlu0 %2563
    %2565 = vrot.lane.b32.xlu0 %v2553, 19
    %v2566 = vpop.permute.xlu0 %2565
    %2567 = vrot.lane.b32.xlu0 %v2536, 19
    %v2568 = vpop.permute.xlu0 %2567
    %2569 = vrot.lane.b32.xlu0 %v2542, 19
    %v2570 = vpop.permute.xlu0 %2569
    %2571 = vrot.lane.b32.xlu0 %v2548, 19
    %v2572 = vpop.permute.xlu0 %2571
    %2573 = vrot.lane.b32.xlu0 %v2554, 19
    %v2574 = vpop.permute.xlu0 %2573
    %2575 = vrot.lane.b32.xlu0 %v2537, 19
    %v2576 = vpop.permute.xlu0 %2575
    %2577 = vrot.lane.b32.xlu0 %v2543, 19
    %v2578 = vpop.permute.xlu0 %2577
    %2579 = vrot.lane.b32.xlu0 %v2549, 19
    %v2580 = vpop.permute.xlu0 %2579
    %2581 = vrot.lane.b32.xlu0 %v2555, 19
    %v2582 = vpop.permute.xlu0 %2581
    %2583 = vrot.lane.b32.xlu0 %v2538, 19
    %v2584 = vpop.permute.xlu0 %2583
    %2585 = vrot.lane.b32.xlu0 %v2544, 19
    %v2586 = vpop.permute.xlu0 %2585
    %2587 = vrot.lane.b32.xlu0 %v2550, 19
    %v2588 = vpop.permute.xlu0 %2587
    %2589 = vrot.lane.b32.xlu0 %v2556, 19
    %v2590 = vpop.permute.xlu0 %2589
    %2591 = vrot.lane.b32.xlu0 %v2539, 19
    %v2592 = vpop.permute.xlu0 %2591
    %2593 = vrot.lane.b32.xlu0 %v2545, 19
    %v2594 = vpop.permute.xlu0 %2593
    %2595 = vrot.lane.b32.xlu0 %v2551, 19
    %v2596 = vpop.permute.xlu0 %2595
    %2597 = vrot.lane.b32.xlu0 %v2557, 19
    %v2598 = vpop.permute.xlu0 %2597
    %2599 = vrot.lane.b32.xlu0 %v2540, 19
    %v2600 = vpop.permute.xlu0 %2599
    %2601 = vrot.lane.b32.xlu0 %v2546, 19
    %v2602 = vpop.permute.xlu0 %2601
    %2603 = vrot.lane.b32.xlu0 %v2552, 19
    %v2604 = vpop.permute.xlu0 %2603
    %2605 = vrot.lane.b32.xlu0 %v2558, 19
    %v2606 = vpop.permute.xlu0 %2605
    %v2607 = vsel %vm454, %v2592, %v2600
    %v2608 = vsel %vm454, %v2594, %v2602
    %v2609 = vsel %vm454, %v2596, %v2604
    %v2610 = vsel %vm454, %v2598, %v2606
    %v2611 = vsel %vm454, %v2584, %v2592
    %v2612 = vsel %vm454, %v2586, %v2594
    %v2613 = vsel %vm454, %v2588, %v2596
    %v2614 = vsel %vm454, %v2590, %v2598
    %v2615 = vsel %vm454, %v2576, %v2584
    %v2616 = vsel %vm454, %v2578, %v2586
    %v2617 = vsel %vm454, %v2580, %v2588
    %v2618 = vsel %vm454, %v2582, %v2590
    %v2619 = vsel %vm454, %v2568, %v2576
    %v2620 = vsel %vm454, %v2570, %v2578
    %v2621 = vsel %vm454, %v2572, %v2580
    %v2622 = vsel %vm454, %v2574, %v2582
    %v2623 = vsel %vm454, %v2560, %v2568
    %v2624 = vsel %vm454, %v2562, %v2570
    %v2625 = vsel %vm454, %v2564, %v2572
    %v2626 = vsel %vm454, %v2566, %v2574
    %v2627 = vsel %vm454, %v2600, %v2560
    %v2628 = vsel %vm454, %v2602, %v2562
    %v2629 = vsel %vm454, %v2604, %v2564
    %v2630 = vsel %vm454, %v2606, %v2566
    %2631 = vst [vmem:[#allocation2] sm:$0xff] %v2627
    %2632 = vst [vmem:[#allocation2 + $0x8] sm:$0xff] %v2623
    %2633 = vst [vmem:[#allocation2 + $0x10] sm:$0xff] %v2619
    %2634 = vst [vmem:[#allocation2 + $0x18] sm:$0xff] %v2615
    %2635 = vst [vmem:[#allocation2 + $0x20] sm:$0xff] %v2611
    %2636 = vst [vmem:[#allocation2 + $0x28] sm:$0xff] %v2607
    %2637 = vst [vmem:[#allocation2 + $0x30] sm:$0xff] %v2628
    %2638 = vst [vmem:[#allocation2 + $0x38] sm:$0xff] %v2624
    %2639 = vst [vmem:[#allocation2 + $0x40] sm:$0xff] %v2620
    %2640 = vst [vmem:[#allocation2 + $0x48] sm:$0xff] %v2616
    %2641 = vst [vmem:[#allocation2 + $0x50] sm:$0xff] %v2612
    %2642 = vst [vmem:[#allocation2 + $0x58] sm:$0xff] %v2608
    %2643 = vst [vmem:[#allocation2 + $0x60] sm:$0xff] %v2629
    %2644 = vst [vmem:[#allocation2 + $0x68] sm:$0xff] %v2625
    %2645 = vst [vmem:[#allocation2 + $0x70] sm:$0xff] %v2621
    %2646 = vst [vmem:[#allocation2 + $0x78] sm:$0xff] %v2617
    %2647 = vst [vmem:[#allocation2 + $0x80] sm:$0xff] %v2613
    %2648 = vst [vmem:[#allocation2 + $0x88] sm:$0xff] %v2609
    %2649 = vst [vmem:[#allocation2 + $0x90] sm:$0xff] %v2630
    %2650 = vst [vmem:[#allocation2 + $0x98] sm:$0xff] %v2626
    %2651 = vst [vmem:[#allocation2 + $0xa0] sm:$0xff] %v2622
    %2652 = vst [vmem:[#allocation2 + $0xa8] sm:$0xff] %v2618
    %2653 = vst [vmem:[#allocation2 + $0xb0] sm:$0xff] %v2614
    %2654 = vst [vmem:[#allocation2 + $0xb8] sm:$0xff] %v2610
    %2655 = vrot.lane.b32.xlu0 %v2535, 18
    %v2656 = vpop.permute.xlu0 %2655
    %2657 = vrot.lane.b32.xlu0 %v2541, 18
    %v2658 = vpop.permute.xlu0 %2657
    %2659 = vrot.lane.b32.xlu0 %v2547, 18
    %v2660 = vpop.permute.xlu0 %2659
    %2661 = vrot.lane.b32.xlu0 %v2553, 18
    %v2662 = vpop.permute.xlu0 %2661
    %2663 = vrot.lane.b32.xlu0 %v2536, 18
    %v2664 = vpop.permute.xlu0 %2663
    %2665 = vrot.lane.b32.xlu0 %v2542, 18
    %v2666 = vpop.permute.xlu0 %2665
    %2667 = vrot.lane.b32.xlu0 %v2548, 18
    %v2668 = vpop.permute.xlu0 %2667
    %2669 = vrot.lane.b32.xlu0 %v2554, 18
    %v2670 = vpop.permute.xlu0 %2669
    %2671 = vrot.lane.b32.xlu0 %v2537, 18
    %v2672 = vpop.permute.xlu0 %2671
    %2673 = vrot.lane.b32.xlu0 %v2543, 18
    %v2674 = vpop.permute.xlu0 %2673
    %2675 = vrot.lane.b32.xlu0 %v2549, 18
    %v2676 = vpop.permute.xlu0 %2675
    %2677 = vrot.lane.b32.xlu0 %v2555, 18
    %v2678 = vpop.permute.xlu0 %2677
    %2679 = vrot.lane.b32.xlu0 %v2538, 18
    %v2680 = vpop.permute.xlu0 %2679
    %2681 = vrot.lane.b32.xlu0 %v2544, 18
    %v2682 = vpop.permute.xlu0 %2681
    %2683 = vrot.lane.b32.xlu0 %v2550, 18
    %v2684 = vpop.permute.xlu0 %2683
    %2685 = vrot.lane.b32.xlu0 %v2556, 18
    %v2686 = vpop.permute.xlu0 %2685
    %2687 = vrot.lane.b32.xlu0 %v2539, 18
    %v2688 = vpop.permute.xlu0 %2687
    %2689 = vrot.lane.b32.xlu0 %v2545, 18
    %v2690 = vpop.permute.xlu0 %2689
    %2691 = vrot.lane.b32.xlu0 %v2551, 18
    %v2692 = vpop.permute.xlu0 %2691
    %2693 = vrot.lane.b32.xlu0 %v2557, 18
    %v2694 = vpop.permute.xlu0 %2693
    %2695 = vrot.lane.b32.xlu0 %v2540, 18
    %v2696 = vpop.permute.xlu0 %2695
    %2697 = vrot.lane.b32.xlu0 %v2546, 18
    %v2698 = vpop.permute.xlu0 %2697
    %2699 = vrot.lane.b32.xlu0 %v2552, 18
    %v2700 = vpop.permute.xlu0 %2699
    %2701 = vrot.lane.b32.xlu0 %v2558, 18
    %v2702 = vpop.permute.xlu0 %2701
    %v2703 = vsel %vm551, %v2688, %v2696
    %v2704 = vsel %vm551, %v2690, %v2698
    %v2705 = vsel %vm551, %v2692, %v2700
    %v2706 = vsel %vm551, %v2694, %v2702
    %v2707 = vsel %vm551, %v2680, %v2688
    %v2708 = vsel %vm551, %v2682, %v2690
    %v2709 = vsel %vm551, %v2684, %v2692
    %v2710 = vsel %vm551, %v2686, %v2694
    %v2711 = vsel %vm551, %v2672, %v2680
    %v2712 = vsel %vm551, %v2674, %v2682
    %v2713 = vsel %vm551, %v2676, %v2684
    %v2714 = vsel %vm551, %v2678, %v2686
    %v2715 = vsel %vm551, %v2664, %v2672
    %v2716 = vsel %vm551, %v2666, %v2674
    %v2717 = vsel %vm551, %v2668, %v2676
    %v2718 = vsel %vm551, %v2670, %v2678
    %v2719 = vsel %vm551, %v2656, %v2664
    %v2720 = vsel %vm551, %v2658, %v2666
    %v2721 = vsel %vm551, %v2660, %v2668
    %v2722 = vsel %vm551, %v2662, %v2670
    %v2723 = vsel %vm551, %v2696, %v2656
    %v2724 = vsel %vm551, %v2698, %v2658
    %v2725 = vsel %vm551, %v2700, %v2660
    %v2726 = vsel %vm551, %v2702, %v2662
    %2727 = vst [vmem:[#allocation2 + $0xc0] sm:$0xff] %v2723
    %2728 = vst [vmem:[#allocation2 + $0xc8] sm:$0xff] %v2719
    %2729 = vst [vmem:[#allocation2 + $0xd0] sm:$0xff] %v2715
    %2730 = vst [vmem:[#allocation2 + $0xd8] sm:$0xff] %v2711
    %2731 = vst [vmem:[#allocation2 + $0xe0] sm:$0xff] %v2707
    %2732 = vst [vmem:[#allocation2 + $0xe8] sm:$0xff] %v2703
    %2733 = vst [vmem:[#allocation2 + $0xf0] sm:$0xff] %v2724
    %2734 = vst [vmem:[#allocation2 + $0xf8] sm:$0xff] %v2720
    %2735 = vst [vmem:[#allocation2 + $0x100] sm:$0xff] %v2716
    %2736 = vst [vmem:[#allocation2 + $0x108] sm:$0xff] %v2712
    %2737 = vst [vmem:[#allocation2 + $0x110] sm:$0xff] %v2708
    %2738 = vst [vmem:[#allocation2 + $0x118] sm:$0xff] %v2704
    %2739 = vst [vmem:[#allocation2 + $0x120] sm:$0xff] %v2725
    %2740 = vst [vmem:[#allocation2 + $0x128] sm:$0xff] %v2721
    %2741 = vst [vmem:[#allocation2 + $0x130] sm:$0xff] %v2717
    %2742 = vst [vmem:[#allocation2 + $0x138] sm:$0xff] %v2713
    %2743 = vst [vmem:[#allocation2 + $0x140] sm:$0xff] %v2709
    %2744 = vst [vmem:[#allocation2 + $0x148] sm:$0xff] %v2705
    %2745 = vst [vmem:[#allocation2 + $0x150] sm:$0xff] %v2726
    %2746 = vst [vmem:[#allocation2 + $0x158] sm:$0xff] %v2722
    %2747 = vst [vmem:[#allocation2 + $0x160] sm:$0xff] %v2718
    %2748 = vst [vmem:[#allocation2 + $0x168] sm:$0xff] %v2714
    %2749 = vst [vmem:[#allocation2 + $0x170] sm:$0xff] %v2710
    %2750 = vst [vmem:[#allocation2 + $0x178] sm:$0xff] %v2706
    %2751 = vrot.lane.b32.xlu0 %v2535, 17
    %v2752 = vpop.permute.xlu0 %2751
    %2753 = vrot.lane.b32.xlu0 %v2541, 17
    %v2754 = vpop.permute.xlu0 %2753
    %2755 = vrot.lane.b32.xlu0 %v2547, 17
    %v2756 = vpop.permute.xlu0 %2755
    %2757 = vrot.lane.b32.xlu0 %v2553, 17
    %v2758 = vpop.permute.xlu0 %2757
    %2759 = vrot.lane.b32.xlu0 %v2536, 17
    %v2760 = vpop.permute.xlu0 %2759
    %2761 = vrot.lane.b32.xlu0 %v2542, 17
    %v2762 = vpop.permute.xlu0 %2761
    %2763 = vrot.lane.b32.xlu0 %v2548, 17
    %v2764 = vpop.permute.xlu0 %2763
    %2765 = vrot.lane.b32.xlu0 %v2554, 17
    %v2766 = vpop.permute.xlu0 %2765
    %2767 = vrot.lane.b32.xlu0 %v2537, 17
    %v2768 = vpop.permute.xlu0 %2767
    %2769 = vrot.lane.b32.xlu0 %v2543, 17
    %v2770 = vpop.permute.xlu0 %2769
    %2771 = vrot.lane.b32.xlu0 %v2549, 17
    %v2772 = vpop.permute.xlu0 %2771
    %2773 = vrot.lane.b32.xlu0 %v2555, 17
    %v2774 = vpop.permute.xlu0 %2773
    %2775 = vrot.lane.b32.xlu0 %v2538, 17
    %v2776 = vpop.permute.xlu0 %2775
    %2777 = vrot.lane.b32.xlu0 %v2544, 17
    %v2778 = vpop.permute.xlu0 %2777
    %2779 = vrot.lane.b32.xlu0 %v2550, 17
    %v2780 = vpop.permute.xlu0 %2779
    %2781 = vrot.lane.b32.xlu0 %v2556, 17
    %v2782 = vpop.permute.xlu0 %2781
    %2783 = vrot.lane.b32.xlu0 %v2539, 17
    %v2784 = vpop.permute.xlu0 %2783
    %2785 = vrot.lane.b32.xlu0 %v2545, 17
    %v2786 = vpop.permute.xlu0 %2785
    %2787 = vrot.lane.b32.xlu0 %v2551, 17
    %v2788 = vpop.permute.xlu0 %2787
    %2789 = vrot.lane.b32.xlu0 %v2557, 17
    %v2790 = vpop.permute.xlu0 %2789
    %2791 = vrot.lane.b32.xlu0 %v2540, 17
    %v2792 = vpop.permute.xlu0 %2791
    %2793 = vrot.lane.b32.xlu0 %v2546, 17
    %v2794 = vpop.permute.xlu0 %2793
    %2795 = vrot.lane.b32.xlu0 %v2552, 17
    %v2796 = vpop.permute.xlu0 %2795
    %2797 = vrot.lane.b32.xlu0 %v2558, 17
    %v2798 = vpop.permute.xlu0 %2797
    %v2799 = vsel %vm648, %v2784, %v2792
    %v2800 = vsel %vm648, %v2786, %v2794
    %v2801 = vsel %vm648, %v2788, %v2796
    %v2802 = vsel %vm648, %v2790, %v2798
    %v2803 = vsel %vm648, %v2776, %v2784
    %v2804 = vsel %vm648, %v2778, %v2786
    %v2805 = vsel %vm648, %v2780, %v2788
    %v2806 = vsel %vm648, %v2782, %v2790
    %v2807 = vsel %vm648, %v2768, %v2776
    %v2808 = vsel %vm648, %v2770, %v2778
    %v2809 = vsel %vm648, %v2772, %v2780
    %v2810 = vsel %vm648, %v2774, %v2782
    %v2811 = vsel %vm648, %v2760, %v2768
    %v2812 = vsel %vm648, %v2762, %v2770
    %v2813 = vsel %vm648, %v2764, %v2772
    %v2814 = vsel %vm648, %v2766, %v2774
    %v2815 = vsel %vm648, %v2752, %v2760
    %v2816 = vsel %vm648, %v2754, %v2762
    %v2817 = vsel %vm648, %v2756, %v2764
    %v2818 = vsel %vm648, %v2758, %v2766
    %v2819 = vsel %vm648, %v2792, %v2752
    %v2820 = vsel %vm648, %v2794, %v2754
    %v2821 = vsel %vm648, %v2796, %v2756
    %v2822 = vsel %vm648, %v2798, %v2758
    %2823 = vst [vmem:[#allocation2 + $0x180] sm:$0xff] %v2819
    %2824 = vst [vmem:[#allocation2 + $0x188] sm:$0xff] %v2815
    %2825 = vst [vmem:[#allocation2 + $0x190] sm:$0xff] %v2811
    %2826 = vst [vmem:[#allocation2 + $0x198] sm:$0xff] %v2807
    %2827 = vst [vmem:[#allocation2 + $0x1a0] sm:$0xff] %v2803
    %2828 = vst [vmem:[#allocation2 + $0x1a8] sm:$0xff] %v2799
    %2829 = vst [vmem:[#allocation2 + $0x1b0] sm:$0xff] %v2820
    %2830 = vst [vmem:[#allocation2 + $0x1b8] sm:$0xff] %v2816
    %2831 = vst [vmem:[#allocation2 + $0x1c0] sm:$0xff] %v2812
    %2832 = vst [vmem:[#allocation2 + $0x1c8] sm:$0xff] %v2808
    %2833 = vst [vmem:[#allocation2 + $0x1d0] sm:$0xff] %v2804
    %2834 = vst [vmem:[#allocation2 + $0x1d8] sm:$0xff] %v2800
    %2835 = vst [vmem:[#allocation2 + $0x1e0] sm:$0xff] %v2821
    %2836 = vst [vmem:[#allocation2 + $0x1e8] sm:$0xff] %v2817
    %2837 = vst [vmem:[#allocation2 + $0x1f0] sm:$0xff] %v2813
    %2838 = vst [vmem:[#allocation2 + $0x1f8] sm:$0xff] %v2809
    %2839 = vst [vmem:[#allocation2 + $0x200] sm:$0xff] %v2805
    %2840 = vst [vmem:[#allocation2 + $0x208] sm:$0xff] %v2801
    %2841 = vst [vmem:[#allocation2 + $0x210] sm:$0xff] %v2822
    %2842 = vst [vmem:[#allocation2 + $0x218] sm:$0xff] %v2818
    %2843 = vst [vmem:[#allocation2 + $0x220] sm:$0xff] %v2814
    %2844 = vst [vmem:[#allocation2 + $0x228] sm:$0xff] %v2810
    %2845 = vst [vmem:[#allocation2 + $0x230] sm:$0xff] %v2806
    %2846 = vst [vmem:[#allocation2 + $0x238] sm:$0xff] %v2802
    %2847 = vrot.lane.b32.xlu0 %v2535, 1
    %v2848 = vpop.permute.xlu0 %2847
    %2849 = vrot.lane.b32.xlu0 %v2541, 1
    %v2850 = vpop.permute.xlu0 %2849
    %2851 = vrot.lane.b32.xlu0 %v2547, 1
    %v2852 = vpop.permute.xlu0 %2851
    %2853 = vrot.lane.b32.xlu0 %v2553, 1
    %v2854 = vpop.permute.xlu0 %2853
    %2855 = vrot.lane.b32.xlu0 %v2536, 1
    %v2856 = vpop.permute.xlu0 %2855
    %2857 = vrot.lane.b32.xlu0 %v2542, 1
    %v2858 = vpop.permute.xlu0 %2857
    %2859 = vrot.lane.b32.xlu0 %v2548, 1
    %v2860 = vpop.permute.xlu0 %2859
    %2861 = vrot.lane.b32.xlu0 %v2554, 1
    %v2862 = vpop.permute.xlu0 %2861
    %2863 = vrot.lane.b32.xlu0 %v2537, 1
    %v2864 = vpop.permute.xlu0 %2863
    %2865 = vrot.lane.b32.xlu0 %v2543, 1
    %v2866 = vpop.permute.xlu0 %2865
    %2867 = vrot.lane.b32.xlu0 %v2549, 1
    %v2868 = vpop.permute.xlu0 %2867
    %2869 = vrot.lane.b32.xlu0 %v2555, 1
    %v2870 = vpop.permute.xlu0 %2869
    %2871 = vrot.lane.b32.xlu0 %v2538, 1
    %v2872 = vpop.permute.xlu0 %2871
    %2873 = vrot.lane.b32.xlu0 %v2544, 1
    %v2874 = vpop.permute.xlu0 %2873
    %2875 = vrot.lane.b32.xlu0 %v2550, 1
    %v2876 = vpop.permute.xlu0 %2875
    %2877 = vrot.lane.b32.xlu0 %v2556, 1
    %v2878 = vpop.permute.xlu0 %2877
    %2879 = vrot.lane.b32.xlu0 %v2539, 1
    %v2880 = vpop.permute.xlu0 %2879
    %2881 = vrot.lane.b32.xlu0 %v2545, 1
    %v2882 = vpop.permute.xlu0 %2881
    %2883 = vrot.lane.b32.xlu0 %v2551, 1
    %v2884 = vpop.permute.xlu0 %2883
    %2885 = vrot.lane.b32.xlu0 %v2557, 1
    %v2886 = vpop.permute.xlu0 %2885
    %2887 = vrot.lane.b32.xlu0 %v2540, 1
    %v2888 = vpop.permute.xlu0 %2887
    %2889 = vrot.lane.b32.xlu0 %v2546, 1
    %v2890 = vpop.permute.xlu0 %2889
    %2891 = vrot.lane.b32.xlu0 %v2552, 1
    %v2892 = vpop.permute.xlu0 %2891
    %2893 = vrot.lane.b32.xlu0 %v2558, 1
    %v2894 = vpop.permute.xlu0 %2893
    %v2895 = vsel %vm745, %v2880, %v2888
    %v2896 = vsel %vm745, %v2882, %v2890
    %v2897 = vsel %vm745, %v2884, %v2892
    %v2898 = vsel %vm745, %v2886, %v2894
    %v2899 = vsel %vm745, %v2872, %v2880
    %v2900 = vsel %vm745, %v2874, %v2882
    %v2901 = vsel %vm745, %v2876, %v2884
    %v2902 = vsel %vm745, %v2878, %v2886
    %v2903 = vsel %vm745, %v2864, %v2872
    %v2904 = vsel %vm745, %v2866, %v2874
    %v2905 = vsel %vm745, %v2868, %v2876
    %v2906 = vsel %vm745, %v2870, %v2878
    %v2907 = vsel %vm745, %v2856, %v2864
    %v2908 = vsel %vm745, %v2858, %v2866
    %v2909 = vsel %vm745, %v2860, %v2868
    %v2910 = vsel %vm745, %v2862, %v2870
    %v2911 = vsel %vm745, %v2848, %v2856
    %v2912 = vsel %vm745, %v2850, %v2858
    %v2913 = vsel %vm745, %v2852, %v2860
    %v2914 = vsel %vm745, %v2854, %v2862
    %v2915 = vsel %vm745, %v2888, %v2848
    %v2916 = vsel %vm745, %v2890, %v2850
    %v2917 = vsel %vm745, %v2892, %v2852
    %v2918 = vsel %vm745, %v2894, %v2854
    %2919 = vst [vmem:[#allocation2 + $0x240] sm:$0xff] %v2915
    %2920 = vst [vmem:[#allocation2 + $0x248] sm:$0xff] %v2911
    %2921 = vst [vmem:[#allocation2 + $0x250] sm:$0xff] %v2907
    %2922 = vst [vmem:[#allocation2 + $0x258] sm:$0xff] %v2903
    %2923 = vst [vmem:[#allocation2 + $0x260] sm:$0xff] %v2899
    %2924 = vst [vmem:[#allocation2 + $0x268] sm:$0xff] %v2895
    %2925 = vst [vmem:[#allocation2 + $0x270] sm:$0xff] %v2916
    %2926 = vst [vmem:[#allocation2 + $0x278] sm:$0xff] %v2912
    %2927 = vst [vmem:[#allocation2 + $0x280] sm:$0xff] %v2908
    %2928 = vst [vmem:[#allocation2 + $0x288] sm:$0xff] %v2904
    %2929 = vst [vmem:[#allocation2 + $0x290] sm:$0xff] %v2900
    %2930 = vst [vmem:[#allocation2 + $0x298] sm:$0xff] %v2896
    %2931 = vst [vmem:[#allocation2 + $0x2a0] sm:$0xff] %v2917
    %2932 = vst [vmem:[#allocation2 + $0x2a8] sm:$0xff] %v2913
    %2933 = vst [vmem:[#allocation2 + $0x2b0] sm:$0xff] %v2909
    %2934 = vst [vmem:[#allocation2 + $0x2b8] sm:$0xff] %v2905
    %2935 = vst [vmem:[#allocation2 + $0x2c0] sm:$0xff] %v2901
    %2936 = vst [vmem:[#allocation2 + $0x2c8] sm:$0xff] %v2897
    %2937 = vst [vmem:[#allocation2 + $0x2d0] sm:$0xff] %v2918
    %2938 = vst [vmem:[#allocation2 + $0x2d8] sm:$0xff] %v2914
    %2939 = vst [vmem:[#allocation2 + $0x2e0] sm:$0xff] %v2910
    %2940 = vst [vmem:[#allocation2 + $0x2e8] sm:$0xff] %v2906
    %2941 = vst [vmem:[#allocation2 + $0x2f0] sm:$0xff] %v2902
    %2942 = vst [vmem:[#allocation2 + $0x2f8] sm:$0xff] %v2898
    %2943 = vst [vmem:[#allocation2 + $0x300] sm:$0xff] %v2535
    %2944 = vst [vmem:[#allocation2 + $0x308] sm:$0xff] %v2536
    %2945 = vst [vmem:[#allocation2 + $0x310] sm:$0xff] %v2537
    %2946 = vst [vmem:[#allocation2 + $0x318] sm:$0xff] %v2538
    %2947 = vst [vmem:[#allocation2 + $0x320] sm:$0xff] %v2539
    %2948 = vst [vmem:[#allocation2 + $0x328] sm:$0xff] %v2540
    %2949 = vst [vmem:[#allocation2 + $0x330] sm:$0xff] %v2541
    %2950 = vst [vmem:[#allocation2 + $0x338] sm:$0xff] %v2542
    %2951 = vst [vmem:[#allocation2 + $0x340] sm:$0xff] %v2543
    %2952 = vst [vmem:[#allocation2 + $0x348] sm:$0xff] %v2544
    %2953 = vst [vmem:[#allocation2 + $0x350] sm:$0xff] %v2545
    %2954 = vst [vmem:[#allocation2 + $0x358] sm:$0xff] %v2546
    %2955 = vst [vmem:[#allocation2 + $0x360] sm:$0xff] %v2547
    %2956 = vst [vmem:[#allocation2 + $0x368] sm:$0xff] %v2548
    %2957 = vst [vmem:[#allocation2 + $0x370] sm:$0xff] %v2549
    %2958 = vst [vmem:[#allocation2 + $0x378] sm:$0xff] %v2550
    %2959 = vst [vmem:[#allocation2 + $0x380] sm:$0xff] %v2551
    %2960 = vst [vmem:[#allocation2 + $0x388] sm:$0xff] %v2552
    %2961 = vst [vmem:[#allocation2 + $0x390] sm:$0xff] %v2553
    %2962 = vst [vmem:[#allocation2 + $0x398] sm:$0xff] %v2554
    %2963 = vst [vmem:[#allocation2 + $0x3a0] sm:$0xff] %v2555
    %2964 = vst [vmem:[#allocation2 + $0x3a8] sm:$0xff] %v2556
    %2965 = vst [vmem:[#allocation2 + $0x3b0] sm:$0xff] %v2557
    %2966 = vst [vmem:[#allocation2 + $0x3b8] sm:$0xff] %v2558
    %2967 = vrot.lane.b32.xlu0 %v2535, 127
    %v2968 = vpop.permute.xlu0 %2967
    %2969 = vrot.lane.b32.xlu0 %v2541, 127
    %v2970 = vpop.permute.xlu0 %2969
    %2971 = vrot.lane.b32.xlu0 %v2547, 127
    %v2972 = vpop.permute.xlu0 %2971
    %2973 = vrot.lane.b32.xlu0 %v2553, 127
    %v2974 = vpop.permute.xlu0 %2973
    %2975 = vrot.lane.b32.xlu0 %v2536, 127
    %v2976 = vpop.permute.xlu0 %2975
    %2977 = vrot.lane.b32.xlu0 %v2542, 127
    %v2978 = vpop.permute.xlu0 %2977
    %2979 = vrot.lane.b32.xlu0 %v2548, 127
    %v2980 = vpop.permute.xlu0 %2979
    %2981 = vrot.lane.b32.xlu0 %v2554, 127
    %v2982 = vpop.permute.xlu0 %2981
    %2983 = vrot.lane.b32.xlu0 %v2537, 127
    %v2984 = vpop.permute.xlu0 %2983
    %2985 = vrot.lane.b32.xlu0 %v2543, 127
    %v2986 = vpop.permute.xlu0 %2985
    %2987 = vrot.lane.b32.xlu0 %v2549, 127
    %v2988 = vpop.permute.xlu0 %2987
    %2989 = vrot.lane.b32.xlu0 %v2555, 127
    %v2990 = vpop.permute.xlu0 %2989
    %2991 = vrot.lane.b32.xlu0 %v2538, 127
    %v2992 = vpop.permute.xlu0 %2991
    %2993 = vrot.lane.b32.xlu0 %v2544, 127
    %v2994 = vpop.permute.xlu0 %2993
    %2995 = vrot.lane.b32.xlu0 %v2550, 127
    %v2996 = vpop.permute.xlu0 %2995
    %2997 = vrot.lane.b32.xlu0 %v2556, 127
    %v2998 = vpop.permute.xlu0 %2997
    %2999 = vrot.lane.b32.xlu0 %v2539, 127
    %v3000 = vpop.permute.xlu0 %2999
    %3001 = vrot.lane.b32.xlu0 %v2545, 127
    %v3002 = vpop.permute.xlu0 %3001
    %3003 = vrot.lane.b32.xlu0 %v2551, 127
    %v3004 = vpop.permute.xlu0 %3003
    %3005 = vrot.lane.b32.xlu0 %v2557, 127
    %v3006 = vpop.permute.xlu0 %3005
    %3007 = vrot.lane.b32.xlu0 %v2540, 127
    %v3008 = vpop.permute.xlu0 %3007
    %3009 = vrot.lane.b32.xlu0 %v2546, 127
    %v3010 = vpop.permute.xlu0 %3009
    %3011 = vrot.lane.b32.xlu0 %v2552, 127
    %v3012 = vpop.permute.xlu0 %3011
    %3013 = vrot.lane.b32.xlu0 %v2558, 127
    %v3014 = vpop.permute.xlu0 %3013
    %v3015 = vsel %vm866, %v3000, %v3008
    %v3016 = vsel %vm866, %v3002, %v3010
    %v3017 = vsel %vm866, %v3004, %v3012
    %v3018 = vsel %vm866, %v3006, %v3014
    %v3019 = vsel %vm866, %v2992, %v3000
    %v3020 = vsel %vm866, %v2994, %v3002
    %v3021 = vsel %vm866, %v2996, %v3004
    %v3022 = vsel %vm866, %v2998, %v3006
    %v3023 = vsel %vm866, %v2984, %v2992
    %v3024 = vsel %vm866, %v2986, %v2994
    %v3025 = vsel %vm866, %v2988, %v2996
    %v3026 = vsel %vm866, %v2990, %v2998
    %v3027 = vsel %vm866, %v2976, %v2984
    %v3028 = vsel %vm866, %v2978, %v2986
    %v3029 = vsel %vm866, %v2980, %v2988
    %v3030 = vsel %vm866, %v2982, %v2990
    %v3031 = vsel %vm866, %v2968, %v2976
    %v3032 = vsel %vm866, %v2970, %v2978
    %v3033 = vsel %vm866, %v2972, %v2980
    %v3034 = vsel %vm866, %v2974, %v2982
    %v3035 = vsel %vm866, %v3008, %v2968
    %v3036 = vsel %vm866, %v3010, %v2970
    %v3037 = vsel %vm866, %v3012, %v2972
    %v3038 = vsel %vm866, %v3014, %v2974
    %3039 = vst [vmem:[#allocation2 + $0x3c0] sm:$0xff] %v3031
    %3040 = vst [vmem:[#allocation2 + $0x3c8] sm:$0xff] %v3027
    %3041 = vst [vmem:[#allocation2 + $0x3d0] sm:$0xff] %v3023
    %3042 = vst [vmem:[#allocation2 + $0x3d8] sm:$0xff] %v3019
    %3043 = vst [vmem:[#allocation2 + $0x3e0] sm:$0xff] %v3015
    %3044 = vst [vmem:[#allocation2 + $0x3e8] sm:$0xff] %v3035
    %3045 = vst [vmem:[#allocation2 + $0x3f0] sm:$0xff] %v3032
    %3046 = vst [vmem:[#allocation2 + $0x3f8] sm:$0xff] %v3028
    %3047 = vst [vmem:[#allocation2 + $0x400] sm:$0xff] %v3024
    %3048 = vst [vmem:[#allocation2 + $0x408] sm:$0xff] %v3020
    %3049 = vst [vmem:[#allocation2 + $0x410] sm:$0xff] %v3016
    %3050 = vst [vmem:[#allocation2 + $0x418] sm:$0xff] %v3036
    %3051 = vst [vmem:[#allocation2 + $0x420] sm:$0xff] %v3033
    %3052 = vst [vmem:[#allocation2 + $0x428] sm:$0xff] %v3029
    %3053 = vst [vmem:[#allocation2 + $0x430] sm:$0xff] %v3025
    %3054 = vst [vmem:[#allocation2 + $0x438] sm:$0xff] %v3021
    %3055 = vst [vmem:[#allocation2 + $0x440] sm:$0xff] %v3017
    %3056 = vst [vmem:[#allocation2 + $0x448] sm:$0xff] %v3037
    %3057 = vst [vmem:[#allocation2 + $0x450] sm:$0xff] %v3034
    %3058 = vst [vmem:[#allocation2 + $0x458] sm:$0xff] %v3030
    %3059 = vst [vmem:[#allocation2 + $0x460] sm:$0xff] %v3026
    %3060 = vst [vmem:[#allocation2 + $0x468] sm:$0xff] %v3022
    %3061 = vst [vmem:[#allocation2 + $0x470] sm:$0xff] %v3018
    %3062 = vst [vmem:[#allocation2 + $0x478] sm:$0xff] %v3038
    %3063 = vrot.lane.b32.xlu0 %v2535, 111
    %v3064 = vpop.permute.xlu0 %3063
    %3065 = vrot.lane.b32.xlu0 %v2541, 111
    %v3066 = vpop.permute.xlu0 %3065
    %3067 = vrot.lane.b32.xlu0 %v2547, 111
    %v3068 = vpop.permute.xlu0 %3067
    %3069 = vrot.lane.b32.xlu0 %v2553, 111
    %v3070 = vpop.permute.xlu0 %3069
    %3071 = vrot.lane.b32.xlu0 %v2536, 111
    %v3072 = vpop.permute.xlu0 %3071
    %3073 = vrot.lane.b32.xlu0 %v2542, 111
    %v3074 = vpop.permute.xlu0 %3073
    %3075 = vrot.lane.b32.xlu0 %v2548, 111
    %v3076 = vpop.permute.xlu0 %3075
    %3077 = vrot.lane.b32.xlu0 %v2554, 111
    %v3078 = vpop.permute.xlu0 %3077
    %3079 = vrot.lane.b32.xlu0 %v2537, 111
    %v3080 = vpop.permute.xlu0 %3079
    %3081 = vrot.lane.b32.xlu0 %v2543, 111
    %v3082 = vpop.permute.xlu0 %3081
    %3083 = vrot.lane.b32.xlu0 %v2549, 111
    %v3084 = vpop.permute.xlu0 %3083
    %3085 = vrot.lane.b32.xlu0 %v2555, 111
    %v3086 = vpop.permute.xlu0 %3085
    %3087 = vrot.lane.b32.xlu0 %v2538, 111
    %v3088 = vpop.permute.xlu0 %3087
    %3089 = vrot.lane.b32.xlu0 %v2544, 111
    %v3090 = vpop.permute.xlu0 %3089
    %3091 = vrot.lane.b32.xlu0 %v2550, 111
    %v3092 = vpop.permute.xlu0 %3091
    %3093 = vrot.lane.b32.xlu0 %v2556, 111
    %v3094 = vpop.permute.xlu0 %3093
    %3095 = vrot.lane.b32.xlu0 %v2539, 111
    %v3096 = vpop.permute.xlu0 %3095
    %3097 = vrot.lane.b32.xlu0 %v2545, 111
    %v3098 = vpop.permute.xlu0 %3097
    %3099 = vrot.lane.b32.xlu0 %v2551, 111
    %v3100 = vpop.permute.xlu0 %3099
    %3101 = vrot.lane.b32.xlu0 %v2557, 111
    %v3102 = vpop.permute.xlu0 %3101
    %3103 = vrot.lane.b32.xlu0 %v2540, 111
    %v3104 = vpop.permute.xlu0 %3103
    %3105 = vrot.lane.b32.xlu0 %v2546, 111
    %v3106 = vpop.permute.xlu0 %3105
    %3107 = vrot.lane.b32.xlu0 %v2552, 111
    %v3108 = vpop.permute.xlu0 %3107
    %3109 = vrot.lane.b32.xlu0 %v2558, 111
    %v3110 = vpop.permute.xlu0 %3109
    %v3111 = vsel %vm963, %v3096, %v3104
    %v3112 = vsel %vm963, %v3098, %v3106
    %v3113 = vsel %vm963, %v3100, %v3108
    %v3114 = vsel %vm963, %v3102, %v3110
    %v3115 = vsel %vm963, %v3088, %v3096
    %v3116 = vsel %vm963, %v3090, %v3098
    %v3117 = vsel %vm963, %v3092, %v3100
    %v3118 = vsel %vm963, %v3094, %v3102
    %v3119 = vsel %vm963, %v3080, %v3088
    %v3120 = vsel %vm963, %v3082, %v3090
    %v3121 = vsel %vm963, %v3084, %v3092
    %v3122 = vsel %vm963, %v3086, %v3094
    %v3123 = vsel %vm963, %v3072, %v3080
    %v3124 = vsel %vm963, %v3074, %v3082
    %v3125 = vsel %vm963, %v3076, %v3084
    %v3126 = vsel %vm963, %v3078, %v3086
    %v3127 = vsel %vm963, %v3064, %v3072
    %v3128 = vsel %vm963, %v3066, %v3074
    %v3129 = vsel %vm963, %v3068, %v3076
    %v3130 = vsel %vm963, %v3070, %v3078
    %v3131 = vsel %vm963, %v3104, %v3064
    %v3132 = vsel %vm963, %v3106, %v3066
    %v3133 = vsel %vm963, %v3108, %v3068
    %v3134 = vsel %vm963, %v3110, %v3070
    %3135 = vst [vmem:[#allocation2 + $0x480] sm:$0xff] %v3127
    %3136 = vst [vmem:[#allocation2 + $0x488] sm:$0xff] %v3123
    %3137 = vst [vmem:[#allocation2 + $0x490] sm:$0xff] %v3119
    %3138 = vst [vmem:[#allocation2 + $0x498] sm:$0xff] %v3115
    %3139 = vst [vmem:[#allocation2 + $0x4a0] sm:$0xff] %v3111
    %3140 = vst [vmem:[#allocation2 + $0x4a8] sm:$0xff] %v3131
    %3141 = vst [vmem:[#allocation2 + $0x4b0] sm:$0xff] %v3128
    %3142 = vst [vmem:[#allocation2 + $0x4b8] sm:$0xff] %v3124
    %3143 = vst [vmem:[#allocation2 + $0x4c0] sm:$0xff] %v3120
    %3144 = vst [vmem:[#allocation2 + $0x4c8] sm:$0xff] %v3116
    %3145 = vst [vmem:[#allocation2 + $0x4d0] sm:$0xff] %v3112
    %3146 = vst [vmem:[#allocation2 + $0x4d8] sm:$0xff] %v3132
    %3147 = vst [vmem:[#allocation2 + $0x4e0] sm:$0xff] %v3129
    %3148 = vst [vmem:[#allocation2 + $0x4e8] sm:$0xff] %v3125
    %3149 = vst [vmem:[#allocation2 + $0x4f0] sm:$0xff] %v3121
    %3150 = vst [vmem:[#allocation2 + $0x4f8] sm:$0xff] %v3117
    %3151 = vst [vmem:[#allocation2 + $0x500] sm:$0xff] %v3113
    %3152 = vst [vmem:[#allocation2 + $0x508] sm:$0xff] %v3133
    %3153 = vst [vmem:[#allocation2 + $0x510] sm:$0xff] %v3130
    %3154 = vst [vmem:[#allocation2 + $0x518] sm:$0xff] %v3126
    %3155 = vst [vmem:[#allocation2 + $0x520] sm:$0xff] %v3122
    %3156 = vst [vmem:[#allocation2 + $0x528] sm:$0xff] %v3118
    %3157 = vst [vmem:[#allocation2 + $0x530] sm:$0xff] %v3114
    %3158 = vst [vmem:[#allocation2 + $0x538] sm:$0xff] %v3134
    %3159 = vrot.lane.b32.xlu0 %v2535, 110
    %v3160 = vpop.permute.xlu0 %3159
    %3161 = vrot.lane.b32.xlu0 %v2541, 110
    %v3162 = vpop.permute.xlu0 %3161
    %3163 = vrot.lane.b32.xlu0 %v2547, 110
    %v3164 = vpop.permute.xlu0 %3163
    %3165 = vrot.lane.b32.xlu0 %v2553, 110
    %v3166 = vpop.permute.xlu0 %3165
    %3167 = vrot.lane.b32.xlu0 %v2536, 110
    %v3168 = vpop.permute.xlu0 %3167
    %3169 = vrot.lane.b32.xlu0 %v2542, 110
    %v3170 = vpop.permute.xlu0 %3169
    %3171 = vrot.lane.b32.xlu0 %v2548, 110
    %v3172 = vpop.permute.xlu0 %3171
    %3173 = vrot.lane.b32.xlu0 %v2554, 110
    %v3174 = vpop.permute.xlu0 %3173
    %3175 = vrot.lane.b32.xlu0 %v2537, 110
    %v3176 = vpop.permute.xlu0 %3175
    %3177 = vrot.lane.b32.xlu0 %v2543, 110
    %v3178 = vpop.permute.xlu0 %3177
    %3179 = vrot.lane.b32.xlu0 %v2549, 110
    %v3180 = vpop.permute.xlu0 %3179
    %3181 = vrot.lane.b32.xlu0 %v2555, 110
    %v3182 = vpop.permute.xlu0 %3181
    %3183 = vrot.lane.b32.xlu0 %v2538, 110
    %v3184 = vpop.permute.xlu0 %3183
    %3185 = vrot.lane.b32.xlu0 %v2544, 110
    %v3186 = vpop.permute.xlu0 %3185
    %3187 = vrot.lane.b32.xlu0 %v2550, 110
    %v3188 = vpop.permute.xlu0 %3187
    %3189 = vrot.lane.b32.xlu0 %v2556, 110
    %v3190 = vpop.permute.xlu0 %3189
    %3191 = vrot.lane.b32.xlu0 %v2539, 110
    %v3192 = vpop.permute.xlu0 %3191
    %3193 = vrot.lane.b32.xlu0 %v2545, 110
    %v3194 = vpop.permute.xlu0 %3193
    %3195 = vrot.lane.b32.xlu0 %v2551, 110
    %v3196 = vpop.permute.xlu0 %3195
    %3197 = vrot.lane.b32.xlu0 %v2557, 110
    %v3198 = vpop.permute.xlu0 %3197
    %3199 = vrot.lane.b32.xlu0 %v2540, 110
    %v3200 = vpop.permute.xlu0 %3199
    %3201 = vrot.lane.b32.xlu0 %v2546, 110
    %v3202 = vpop.permute.xlu0 %3201
    %3203 = vrot.lane.b32.xlu0 %v2552, 110
    %v3204 = vpop.permute.xlu0 %3203
    %3205 = vrot.lane.b32.xlu0 %v2558, 110
    %v3206 = vpop.permute.xlu0 %3205
    %v3207 = vsel %vm1060, %v3192, %v3200
    %v3208 = vsel %vm1060, %v3194, %v3202
    %v3209 = vsel %vm1060, %v3196, %v3204
    %v3210 = vsel %vm1060, %v3198, %v3206
    %v3211 = vsel %vm1060, %v3184, %v3192
    %v3212 = vsel %vm1060, %v3186, %v3194
    %v3213 = vsel %vm1060, %v3188, %v3196
    %v3214 = vsel %vm1060, %v3190, %v3198
    %v3215 = vsel %vm1060, %v3176, %v3184
    %v3216 = vsel %vm1060, %v3178, %v3186
    %v3217 = vsel %vm1060, %v3180, %v3188
    %v3218 = vsel %vm1060, %v3182, %v3190
    %v3219 = vsel %vm1060, %v3168, %v3176
    %v3220 = vsel %vm1060, %v3170, %v3178
    %v3221 = vsel %vm1060, %v3172, %v3180
    %v3222 = vsel %vm1060, %v3174, %v3182
    %v3223 = vsel %vm1060, %v3160, %v3168
    %v3224 = vsel %vm1060, %v3162, %v3170
    %v3225 = vsel %vm1060, %v3164, %v3172
    %v3226 = vsel %vm1060, %v3166, %v3174
    %v3227 = vsel %vm1060, %v3200, %v3160
    %v3228 = vsel %vm1060, %v3202, %v3162
    %v3229 = vsel %vm1060, %v3204, %v3164
    %v3230 = vsel %vm1060, %v3206, %v3166
    %3231 = vst [vmem:[#allocation2 + $0x540] sm:$0xff] %v3223
    %3232 = vst [vmem:[#allocation2 + $0x548] sm:$0xff] %v3219
    %3233 = vst [vmem:[#allocation2 + $0x550] sm:$0xff] %v3215
    %3234 = vst [vmem:[#allocation2 + $0x558] sm:$0xff] %v3211
    %3235 = vst [vmem:[#allocation2 + $0x560] sm:$0xff] %v3207
    %3236 = vst [vmem:[#allocation2 + $0x568] sm:$0xff] %v3227
    %3237 = vst [vmem:[#allocation2 + $0x570] sm:$0xff] %v3224
    %3238 = vst [vmem:[#allocation2 + $0x578] sm:$0xff] %v3220
    %3239 = vst [vmem:[#allocation2 + $0x580] sm:$0xff] %v3216
    %3240 = vst [vmem:[#allocation2 + $0x588] sm:$0xff] %v3212
    %3241 = vst [vmem:[#allocation2 + $0x590] sm:$0xff] %v3208
    %3242 = vst [vmem:[#allocation2 + $0x598] sm:$0xff] %v3228
    %3243 = vst [vmem:[#allocation2 + $0x5a0] sm:$0xff] %v3225
    %3244 = vst [vmem:[#allocation2 + $0x5a8] sm:$0xff] %v3221
    %3245 = vst [vmem:[#allocation2 + $0x5b0] sm:$0xff] %v3217
    %3246 = vst [vmem:[#allocation2 + $0x5b8] sm:$0xff] %v3213
    %3247 = vst [vmem:[#allocation2 + $0x5c0] sm:$0xff] %v3209
    %3248 = vst [vmem:[#allocation2 + $0x5c8] sm:$0xff] %v3229
    %3249 = vst [vmem:[#allocation2 + $0x5d0] sm:$0xff] %v3226
    %3250 = vst [vmem:[#allocation2 + $0x5d8] sm:$0xff] %v3222
    %3251 = vst [vmem:[#allocation2 + $0x5e0] sm:$0xff] %v3218
    %3252 = vst [vmem:[#allocation2 + $0x5e8] sm:$0xff] %v3214
    %3253 = vst [vmem:[#allocation2 + $0x5f0] sm:$0xff] %v3210
    %3254 = vst [vmem:[#allocation2 + $0x5f8] sm:$0xff] %v3230
    %3255 = vrot.lane.b32.xlu0 %v2535, 109
    %v3256 = vpop.permute.xlu0 %3255
    %3257 = vrot.lane.b32.xlu0 %v2541, 109
    %v3258 = vpop.permute.xlu0 %3257
    %3259 = vrot.lane.b32.xlu0 %v2547, 109
    %v3260 = vpop.permute.xlu0 %3259
    %3261 = vrot.lane.b32.xlu0 %v2553, 109
    %v3262 = vpop.permute.xlu0 %3261
    %3263 = vrot.lane.b32.xlu0 %v2536, 109
    %v3264 = vpop.permute.xlu0 %3263
    %3265 = vrot.lane.b32.xlu0 %v2542, 109
    %v3266 = vpop.permute.xlu0 %3265
    %3267 = vrot.lane.b32.xlu0 %v2548, 109
    %v3268 = vpop.permute.xlu0 %3267
    %3269 = vrot.lane.b32.xlu0 %v2554, 109
    %v3270 = vpop.permute.xlu0 %3269
    %3271 = vrot.lane.b32.xlu0 %v2537, 109
    %v3272 = vpop.permute.xlu0 %3271
    %3273 = vrot.lane.b32.xlu0 %v2543, 109
    %v3274 = vpop.permute.xlu0 %3273
    %3275 = vrot.lane.b32.xlu0 %v2549, 109
    %v3276 = vpop.permute.xlu0 %3275
    %3277 = vrot.lane.b32.xlu0 %v2555, 109
    %v3278 = vpop.permute.xlu0 %3277
    %3279 = vrot.lane.b32.xlu0 %v2538, 109
    %v3280 = vpop.permute.xlu0 %3279
    %3281 = vrot.lane.b32.xlu0 %v2544, 109
    %v3282 = vpop.permute.xlu0 %3281
    %3283 = vrot.lane.b32.xlu0 %v2550, 109
    %v3284 = vpop.permute.xlu0 %3283
    %3285 = vrot.lane.b32.xlu0 %v2556, 109
    %v3286 = vpop.permute.xlu0 %3285
    %3287 = vrot.lane.b32.xlu0 %v2539, 109
    %v3288 = vpop.permute.xlu0 %3287
    %3289 = vrot.lane.b32.xlu0 %v2545, 109
    %v3290 = vpop.permute.xlu0 %3289
    %3291 = vrot.lane.b32.xlu0 %v2551, 109
    %v3292 = vpop.permute.xlu0 %3291
    %3293 = vrot.lane.b32.xlu0 %v2557, 109
    %v3294 = vpop.permute.xlu0 %3293
    %3295 = vrot.lane.b32.xlu0 %v2540, 109
    %v3296 = vpop.permute.xlu0 %3295
    %3297 = vrot.lane.b32.xlu0 %v2546, 109
    %v3298 = vpop.permute.xlu0 %3297
    %3299 = vrot.lane.b32.xlu0 %v2552, 109
    %v3300 = vpop.permute.xlu0 %3299
    %3301 = vrot.lane.b32.xlu0 %v2558, 109
    %v3302 = vpop.permute.xlu0 %3301
    %v3303 = vsel %vm1157, %v3288, %v3296
    %v3304 = vsel %vm1157, %v3290, %v3298
    %v3305 = vsel %vm1157, %v3292, %v3300
    %v3306 = vsel %vm1157, %v3294, %v3302
    %v3307 = vsel %vm1157, %v3280, %v3288
    %v3308 = vsel %vm1157, %v3282, %v3290
    %v3309 = vsel %vm1157, %v3284, %v3292
    %v3310 = vsel %vm1157, %v3286, %v3294
    %v3311 = vsel %vm1157, %v3272, %v3280
    %v3312 = vsel %vm1157, %v3274, %v3282
    %v3313 = vsel %vm1157, %v3276, %v3284
    %v3314 = vsel %vm1157, %v3278, %v3286
    %v3315 = vsel %vm1157, %v3264, %v3272
    %v3316 = vsel %vm1157, %v3266, %v3274
    %v3317 = vsel %vm1157, %v3268, %v3276
    %v3318 = vsel %vm1157, %v3270, %v3278
    %v3319 = vsel %vm1157, %v3256, %v3264
    %v3320 = vsel %vm1157, %v3258, %v3266
    %v3321 = vsel %vm1157, %v3260, %v3268
    %v3322 = vsel %vm1157, %v3262, %v3270
    %v3323 = vsel %vm1157, %v3296, %v3256
    %v3324 = vsel %vm1157, %v3298, %v3258
    %v3325 = vsel %vm1157, %v3300, %v3260
    %v3326 = vsel %vm1157, %v3302, %v3262
    %3327 = vst [vmem:[#allocation2 + $0x600] sm:$0xff] %v3319
    %3328 = vst [vmem:[#allocation2 + $0x608] sm:$0xff] %v3315
    %3329 = vst [vmem:[#allocation2 + $0x610] sm:$0xff] %v3311
    %3330 = vst [vmem:[#allocation2 + $0x618] sm:$0xff] %v3307
    %3331 = vst [vmem:[#allocation2 + $0x620] sm:$0xff] %v3303
    %3332 = vst [vmem:[#allocation2 + $0x628] sm:$0xff] %v3323
    %3333 = vst [vmem:[#allocation2 + $0x630] sm:$0xff] %v3320
    %3334 = vst [vmem:[#allocation2 + $0x638] sm:$0xff] %v3316
    %3335 = vst [vmem:[#allocation2 + $0x640] sm:$0xff] %v3312
    %3336 = vst [vmem:[#allocation2 + $0x648] sm:$0xff] %v3308
    %3337 = vst [vmem:[#allocation2 + $0x650] sm:$0xff] %v3304
    %3338 = vst [vmem:[#allocation2 + $0x658] sm:$0xff] %v3324
    %3339 = vst [vmem:[#allocation2 + $0x660] sm:$0xff] %v3321
    %3340 = vst [vmem:[#allocation2 + $0x668] sm:$0xff] %v3317
    %3341 = vst [vmem:[#allocation2 + $0x670] sm:$0xff] %v3313
    %3342 = vst [vmem:[#allocation2 + $0x678] sm:$0xff] %v3309
    %3343 = vst [vmem:[#allocation2 + $0x680] sm:$0xff] %v3305
    %3344 = vst [vmem:[#allocation2 + $0x688] sm:$0xff] %v3325
    %3345 = vst [vmem:[#allocation2 + $0x690] sm:$0xff] %v3322
    %3346 = vst [vmem:[#allocation2 + $0x698] sm:$0xff] %v3318
    %3347 = vst [vmem:[#allocation2 + $0x6a0] sm:$0xff] %v3314
    %3348 = vst [vmem:[#allocation2 + $0x6a8] sm:$0xff] %v3310
    %3349 = vst [vmem:[#allocation2 + $0x6b0] sm:$0xff] %v3306
    %3350 = vst [vmem:[#allocation2 + $0x6b8] sm:$0xff] %v3326
    %s3351 = scalar_lea.vmem [#allocation3], 96
    %v3352 = vld [vmem:[%s3351] sm:$0xff]
    %v3353 = vld [vmem:[%s3351 + $0x8] sm:$0xff]
    %v3354 = vld [vmem:[%s3351 + $0x10] sm:$0xff]
    %v3355 = vld [vmem:[%s3351 + $0x18] sm:$0xff]
    %v3356 = vld [vmem:[%s3351 + $0x20] sm:$0xff]
    %v3357 = vld [vmem:[%s3351 + $0x28] sm:$0xff]
    %v3358 = vld [vmem:[%s3351 + $0x30] sm:$0xff]
    %v3359 = vld [vmem:[%s3351 + $0x38] sm:$0xff]
    %v3360 = vld [vmem:[%s3351 + $0x40] sm:$0xff]
    %v3361 = vld [vmem:[%s3351 + $0x48] sm:$0xff]
    %v3362 = vld [vmem:[%s3351 + $0x50] sm:$0xff]
    %v3363 = vld [vmem:[%s3351 + $0x58] sm:$0xff]
    %v3364 = vld [vmem:[#allocation2] sm:$0xff]
    %v3365 = vld [vmem:[#allocation2 + $0x8] sm:$0xff]
    %v3366 = vld [vmem:[#allocation2 + $0x10] sm:$0xff]
    %v3367 = vld [vmem:[#allocation2 + $0x18] sm:$0xff]
    %v3368 = vld [vmem:[#allocation2 + $0x20] sm:$0xff]
    %v3369 = vld [vmem:[#allocation2 + $0x28] sm:$0xff]
    %v3370 = vld [vmem:[#allocation2 + $0x30] sm:$0xff]
    %v3371 = vld [vmem:[#allocation2 + $0x38] sm:$0xff]
    %v3372 = vld [vmem:[#allocation2 + $0x40] sm:$0xff]
    %v3373 = vld [vmem:[#allocation2 + $0x48] sm:$0xff]
    %v3374 = vld [vmem:[#allocation2 + $0x50] sm:$0xff]
    %v3375 = vld [vmem:[#allocation2 + $0x58] sm:$0xff]
    %v3376 = vld [vmem:[#allocation2 + $0x60] sm:$0xff]
    %v3377 = vld [vmem:[#allocation2 + $0x68] sm:$0xff]
    %v3378 = vld [vmem:[#allocation2 + $0x70] sm:$0xff]
    %v3379 = vld [vmem:[#allocation2 + $0x78] sm:$0xff]
    %v3380 = vld [vmem:[#allocation2 + $0x80] sm:$0xff]
    %v3381 = vld [vmem:[#allocation2 + $0x88] sm:$0xff]
    %v3382 = vld [vmem:[#allocation2 + $0x90] sm:$0xff]
    %v3383 = vld [vmem:[#allocation2 + $0x98] sm:$0xff]
    %v3384 = vld [vmem:[#allocation2 + $0xa0] sm:$0xff]
    %v3385 = vld [vmem:[#allocation2 + $0xa8] sm:$0xff]
    %v3386 = vld [vmem:[#allocation2 + $0xb0] sm:$0xff]
    %v3387 = vld [vmem:[#allocation2 + $0xb8] sm:$0xff]
    %v3388 = vld [vmem:[#allocation2 + $0xc0] sm:$0xff]
    %v3389 = vld [vmem:[#allocation2 + $0xc8] sm:$0xff]
    %v3390 = vld [vmem:[#allocation2 + $0xd0] sm:$0xff]
    %v3391 = vld [vmem:[#allocation2 + $0xd8] sm:$0xff]
    %v3392 = vld [vmem:[#allocation2 + $0xe0] sm:$0xff]
    %v3393 = vld [vmem:[#allocation2 + $0xe8] sm:$0xff]
    %v3394 = vld [vmem:[#allocation2 + $0xf0] sm:$0xff]
    %v3395 = vld [vmem:[#allocation2 + $0xf8] sm:$0xff]
    %v3396 = vld [vmem:[#allocation2 + $0x100] sm:$0xff]
    %v3397 = vld [vmem:[#allocation2 + $0x108] sm:$0xff]
    %v3398 = vld [vmem:[#allocation2 + $0x110] sm:$0xff]
    %v3399 = vld [vmem:[#allocation2 + $0x118] sm:$0xff]
    %v3400 = vld [vmem:[#allocation2 + $0x120] sm:$0xff]
    %v3401 = vld [vmem:[#allocation2 + $0x128] sm:$0xff]
    %v3402 = vld [vmem:[#allocation2 + $0x130] sm:$0xff]
    %v3403 = vld [vmem:[#allocation2 + $0x138] sm:$0xff]
    %v3404 = vld [vmem:[#allocation2 + $0x140] sm:$0xff]
    %v3405 = vld [vmem:[#allocation2 + $0x148] sm:$0xff]
    %v3406 = vld [vmem:[#allocation2 + $0x150] sm:$0xff]
    %v3407 = vld [vmem:[#allocation2 + $0x158] sm:$0xff]
    %v3408 = vld [vmem:[#allocation2 + $0x160] sm:$0xff]
    %v3409 = vld [vmem:[#allocation2 + $0x168] sm:$0xff]
    %v3410 = vld [vmem:[#allocation2 + $0x170] sm:$0xff]
    %v3411 = vld [vmem:[#allocation2 + $0x178] sm:$0xff]
    %v3412 = vld [vmem:[#allocation2 + $0x180] sm:$0xff]
    %v3413 = vld [vmem:[#allocation2 + $0x188] sm:$0xff]
    %v3414 = vld [vmem:[#allocation2 + $0x190] sm:$0xff]
    %v3415 = vld [vmem:[#allocation2 + $0x198] sm:$0xff]
    %v3416 = vld [vmem:[#allocation2 + $0x1a0] sm:$0xff]
    %v3417 = vld [vmem:[#allocation2 + $0x1a8] sm:$0xff]
    %v3418 = vld [vmem:[#allocation2 + $0x1b0] sm:$0xff]
    %v3419 = vld [vmem:[#allocation2 + $0x1b8] sm:$0xff]
    %v3420 = vld [vmem:[#allocation2 + $0x1c0] sm:$0xff]
    %v3421 = vld [vmem:[#allocation2 + $0x1c8] sm:$0xff]
    %v3422 = vld [vmem:[#allocation2 + $0x1d0] sm:$0xff]
    %v3423 = vld [vmem:[#allocation2 + $0x1d8] sm:$0xff]
    %v3424 = vld [vmem:[#allocation2 + $0x1e0] sm:$0xff]
    %v3425 = vld [vmem:[#allocation2 + $0x1e8] sm:$0xff]
    %v3426 = vld [vmem:[#allocation2 + $0x1f0] sm:$0xff]
    %v3427 = vld [vmem:[#allocation2 + $0x1f8] sm:$0xff]
    %v3428 = vld [vmem:[#allocation2 + $0x200] sm:$0xff]
    %v3429 = vld [vmem:[#allocation2 + $0x208] sm:$0xff]
    %v3430 = vld [vmem:[#allocation2 + $0x210] sm:$0xff]
    %v3431 = vld [vmem:[#allocation2 + $0x218] sm:$0xff]
    %v3432 = vld [vmem:[#allocation2 + $0x220] sm:$0xff]
    %v3433 = vld [vmem:[#allocation2 + $0x228] sm:$0xff]
    %v3434 = vld [vmem:[#allocation2 + $0x230] sm:$0xff]
    %v3435 = vld [vmem:[#allocation2 + $0x238] sm:$0xff]
    %v3436 = vld [vmem:[#allocation2 + $0x240] sm:$0xff]
    %v3437 = vld [vmem:[#allocation2 + $0x248] sm:$0xff]
    %v3438 = vld [vmem:[#allocation2 + $0x250] sm:$0xff]
    %v3439 = vld [vmem:[#allocation2 + $0x258] sm:$0xff]
    %v3440 = vld [vmem:[#allocation2 + $0x260] sm:$0xff]
    %v3441 = vld [vmem:[#allocation2 + $0x268] sm:$0xff]
    %v3442 = vld [vmem:[#allocation2 + $0x270] sm:$0xff]
    %v3443 = vld [vmem:[#allocation2 + $0x278] sm:$0xff]
    %v3444 = vld [vmem:[#allocation2 + $0x280] sm:$0xff]
    %v3445 = vld [vmem:[#allocation2 + $0x288] sm:$0xff]
    %v3446 = vld [vmem:[#allocation2 + $0x290] sm:$0xff]
    %v3447 = vld [vmem:[#allocation2 + $0x298] sm:$0xff]
    %v3448 = vld [vmem:[#allocation2 + $0x2a0] sm:$0xff]
    %v3449 = vld [vmem:[#allocation2 + $0x2a8] sm:$0xff]
    %v3450 = vld [vmem:[#allocation2 + $0x2b0] sm:$0xff]
    %v3451 = vld [vmem:[#allocation2 + $0x2b8] sm:$0xff]
    %v3452 = vld [vmem:[#allocation2 + $0x2c0] sm:$0xff]
    %v3453 = vld [vmem:[#allocation2 + $0x2c8] sm:$0xff]
    %v3454 = vld [vmem:[#allocation2 + $0x2d0] sm:$0xff]
    %v3455 = vld [vmem:[#allocation2 + $0x2d8] sm:$0xff]
    %v3456 = vld [vmem:[#allocation2 + $0x2e0] sm:$0xff]
    %v3457 = vld [vmem:[#allocation2 + $0x2e8] sm:$0xff]
    %v3458 = vld [vmem:[#allocation2 + $0x2f0] sm:$0xff]
    %v3459 = vld [vmem:[#allocation2 + $0x2f8] sm:$0xff]
    %v3460 = vld [vmem:[#allocation2 + $0x300] sm:$0xff]
    %v3461 = vld [vmem:[#allocation2 + $0x308] sm:$0xff]
    %v3462 = vld [vmem:[#allocation2 + $0x310] sm:$0xff]
    %v3463 = vld [vmem:[#allocation2 + $0x318] sm:$0xff]
    %v3464 = vld [vmem:[#allocation2 + $0x320] sm:$0xff]
    %v3465 = vld [vmem:[#allocation2 + $0x328] sm:$0xff]
    %v3466 = vld [vmem:[#allocation2 + $0x330] sm:$0xff]
    %v3467 = vld [vmem:[#allocation2 + $0x338] sm:$0xff]
    %v3468 = vld [vmem:[#allocation2 + $0x340] sm:$0xff]
    %v3469 = vld [vmem:[#allocation2 + $0x348] sm:$0xff]
    %v3470 = vld [vmem:[#allocation2 + $0x350] sm:$0xff]
    %v3471 = vld [vmem:[#allocation2 + $0x358] sm:$0xff]
    %v3472 = vld [vmem:[#allocation2 + $0x360] sm:$0xff]
    %v3473 = vld [vmem:[#allocation2 + $0x368] sm:$0xff]
    %v3474 = vld [vmem:[#allocation2 + $0x370] sm:$0xff]
    %v3475 = vld [vmem:[#allocation2 + $0x378] sm:$0xff]
    %v3476 = vld [vmem:[#allocation2 + $0x380] sm:$0xff]
    %v3477 = vld [vmem:[#allocation2 + $0x388] sm:$0xff]
    %v3478 = vld [vmem:[#allocation2 + $0x390] sm:$0xff]
    %v3479 = vld [vmem:[#allocation2 + $0x398] sm:$0xff]
    %v3480 = vld [vmem:[#allocation2 + $0x3a0] sm:$0xff]
    %v3481 = vld [vmem:[#allocation2 + $0x3a8] sm:$0xff]
    %v3482 = vld [vmem:[#allocation2 + $0x3b0] sm:$0xff]
    %v3483 = vld [vmem:[#allocation2 + $0x3b8] sm:$0xff]
    %v3484 = vld [vmem:[#allocation2 + $0x3c0] sm:$0xff]
    %v3485 = vld [vmem:[#allocation2 + $0x3c8] sm:$0xff]
    %v3486 = vld [vmem:[#allocation2 + $0x3d0] sm:$0xff]
    %v3487 = vld [vmem:[#allocation2 + $0x3d8] sm:$0xff]
    %v3488 = vld [vmem:[#allocation2 + $0x3e0] sm:$0xff]
    %v3489 = vld [vmem:[#allocation2 + $0x3e8] sm:$0xff]
    %v3490 = vld [vmem:[#allocation2 + $0x3f0] sm:$0xff]
    %v3491 = vld [vmem:[#allocation2 + $0x3f8] sm:$0xff]
    %v3492 = vld [vmem:[#allocation2 + $0x400] sm:$0xff]
    %v3493 = vld [vmem:[#allocation2 + $0x408] sm:$0xff]
    %v3494 = vld [vmem:[#allocation2 + $0x410] sm:$0xff]
    %v3495 = vld [vmem:[#allocation2 + $0x418] sm:$0xff]
    %v3496 = vld [vmem:[#allocation2 + $0x420] sm:$0xff]
    %v3497 = vld [vmem:[#allocation2 + $0x428] sm:$0xff]
    %v3498 = vld [vmem:[#allocation2 + $0x430] sm:$0xff]
    %v3499 = vld [vmem:[#allocation2 + $0x438] sm:$0xff]
    %v3500 = vld [vmem:[#allocation2 + $0x440] sm:$0xff]
    %v3501 = vld [vmem:[#allocation2 + $0x448] sm:$0xff]
    %v3502 = vld [vmem:[#allocation2 + $0x450] sm:$0xff]
    %v3503 = vld [vmem:[#allocation2 + $0x458] sm:$0xff]
    %v3504 = vld [vmem:[#allocation2 + $0x460] sm:$0xff]
    %v3505 = vld [vmem:[#allocation2 + $0x468] sm:$0xff]
    %v3506 = vld [vmem:[#allocation2 + $0x470] sm:$0xff]
    %v3507 = vld [vmem:[#allocation2 + $0x478] sm:$0xff]
    %v3508 = vld [vmem:[#allocation2 + $0x480] sm:$0xff]
    %v3509 = vld [vmem:[#allocation2 + $0x488] sm:$0xff]
    %v3510 = vld [vmem:[#allocation2 + $0x490] sm:$0xff]
    %v3511 = vld [vmem:[#allocation2 + $0x498] sm:$0xff]
    %v3512 = vld [vmem:[#allocation2 + $0x4a0] sm:$0xff]
    %v3513 = vld [vmem:[#allocation2 + $0x4a8] sm:$0xff]
    %v3514 = vld [vmem:[#allocation2 + $0x4b0] sm:$0xff]
    %v3515 = vld [vmem:[#allocation2 + $0x4b8] sm:$0xff]
    %v3516 = vld [vmem:[#allocation2 + $0x4c0] sm:$0xff]
    %v3517 = vld [vmem:[#allocation2 + $0x4c8] sm:$0xff]
    %v3518 = vld [vmem:[#allocation2 + $0x4d0] sm:$0xff]
    %v3519 = vld [vmem:[#allocation2 + $0x4d8] sm:$0xff]
    %v3520 = vld [vmem:[#allocation2 + $0x4e0] sm:$0xff]
    %v3521 = vld [vmem:[#allocation2 + $0x4e8] sm:$0xff]
    %v3522 = vld [vmem:[#allocation2 + $0x4f0] sm:$0xff]
    %v3523 = vld [vmem:[#allocation2 + $0x4f8] sm:$0xff]
    %v3524 = vld [vmem:[#allocation2 + $0x500] sm:$0xff]
    %v3525 = vld [vmem:[#allocation2 + $0x508] sm:$0xff]
    %v3526 = vld [vmem:[#allocation2 + $0x510] sm:$0xff]
    %v3527 = vld [vmem:[#allocation2 + $0x518] sm:$0xff]
    %v3528 = vld [vmem:[#allocation2 + $0x520] sm:$0xff]
    %v3529 = vld [vmem:[#allocation2 + $0x528] sm:$0xff]
    %v3530 = vld [vmem:[#allocation2 + $0x530] sm:$0xff]
    %v3531 = vld [vmem:[#allocation2 + $0x538] sm:$0xff]
    %v3532 = vld [vmem:[#allocation2 + $0x540] sm:$0xff]
    %v3533 = vld [vmem:[#allocation2 + $0x548] sm:$0xff]
    %v3534 = vld [vmem:[#allocation2 + $0x550] sm:$0xff]
    %v3535 = vld [vmem:[#allocation2 + $0x558] sm:$0xff]
    %v3536 = vld [vmem:[#allocation2 + $0x560] sm:$0xff]
    %v3537 = vld [vmem:[#allocation2 + $0x568] sm:$0xff]
    %v3538 = vld [vmem:[#allocation2 + $0x570] sm:$0xff]
    %v3539 = vld [vmem:[#allocation2 + $0x578] sm:$0xff]
    %v3540 = vld [vmem:[#allocation2 + $0x580] sm:$0xff]
    %v3541 = vld [vmem:[#allocation2 + $0x588] sm:$0xff]
    %v3542 = vld [vmem:[#allocation2 + $0x590] sm:$0xff]
    %v3543 = vld [vmem:[#allocation2 + $0x598] sm:$0xff]
    %v3544 = vld [vmem:[#allocation2 + $0x5a0] sm:$0xff]
    %v3545 = vld [vmem:[#allocation2 + $0x5a8] sm:$0xff]
    %v3546 = vld [vmem:[#allocation2 + $0x5b0] sm:$0xff]
    %v3547 = vld [vmem:[#allocation2 + $0x5b8] sm:$0xff]
    %v3548 = vld [vmem:[#allocation2 + $0x5c0] sm:$0xff]
    %v3549 = vld [vmem:[#allocation2 + $0x5c8] sm:$0xff]
    %v3550 = vld [vmem:[#allocation2 + $0x5d0] sm:$0xff]
    %v3551 = vld [vmem:[#allocation2 + $0x5d8] sm:$0xff]
    %v3552 = vld [vmem:[#allocation2 + $0x5e0] sm:$0xff]
    %v3553 = vld [vmem:[#allocation2 + $0x5e8] sm:$0xff]
    %v3554 = vld [vmem:[#allocation2 + $0x5f0] sm:$0xff]
    %v3555 = vld [vmem:[#allocation2 + $0x5f8] sm:$0xff]
    %v3556 = vld [vmem:[#allocation2 + $0x600] sm:$0xff]
    %v3557 = vld [vmem:[#allocation2 + $0x608] sm:$0xff]
    %v3558 = vld [vmem:[#allocation2 + $0x610] sm:$0xff]
    %v3559 = vld [vmem:[#allocation2 + $0x618] sm:$0xff]
    %v3560 = vld [vmem:[#allocation2 + $0x620] sm:$0xff]
    %v3561 = vld [vmem:[#allocation2 + $0x628] sm:$0xff]
    %v3562 = vld [vmem:[#allocation2 + $0x630] sm:$0xff]
    %v3563 = vld [vmem:[#allocation2 + $0x638] sm:$0xff]
    %v3564 = vld [vmem:[#allocation2 + $0x640] sm:$0xff]
    %v3565 = vld [vmem:[#allocation2 + $0x648] sm:$0xff]
    %v3566 = vld [vmem:[#allocation2 + $0x650] sm:$0xff]
    %v3567 = vld [vmem:[#allocation2 + $0x658] sm:$0xff]
    %v3568 = vld [vmem:[#allocation2 + $0x660] sm:$0xff]
    %v3569 = vld [vmem:[#allocation2 + $0x668] sm:$0xff]
    %v3570 = vld [vmem:[#allocation2 + $0x670] sm:$0xff]
    %v3571 = vld [vmem:[#allocation2 + $0x678] sm:$0xff]
    %v3572 = vld [vmem:[#allocation2 + $0x680] sm:$0xff]
    %v3573 = vld [vmem:[#allocation2 + $0x688] sm:$0xff]
    %v3574 = vld [vmem:[#allocation2 + $0x690] sm:$0xff]
    %v3575 = vld [vmem:[#allocation2 + $0x698] sm:$0xff]
    %v3576 = vld [vmem:[#allocation2 + $0x6a0] sm:$0xff]
    %v3577 = vld [vmem:[#allocation2 + $0x6a8] sm:$0xff]
    %v3578 = vld [vmem:[#allocation2 + $0x6b0] sm:$0xff]
    %v3579 = vld [vmem:[#allocation2 + $0x6b8] sm:$0xff]
    %s3580 = scalar_lea.vmem %s5, 32
    %v3581 = vld [vmem:[%s3580] sm:$0xff]
    %v3582 = vld [vmem:[%s3580 + $0x8] sm:$0xff]
    %v3583 = vld [vmem:[%s3580 + $0x10] sm:$0xff]
    %v3584 = vld [vmem:[%s3580 + $0x18] sm:$0xff]
    %3586 = vset.pattern.permute.xlu0 0
    %3587 = vperm.xlu0 %3586, %v3581
    %v3588 = vpop.permute.xlu0 %3587
    %3591 = vset.pattern.permute.xlu0 0
    %3592 = vperm.xlu0 %3591, %v3582
    %v3593 = vpop.permute.xlu0 %3592
    %3596 = vset.pattern.permute.xlu0 0
    %3597 = vperm.xlu0 %3596, %v3583
    %v3598 = vpop.permute.xlu0 %3597
    %3601 = vset.pattern.permute.xlu0 0
    %3602 = vperm.xlu0 %3601, %v3584
    %v3603 = vpop.permute.xlu0 %3602
    %v3606 = vsel %vm1458, %v3354, 0
    %v3609 = vsel %vm1458, %v3357, 0
    %v3612 = vsel %vm1458, %v3360, 0
    %v3615 = vsel %vm1458, %v3363, 0
    %3617 = vmatpush.msra.mxu0 %v3454
    %3618 = vmatpush.msra.mxu0 %v3448
    %3619 = vmatpush.msra.mxu0 %v3442
    %3620 = vmatpush.msra.mxu0 %v3436
    %3621 = vmatpush.msra.mxu0 %v3430
    %3622 = vmatpush.msra.mxu0 %v3424
    %3623 = vmatpush.msra.mxu0 %v3418
    %3624 = vmatpush.msra.mxu0 %v3412
    %3625 = vmatpush.msra.mxu0 %v3406
    %3626 = vmatpush.msra.mxu0 %v3400
    %3627 = vmatpush.msra.mxu0 %v3394
    %3628 = vmatpush.msra.mxu0 %v3388
    %3629 = vmatpush.msra.mxu0 %v3382
    %3630 = vmatpush.msra.mxu0 %v3376
    %3631 = vmatpush.msra.mxu0 %v3370
    %3632 = vmatpush.msra.mxu0 %v3364
    %3633 = vmatmul.f32.gmra.mxu0 %v3352
    %v3634 = vpop.f32.mrf.mxu0
    %v3635 = vadd.f32 %v3588, %v3634
    %3636 = vmatmul.f32.gmra.mxu0 %v3355
    %v3637 = vpop.f32.mrf.mxu0
    %v3638 = vadd.f32 %v3593, %v3637
    %3639 = vmatmul.f32.gmra.mxu0 %v3358
    %v3640 = vpop.f32.mrf.mxu0
    %v3641 = vadd.f32 %v3598, %v3640
    %3642 = vmatmul.f32.gmra.mxu0 %v3361
    %v3643 = vpop.f32.mrf.mxu0
    %v3644 = vadd.f32 %v3603, %v3643
    %3645 = vdwg.mxu0
    %3646 = vmatpush.msra.mxu0 %v3550
    %3647 = vmatpush.msra.mxu0 %v3544
    %3648 = vmatpush.msra.mxu0 %v3538
    %3649 = vmatpush.msra.mxu0 %v3532
    %3650 = vmatpush.msra.mxu0 %v3526
    %3651 = vmatpush.msra.mxu0 %v3520
    %3652 = vmatpush.msra.mxu0 %v3514
    %3653 = vmatpush.msra.mxu0 %v3508
    %3654 = vmatpush.msra.mxu0 %v3502
    %3655 = vmatpush.msra.mxu0 %v3496
    %3656 = vmatpush.msra.mxu0 %v3490
    %3657 = vmatpush.msra.mxu0 %v3484
    %3658 = vmatpush.msra.mxu0 %v3478
    %3659 = vmatpush.msra.mxu0 %v3472
    %3660 = vmatpush.msra.mxu0 %v3466
    %3661 = vmatpush.msra.mxu0 %v3460
    %3662 = vmatmul.f32.gmra.mxu0 %v3353
    %v3663 = vpop.f32.mrf.mxu0
    %v3664 = vadd.f32 %v3635, %v3663
    %3665 = vmatmul.f32.gmra.mxu0 %v3356
    %v3666 = vpop.f32.mrf.mxu0
    %v3667 = vadd.f32 %v3638, %v3666
    %3668 = vmatmul.f32.gmra.mxu0 %v3359
    %v3669 = vpop.f32.mrf.mxu0
    %v3670 = vadd.f32 %v3641, %v3669
    %3671 = vmatmul.f32.gmra.mxu0 %v3362
    %v3672 = vpop.f32.mrf.mxu0
    %v3673 = vadd.f32 %v3644, %v3672
    %3674 = vdwg.mxu0
    %3675 = vmatpush.msra.mxu0 0.0
    %3676 = vmatpush.msra.mxu0 0.0
    %3677 = vmatpush.msra.mxu0 0.0
    %3678 = vmatpush.msra.mxu0 0.0
    %3679 = vmatpush.msra.mxu0 0.0
    %3680 = vmatpush.msra.mxu0 0.0
    %3681 = vmatpush.msra.mxu0 0.0
    %3682 = vmatpush.msra.mxu0 0.0
    %3683 = vmatpush.msra.mxu0 0.0
    %3684 = vmatpush.msra.mxu0 0.0
    %3685 = vmatpush.msra.mxu0 0.0
    %3686 = vmatpush.msra.mxu0 0.0
    %3687 = vmatpush.msra.mxu0 %v3574
    %3688 = vmatpush.msra.mxu0 %v3568
    %3689 = vmatpush.msra.mxu0 %v3562
    %3690 = vmatpush.msra.mxu0 %v3556
    %3691 = vmatmul.f32.gmra.mxu0 %v3606
    %v3692 = vpop.f32.mrf.mxu0
    %v3693 = vadd.f32 %v3664, %v3692
    %3694 = vmatmul.f32.gmra.mxu0 %v3609
    %v3695 = vpop.f32.mrf.mxu0
    %v3696 = vadd.f32 %v3667, %v3695
    %3697 = vmatmul.f32.gmra.mxu0 %v3612
    %v3698 = vpop.f32.mrf.mxu0
    %v3699 = vadd.f32 %v3670, %v3698
    %3700 = vmatmul.f32.gmra.mxu0 %v3615
    %v3701 = vpop.f32.mrf.mxu0
    %v3702 = vadd.f32 %v3673, %v3701
    %3703 = vdwg.mxu0
    %3704 = vmatpush.msra.mxu0 %v3455
    %3705 = vmatpush.msra.mxu0 %v3449
    %3706 = vmatpush.msra.mxu0 %v3443
    %3707 = vmatpush.msra.mxu0 %v3437
    %3708 = vmatpush.msra.mxu0 %v3431
    %3709 = vmatpush.msra.mxu0 %v3425
    %3710 = vmatpush.msra.mxu0 %v3419
    %3711 = vmatpush.msra.mxu0 %v3413
    %3712 = vmatpush.msra.mxu0 %v3407
    %3713 = vmatpush.msra.mxu0 %v3401
    %3714 = vmatpush.msra.mxu0 %v3395
    %3715 = vmatpush.msra.mxu0 %v3389
    %3716 = vmatpush.msra.mxu0 %v3383
    %3717 = vmatpush.msra.mxu0 %v3377
    %3718 = vmatpush.msra.mxu0 %v3371
    %3719 = vmatpush.msra.mxu0 %v3365
    %3720 = vmatmul.f32.gmra.mxu0 %v3352
    %v3721 = vpop.f32.mrf.mxu0
    %v3722 = vadd.f32 %v3588, %v3721
    %3723 = vmatmul.f32.gmra.mxu0 %v3355
    %v3724 = vpop.f32.mrf.mxu0
    %v3725 = vadd.f32 %v3593, %v3724
    %3726 = vmatmul.f32.gmra.mxu0 %v3358
    %v3727 = vpop.f32.mrf.mxu0
    %v3728 = vadd.f32 %v3598, %v3727
    %3729 = vmatmul.f32.gmra.mxu0 %v3361
    %v3730 = vpop.f32.mrf.mxu0
    %v3731 = vadd.f32 %v3603, %v3730
    %3732 = vdwg.mxu0
    %3733 = vmatpush.msra.mxu0 %v3551
    %3734 = vmatpush.msra.mxu0 %v3545
    %3735 = vmatpush.msra.mxu0 %v3539
    %3736 = vmatpush.msra.mxu0 %v3533
    %3737 = vmatpush.msra.mxu0 %v3527
    %3738 = vmatpush.msra.mxu0 %v3521
    %3739 = vmatpush.msra.mxu0 %v3515
    %3740 = vmatpush.msra.mxu0 %v3509
    %3741 = vmatpush.msra.mxu0 %v3503
    %3742 = vmatpush.msra.mxu0 %v3497
    %3743 = vmatpush.msra.mxu0 %v3491
    %3744 = vmatpush.msra.mxu0 %v3485
    %3745 = vmatpush.msra.mxu0 %v3479
    %3746 = vmatpush.msra.mxu0 %v3473
    %3747 = vmatpush.msra.mxu0 %v3467
    %3748 = vmatpush.msra.mxu0 %v3461
    %3749 = vmatmul.f32.gmra.mxu0 %v3353
    %v3750 = vpop.f32.mrf.mxu0
    %v3751 = vadd.f32 %v3722, %v3750
    %3752 = vmatmul.f32.gmra.mxu0 %v3356
    %v3753 = vpop.f32.mrf.mxu0
    %v3754 = vadd.f32 %v3725, %v3753
    %3755 = vmatmul.f32.gmra.mxu0 %v3359
    %v3756 = vpop.f32.mrf.mxu0
    %v3757 = vadd.f32 %v3728, %v3756
    %3758 = vmatmul.f32.gmra.mxu0 %v3362
    %v3759 = vpop.f32.mrf.mxu0
    %v3760 = vadd.f32 %v3731, %v3759
    %3761 = vdwg.mxu0
    %3762 = vmatpush.msra.mxu0 0.0
    %3763 = vmatpush.msra.mxu0 0.0
    %3764 = vmatpush.msra.mxu0 0.0
    %3765 = vmatpush.msra.mxu0 0.0
    %3766 = vmatpush.msra.mxu0 0.0
    %3767 = vmatpush.msra.mxu0 0.0
    %3768 = vmatpush.msra.mxu0 0.0
    %3769 = vmatpush.msra.mxu0 0.0
    %3770 = vmatpush.msra.mxu0 0.0
    %3771 = vmatpush.msra.mxu0 0.0
    %3772 = vmatpush.msra.mxu0 0.0
    %3773 = vmatpush.msra.mxu0 0.0
    %3774 = vmatpush.msra.mxu0 %v3575
    %3775 = vmatpush.msra.mxu0 %v3569
    %3776 = vmatpush.msra.mxu0 %v3563
    %3777 = vmatpush.msra.mxu0 %v3557
    %3778 = vmatmul.f32.gmra.mxu0 %v3606
    %v3779 = vpop.f32.mrf.mxu0
    %v3780 = vadd.f32 %v3751, %v3779
    %3781 = vmatmul.f32.gmra.mxu0 %v3609
    %v3782 = vpop.f32.mrf.mxu0
    %v3783 = vadd.f32 %v3754, %v3782
    %3784 = vmatmul.f32.gmra.mxu0 %v3612
    %v3785 = vpop.f32.mrf.mxu0
    %v3786 = vadd.f32 %v3757, %v3785
    %3787 = vmatmul.f32.gmra.mxu0 %v3615
    %v3788 = vpop.f32.mrf.mxu0
    %v3789 = vadd.f32 %v3760, %v3788
    %3790 = vdwg.mxu0
    %3791 = vmatpush.msra.mxu0 %v3456
    %3792 = vmatpush.msra.mxu0 %v3450
    %3793 = vmatpush.msra.mxu0 %v3444
    %3794 = vmatpush.msra.mxu0 %v3438
    %3795 = vmatpush.msra.mxu0 %v3432
    %3796 = vmatpush.msra.mxu0 %v3426
    %3797 = vmatpush.msra.mxu0 %v3420
    %3798 = vmatpush.msra.mxu0 %v3414
    %3799 = vmatpush.msra.mxu0 %v3408
    %3800 = vmatpush.msra.mxu0 %v3402
    %3801 = vmatpush.msra.mxu0 %v3396
    %3802 = vmatpush.msra.mxu0 %v3390
    %3803 = vmatpush.msra.mxu0 %v3384
    %3804 = vmatpush.msra.mxu0 %v3378
    %3805 = vmatpush.msra.mxu0 %v3372
    %3806 = vmatpush.msra.mxu0 %v3366
    %3807 = vmatmul.f32.gmra.mxu0 %v3352
    %v3808 = vpop.f32.mrf.mxu0
    %v3809 = vadd.f32 %v3588, %v3808
    %3810 = vmatmul.f32.gmra.mxu0 %v3355
    %v3811 = vpop.f32.mrf.mxu0
    %v3812 = vadd.f32 %v3593, %v3811
    %3813 = vmatmul.f32.gmra.mxu0 %v3358
    %v3814 = vpop.f32.mrf.mxu0
    %v3815 = vadd.f32 %v3598, %v3814
    %3816 = vmatmul.f32.gmra.mxu0 %v3361
    %v3817 = vpop.f32.mrf.mxu0
    %v3818 = vadd.f32 %v3603, %v3817
    %3819 = vdwg.mxu0
    %3820 = vmatpush.msra.mxu0 %v3552
    %3821 = vmatpush.msra.mxu0 %v3546
    %3822 = vmatpush.msra.mxu0 %v3540
    %3823 = vmatpush.msra.mxu0 %v3534
    %3824 = vmatpush.msra.mxu0 %v3528
    %3825 = vmatpush.msra.mxu0 %v3522
    %3826 = vmatpush.msra.mxu0 %v3516
    %3827 = vmatpush.msra.mxu0 %v3510
    %3828 = vmatpush.msra.mxu0 %v3504
    %3829 = vmatpush.msra.mxu0 %v3498
    %3830 = vmatpush.msra.mxu0 %v3492
    %3831 = vmatpush.msra.mxu0 %v3486
    %3832 = vmatpush.msra.mxu0 %v3480
    %3833 = vmatpush.msra.mxu0 %v3474
    %3834 = vmatpush.msra.mxu0 %v3468
    %3835 = vmatpush.msra.mxu0 %v3462
    %3836 = vmatmul.f32.gmra.mxu0 %v3353
    %v3837 = vpop.f32.mrf.mxu0
    %v3838 = vadd.f32 %v3809, %v3837
    %3839 = vmatmul.f32.gmra.mxu0 %v3356
    %v3840 = vpop.f32.mrf.mxu0
    %v3841 = vadd.f32 %v3812, %v3840
    %3842 = vmatmul.f32.gmra.mxu0 %v3359
    %v3843 = vpop.f32.mrf.mxu0
    %v3844 = vadd.f32 %v3815, %v3843
    %3845 = vmatmul.f32.gmra.mxu0 %v3362
    %v3846 = vpop.f32.mrf.mxu0
    %v3847 = vadd.f32 %v3818, %v3846
    %3848 = vdwg.mxu0
    %3849 = vmatpush.msra.mxu0 0.0
    %3850 = vmatpush.msra.mxu0 0.0
    %3851 = vmatpush.msra.mxu0 0.0
    %3852 = vmatpush.msra.mxu0 0.0
    %3853 = vmatpush.msra.mxu0 0.0
    %3854 = vmatpush.msra.mxu0 0.0
    %3855 = vmatpush.msra.mxu0 0.0
    %3856 = vmatpush.msra.mxu0 0.0
    %3857 = vmatpush.msra.mxu0 0.0
    %3858 = vmatpush.msra.mxu0 0.0
    %3859 = vmatpush.msra.mxu0 0.0
    %3860 = vmatpush.msra.mxu0 0.0
    %3861 = vmatpush.msra.mxu0 %v3576
    %3862 = vmatpush.msra.mxu0 %v3570
    %3863 = vmatpush.msra.mxu0 %v3564
    %3864 = vmatpush.msra.mxu0 %v3558
    %3865 = vmatmul.f32.gmra.mxu0 %v3606
    %v3866 = vpop.f32.mrf.mxu0
    %v3867 = vadd.f32 %v3838, %v3866
    %3868 = vmatmul.f32.gmra.mxu0 %v3609
    %v3869 = vpop.f32.mrf.mxu0
    %v3870 = vadd.f32 %v3841, %v3869
    %3871 = vmatmul.f32.gmra.mxu0 %v3612
    %v3872 = vpop.f32.mrf.mxu0
    %v3873 = vadd.f32 %v3844, %v3872
    %3874 = vmatmul.f32.gmra.mxu0 %v3615
    %v3875 = vpop.f32.mrf.mxu0
    %v3876 = vadd.f32 %v3847, %v3875
    %3877 = vdwg.mxu0
    %3878 = vmatpush.msra.mxu0 %v3457
    %3879 = vmatpush.msra.mxu0 %v3451
    %3880 = vmatpush.msra.mxu0 %v3445
    %3881 = vmatpush.msra.mxu0 %v3439
    %3882 = vmatpush.msra.mxu0 %v3433
    %3883 = vmatpush.msra.mxu0 %v3427
    %3884 = vmatpush.msra.mxu0 %v3421
    %3885 = vmatpush.msra.mxu0 %v3415
    %3886 = vmatpush.msra.mxu0 %v3409
    %3887 = vmatpush.msra.mxu0 %v3403
    %3888 = vmatpush.msra.mxu0 %v3397
    %3889 = vmatpush.msra.mxu0 %v3391
    %3890 = vmatpush.msra.mxu0 %v3385
    %3891 = vmatpush.msra.mxu0 %v3379
    %3892 = vmatpush.msra.mxu0 %v3373
    %3893 = vmatpush.msra.mxu0 %v3367
    %3894 = vmatmul.f32.gmra.mxu0 %v3352
    %v3895 = vpop.f32.mrf.mxu0
    %v3896 = vadd.f32 %v3588, %v3895
    %3897 = vmatmul.f32.gmra.mxu0 %v3355
    %v3898 = vpop.f32.mrf.mxu0
    %v3899 = vadd.f32 %v3593, %v3898
    %3900 = vmatmul.f32.gmra.mxu0 %v3358
    %v3901 = vpop.f32.mrf.mxu0
    %v3902 = vadd.f32 %v3598, %v3901
    %3903 = vmatmul.f32.gmra.mxu0 %v3361
    %v3904 = vpop.f32.mrf.mxu0
    %v3905 = vadd.f32 %v3603, %v3904
    %3906 = vdwg.mxu0
    %3907 = vmatpush.msra.mxu0 %v3553
    %3908 = vmatpush.msra.mxu0 %v3547
    %3909 = vmatpush.msra.mxu0 %v3541
    %3910 = vmatpush.msra.mxu0 %v3535
    %3911 = vmatpush.msra.mxu0 %v3529
    %3912 = vmatpush.msra.mxu0 %v3523
    %3913 = vmatpush.msra.mxu0 %v3517
    %3914 = vmatpush.msra.mxu0 %v3511
    %3915 = vmatpush.msra.mxu0 %v3505
    %3916 = vmatpush.msra.mxu0 %v3499
    %3917 = vmatpush.msra.mxu0 %v3493
    %3918 = vmatpush.msra.mxu0 %v3487
    %3919 = vmatpush.msra.mxu0 %v3481
    %3920 = vmatpush.msra.mxu0 %v3475
    %3921 = vmatpush.msra.mxu0 %v3469
    %3922 = vmatpush.msra.mxu0 %v3463
    %3923 = vmatmul.f32.gmra.mxu0 %v3353
    %v3924 = vpop.f32.mrf.mxu0
    %v3925 = vadd.f32 %v3896, %v3924
    %3926 = vmatmul.f32.gmra.mxu0 %v3356
    %v3927 = vpop.f32.mrf.mxu0
    %v3928 = vadd.f32 %v3899, %v3927
    %3929 = vmatmul.f32.gmra.mxu0 %v3359
    %v3930 = vpop.f32.mrf.mxu0
    %v3931 = vadd.f32 %v3902, %v3930
    %3932 = vmatmul.f32.gmra.mxu0 %v3362
    %v3933 = vpop.f32.mrf.mxu0
    %v3934 = vadd.f32 %v3905, %v3933
    %3935 = vdwg.mxu0
    %3936 = vmatpush.msra.mxu0 0.0
    %3937 = vmatpush.msra.mxu0 0.0
    %3938 = vmatpush.msra.mxu0 0.0
    %3939 = vmatpush.msra.mxu0 0.0
    %3940 = vmatpush.msra.mxu0 0.0
    %3941 = vmatpush.msra.mxu0 0.0
    %3942 = vmatpush.msra.mxu0 0.0
    %3943 = vmatpush.msra.mxu0 0.0
    %3944 = vmatpush.msra.mxu0 0.0
    %3945 = vmatpush.msra.mxu0 0.0
    %3946 = vmatpush.msra.mxu0 0.0
    %3947 = vmatpush.msra.mxu0 0.0
    %3948 = vmatpush.msra.mxu0 %v3577
    %3949 = vmatpush.msra.mxu0 %v3571
    %3950 = vmatpush.msra.mxu0 %v3565
    %3951 = vmatpush.msra.mxu0 %v3559
    %3952 = vmatmul.f32.gmra.mxu0 %v3606
    %v3953 = vpop.f32.mrf.mxu0
    %v3954 = vadd.f32 %v3925, %v3953
    %3955 = vmatmul.f32.gmra.mxu0 %v3609
    %v3956 = vpop.f32.mrf.mxu0
    %v3957 = vadd.f32 %v3928, %v3956
    %3958 = vmatmul.f32.gmra.mxu0 %v3612
    %v3959 = vpop.f32.mrf.mxu0
    %v3960 = vadd.f32 %v3931, %v3959
    %3961 = vmatmul.f32.gmra.mxu0 %v3615
    %v3962 = vpop.f32.mrf.mxu0
    %v3963 = vadd.f32 %v3934, %v3962
    %3964 = vdwg.mxu0
    %3965 = vmatpush.msra.mxu0 %v3458
    %3966 = vmatpush.msra.mxu0 %v3452
    %3967 = vmatpush.msra.mxu0 %v3446
    %3968 = vmatpush.msra.mxu0 %v3440
    %3969 = vmatpush.msra.mxu0 %v3434
    %3970 = vmatpush.msra.mxu0 %v3428
    %3971 = vmatpush.msra.mxu0 %v3422
    %3972 = vmatpush.msra.mxu0 %v3416
    %3973 = vmatpush.msra.mxu0 %v3410
    %3974 = vmatpush.msra.mxu0 %v3404
    %3975 = vmatpush.msra.mxu0 %v3398
    %3976 = vmatpush.msra.mxu0 %v3392
    %3977 = vmatpush.msra.mxu0 %v3386
    %3978 = vmatpush.msra.mxu0 %v3380
    %3979 = vmatpush.msra.mxu0 %v3374
    %3980 = vmatpush.msra.mxu0 %v3368
    %3981 = vmatmul.f32.gmra.mxu0 %v3352
    %v3982 = vpop.f32.mrf.mxu0
    %v3983 = vadd.f32 %v3588, %v3982
    %3984 = vmatmul.f32.gmra.mxu0 %v3355
    %v3985 = vpop.f32.mrf.mxu0
    %v3986 = vadd.f32 %v3593, %v3985
    %3987 = vmatmul.f32.gmra.mxu0 %v3358
    %v3988 = vpop.f32.mrf.mxu0
    %v3989 = vadd.f32 %v3598, %v3988
    %3990 = vmatmul.f32.gmra.mxu0 %v3361
    %v3991 = vpop.f32.mrf.mxu0
    %v3992 = vadd.f32 %v3603, %v3991
    %3993 = vdwg.mxu0
    %3994 = vmatpush.msra.mxu0 %v3554
    %3995 = vmatpush.msra.mxu0 %v3548
    %3996 = vmatpush.msra.mxu0 %v3542
    %3997 = vmatpush.msra.mxu0 %v3536
    %3998 = vmatpush.msra.mxu0 %v3530
    %3999 = vmatpush.msra.mxu0 %v3524
    %4000 = vmatpush.msra.mxu0 %v3518
    %4001 = vmatpush.msra.mxu0 %v3512
    %4002 = vmatpush.msra.mxu0 %v3506
    %4003 = vmatpush.msra.mxu0 %v3500
    %4004 = vmatpush.msra.mxu0 %v3494
    %4005 = vmatpush.msra.mxu0 %v3488
    %4006 = vmatpush.msra.mxu0 %v3482
    %4007 = vmatpush.msra.mxu0 %v3476
    %4008 = vmatpush.msra.mxu0 %v3470
    %4009 = vmatpush.msra.mxu0 %v3464
    %4010 = vmatmul.f32.gmra.mxu0 %v3353
    %v4011 = vpop.f32.mrf.mxu0
    %v4012 = vadd.f32 %v3983, %v4011
    %4013 = vmatmul.f32.gmra.mxu0 %v3356
    %v4014 = vpop.f32.mrf.mxu0
    %v4015 = vadd.f32 %v3986, %v4014
    %4016 = vmatmul.f32.gmra.mxu0 %v3359
    %v4017 = vpop.f32.mrf.mxu0
    %v4018 = vadd.f32 %v3989, %v4017
    %4019 = vmatmul.f32.gmra.mxu0 %v3362
    %v4020 = vpop.f32.mrf.mxu0
    %v4021 = vadd.f32 %v3992, %v4020
    %4022 = vdwg.mxu0
    %4023 = vmatpush.msra.mxu0 0.0
    %4024 = vmatpush.msra.mxu0 0.0
    %4025 = vmatpush.msra.mxu0 0.0
    %4026 = vmatpush.msra.mxu0 0.0
    %4027 = vmatpush.msra.mxu0 0.0
    %4028 = vmatpush.msra.mxu0 0.0
    %4029 = vmatpush.msra.mxu0 0.0
    %4030 = vmatpush.msra.mxu0 0.0
    %4031 = vmatpush.msra.mxu0 0.0
    %4032 = vmatpush.msra.mxu0 0.0
    %4033 = vmatpush.msra.mxu0 0.0
    %4034 = vmatpush.msra.mxu0 0.0
    %4035 = vmatpush.msra.mxu0 %v3578
    %4036 = vmatpush.msra.mxu0 %v3572
    %4037 = vmatpush.msra.mxu0 %v3566
    %4038 = vmatpush.msra.mxu0 %v3560
    %4039 = vmatmul.f32.gmra.mxu0 %v3606
    %v4040 = vpop.f32.mrf.mxu0
    %v4041 = vadd.f32 %v4012, %v4040
    %4042 = vmatmul.f32.gmra.mxu0 %v3609
    %v4043 = vpop.f32.mrf.mxu0
    %v4044 = vadd.f32 %v4015, %v4043
    %4045 = vmatmul.f32.gmra.mxu0 %v3612
    %v4046 = vpop.f32.mrf.mxu0
    %v4047 = vadd.f32 %v4018, %v4046
    %4048 = vmatmul.f32.gmra.mxu0 %v3615
    %v4049 = vpop.f32.mrf.mxu0
    %v4050 = vadd.f32 %v4021, %v4049
    %4051 = vdwg.mxu0
    %4052 = vmatpush.msra.mxu0 %v3459
    %4053 = vmatpush.msra.mxu0 %v3453
    %4054 = vmatpush.msra.mxu0 %v3447
    %4055 = vmatpush.msra.mxu0 %v3441
    %4056 = vmatpush.msra.mxu0 %v3435
    %4057 = vmatpush.msra.mxu0 %v3429
    %4058 = vmatpush.msra.mxu0 %v3423
    %4059 = vmatpush.msra.mxu0 %v3417
    %4060 = vmatpush.msra.mxu0 %v3411
    %4061 = vmatpush.msra.mxu0 %v3405
    %4062 = vmatpush.msra.mxu0 %v3399
    %4063 = vmatpush.msra.mxu0 %v3393
    %4064 = vmatpush.msra.mxu0 %v3387
    %4065 = vmatpush.msra.mxu0 %v3381
    %4066 = vmatpush.msra.mxu0 %v3375
    %4067 = vmatpush.msra.mxu0 %v3369
    %4068 = vmatmul.f32.gmra.mxu0 %v3352
    %v4069 = vpop.f32.mrf.mxu0
    %v4070 = vadd.f32 %v3588, %v4069
    %4071 = vmatmul.f32.gmra.mxu0 %v3355
    %v4072 = vpop.f32.mrf.mxu0
    %v4073 = vadd.f32 %v3593, %v4072
    %4074 = vmatmul.f32.gmra.mxu0 %v3358
    %v4075 = vpop.f32.mrf.mxu0
    %v4076 = vadd.f32 %v3598, %v4075
    %4077 = vmatmul.f32.gmra.mxu0 %v3361
    %v4078 = vpop.f32.mrf.mxu0
    %v4079 = vadd.f32 %v3603, %v4078
    %4080 = vdwg.mxu0
    %4081 = vmatpush.msra.mxu0 %v3555
    %4082 = vmatpush.msra.mxu0 %v3549
    %4083 = vmatpush.msra.mxu0 %v3543
    %4084 = vmatpush.msra.mxu0 %v3537
    %4085 = vmatpush.msra.mxu0 %v3531
    %4086 = vmatpush.msra.mxu0 %v3525
    %4087 = vmatpush.msra.mxu0 %v3519
    %4088 = vmatpush.msra.mxu0 %v3513
    %4089 = vmatpush.msra.mxu0 %v3507
    %4090 = vmatpush.msra.mxu0 %v3501
    %4091 = vmatpush.msra.mxu0 %v3495
    %4092 = vmatpush.msra.mxu0 %v3489
    %4093 = vmatpush.msra.mxu0 %v3483
    %4094 = vmatpush.msra.mxu0 %v3477
    %4095 = vmatpush.msra.mxu0 %v3471
    %4096 = vmatpush.msra.mxu0 %v3465
    %4097 = vmatmul.f32.gmra.mxu0 %v3353
    %v4098 = vpop.f32.mrf.mxu0
    %v4099 = vadd.f32 %v4070, %v4098
    %4100 = vmatmul.f32.gmra.mxu0 %v3356
    %v4101 = vpop.f32.mrf.mxu0
    %v4102 = vadd.f32 %v4073, %v4101
    %4103 = vmatmul.f32.gmra.mxu0 %v3359
    %v4104 = vpop.f32.mrf.mxu0
    %v4105 = vadd.f32 %v4076, %v4104
    %4106 = vmatmul.f32.gmra.mxu0 %v3362
    %v4107 = vpop.f32.mrf.mxu0
    %v4108 = vadd.f32 %v4079, %v4107
    %4109 = vdwg.mxu0
    %4110 = vmatpush.msra.mxu0 0.0
    %4111 = vmatpush.msra.mxu0 0.0
    %4112 = vmatpush.msra.mxu0 0.0
    %4113 = vmatpush.msra.mxu0 0.0
    %4114 = vmatpush.msra.mxu0 0.0
    %4115 = vmatpush.msra.mxu0 0.0
    %4116 = vmatpush.msra.mxu0 0.0
    %4117 = vmatpush.msra.mxu0 0.0
    %4118 = vmatpush.msra.mxu0 0.0
    %4119 = vmatpush.msra.mxu0 0.0
    %4120 = vmatpush.msra.mxu0 0.0
    %4121 = vmatpush.msra.mxu0 0.0
    %4122 = vmatpush.msra.mxu0 %v3579
    %4123 = vmatpush.msra.mxu0 %v3573
    %4124 = vmatpush.msra.mxu0 %v3567
    %4125 = vmatpush.msra.mxu0 %v3561
    %4126 = vmatmul.f32.gmra.mxu0 %v3606
    %v4127 = vpop.f32.mrf.mxu0
    %v4128 = vadd.f32 %v4099, %v4127
    %4129 = vmatmul.f32.gmra.mxu0 %v3609
    %v4130 = vpop.f32.mrf.mxu0
    %v4131 = vadd.f32 %v4102, %v4130
    %4132 = vmatmul.f32.gmra.mxu0 %v3612
    %v4133 = vpop.f32.mrf.mxu0
    %v4134 = vadd.f32 %v4105, %v4133
    %4135 = vmatmul.f32.gmra.mxu0 %v3615
    %v4136 = vpop.f32.mrf.mxu0
    %v4137 = vadd.f32 %v4108, %v4136
    %4138 = vdwg.mxu0
    %vm4139 = vcmp.ge.f32.partialorder %v3693, 0.0
    %vm4140 = vcmp.ge.f32.partialorder %v3780, 0.0
    %vm4141 = vcmp.ge.f32.partialorder %v3867, 0.0
    %vm4142 = vcmp.ge.f32.partialorder %v3954, 0.0
    %vm4143 = vcmp.ge.f32.partialorder %v4041, 0.0
    %vm4144 = vcmp.ge.f32.partialorder %v4128, 0.0
    %vm4145 = vcmp.ge.f32.partialorder %v3696, 0.0
    %vm4146 = vcmp.ge.f32.partialorder %v3783, 0.0
    %vm4147 = vcmp.ge.f32.partialorder %v3870, 0.0
    %vm4148 = vcmp.ge.f32.partialorder %v3957, 0.0
    %vm4149 = vcmp.ge.f32.partialorder %v4044, 0.0
    %vm4150 = vcmp.ge.f32.partialorder %v4131, 0.0
    %vm4151 = vcmp.ge.f32.partialorder %v3699, 0.0
    %vm4152 = vcmp.ge.f32.partialorder %v3786, 0.0
    %vm4153 = vcmp.ge.f32.partialorder %v3873, 0.0
    %vm4154 = vcmp.ge.f32.partialorder %v3960, 0.0
    %vm4155 = vcmp.ge.f32.partialorder %v4047, 0.0
    %vm4156 = vcmp.ge.f32.partialorder %v4134, 0.0
    %vm4157 = vcmp.ge.f32.partialorder %v3702, 0.0
    %vm4158 = vcmp.ge.f32.partialorder %v3789, 0.0
    %vm4159 = vcmp.ge.f32.partialorder %v3876, 0.0
    %vm4160 = vcmp.ge.f32.partialorder %v3963, 0.0
    %vm4161 = vcmp.ge.f32.partialorder %v4050, 0.0
    %vm4162 = vcmp.ge.f32.partialorder %v4137, 0.0
    %v4163 = vmul.f32 %v3693, 0.01
    %v4164 = vmul.f32 %v3780, 0.01
    %v4165 = vmul.f32 %v3867, 0.01
    %v4166 = vmul.f32 %v3954, 0.01
    %v4167 = vmul.f32 %v4041, 0.01
    %v4168 = vmul.f32 %v4128, 0.01
    %v4169 = vmul.f32 %v3696, 0.01
    %v4170 = vmul.f32 %v3783, 0.01
    %v4171 = vmul.f32 %v3870, 0.01
    %v4172 = vmul.f32 %v3957, 0.01
    %v4173 = vmul.f32 %v4044, 0.01
    %v4174 = vmul.f32 %v4131, 0.01
    %v4175 = vmul.f32 %v3699, 0.01
    %v4176 = vmul.f32 %v3786, 0.01
    %v4177 = vmul.f32 %v3873, 0.01
    %v4178 = vmul.f32 %v3960, 0.01
    %v4179 = vmul.f32 %v4047, 0.01
    %v4180 = vmul.f32 %v4134, 0.01
    %v4181 = vmul.f32 %v3702, 0.01
    %v4182 = vmul.f32 %v3789, 0.01
    %v4183 = vmul.f32 %v3876, 0.01
    %v4184 = vmul.f32 %v3963, 0.01
    %v4185 = vmul.f32 %v4050, 0.01
    %v4186 = vmul.f32 %v4137, 0.01
    %v4187 = vsel %vm4139, %v3693, %v4163
    %v4188 = vsel %vm4140, %v3780, %v4164
    %v4189 = vsel %vm4141, %v3867, %v4165
    %v4190 = vsel %vm4142, %v3954, %v4166
    %v4191 = vsel %vm4143, %v4041, %v4167
    %v4192 = vsel %vm4144, %v4128, %v4168
    %v4193 = vsel %vm4145, %v3696, %v4169
    %v4194 = vsel %vm4146, %v3783, %v4170
    %v4195 = vsel %vm4147, %v3870, %v4171
    %v4196 = vsel %vm4148, %v3957, %v4172
    %v4197 = vsel %vm4149, %v4044, %v4173
    %v4198 = vsel %vm4150, %v4131, %v4174
    %v4199 = vsel %vm4151, %v3699, %v4175
    %v4200 = vsel %vm4152, %v3786, %v4176
    %v4201 = vsel %vm4153, %v3873, %v4177
    %v4202 = vsel %vm4154, %v3960, %v4178
    %v4203 = vsel %vm4155, %v4047, %v4179
    %v4204 = vsel %vm4156, %v4134, %v4180
    %v4205 = vsel %vm4157, %v3702, %v4181
    %v4206 = vsel %vm4158, %v3789, %v4182
    %v4207 = vsel %vm4159, %v3876, %v4183
    %v4208 = vsel %vm4160, %v3963, %v4184
    %v4209 = vsel %vm4161, %v4050, %v4185
    %v4210 = vsel %vm4162, %v4137, %v4186
    %s4211 = scalar_lea.vmem %s6, 16
    %v4212 = vld [vmem:[%s4211] sm:$0xff]
    %v4213 = vld [vmem:[%s4211 + $0x8] sm:$0xff]
    %v4214 = vld [vmem:[#allocation6] sm:$0xff]
    %v4215 = vld [vmem:[#allocation6 + $0x8] sm:$0xff]
    %v4216 = vld [vmem:[#allocation6 + $0x10] sm:$0xff]
    %v4217 = vld [vmem:[#allocation6 + $0x18] sm:$0xff]
    %v4218 = vld [vmem:[#allocation6 + $0x20] sm:$0xff]
    %v4219 = vld [vmem:[#allocation6 + $0x28] sm:$0xff]
    %v4220 = vld [vmem:[#allocation6 + $0x30] sm:$0xff]
    %v4221 = vld [vmem:[#allocation6 + $0x38] sm:$0xff]
    %v4222 = vld [vmem:[#allocation6 + $0x40] sm:$0xff]
    %v4223 = vld [vmem:[#allocation6 + $0x48] sm:$0xff]
    %v4224 = vld [vmem:[#allocation6 + $0x50] sm:$0xff]
    %v4225 = vld [vmem:[#allocation6 + $0x58] sm:$0xff]
    %v4227 = vsel %vm1458, %v4212, 0
    %v4230 = vsel %vm1458, %v4213, 0
    %4232 = vmatpush.msra.mxu0 0.0
    %4233 = vmatpush.msra.mxu0 0.0
    %4234 = vmatpush.msra.mxu0 0.0
    %4235 = vmatpush.msra.mxu0 0.0
    %4236 = vmatpush.msra.mxu0 0.0
    %4237 = vmatpush.msra.mxu0 0.0
    %4238 = vmatpush.msra.mxu0 0.0
    %4239 = vmatpush.msra.mxu0 0.0
    %4240 = vmatpush.msra.mxu0 0.0
    %4241 = vmatpush.msra.mxu0 0.0
    %4242 = vmatpush.msra.mxu0 0.0
    %4243 = vmatpush.msra.mxu0 0.0
    %4244 = vmatpush.msra.mxu0 %v4205
    %4245 = vmatpush.msra.mxu0 %v4199
    %4246 = vmatpush.msra.mxu0 %v4193
    %4247 = vmatpush.msra.mxu0 %v4187
    %4248 = vmatmul.f32.gmra.mxu0 %v4227
    %v4249 = vpop.f32.mrf.mxu0
    %v4250 = vadd.f32 %v4214, %v4249
    %4251 = vmatmul.f32.gmra.mxu0 %v4230
    %v4252 = vpop.f32.mrf.mxu0
    %v4253 = vadd.f32 %v4220, %v4252
    %4254 = vdwg.mxu0
    %4255 = vmatpush.msra.mxu0 0.0
    %4256 = vmatpush.msra.mxu0 0.0
    %4257 = vmatpush.msra.mxu0 0.0
    %4258 = vmatpush.msra.mxu0 0.0
    %4259 = vmatpush.msra.mxu0 0.0
    %4260 = vmatpush.msra.mxu0 0.0
    %4261 = vmatpush.msra.mxu0 0.0
    %4262 = vmatpush.msra.mxu0 0.0
    %4263 = vmatpush.msra.mxu0 0.0
    %4264 = vmatpush.msra.mxu0 0.0
    %4265 = vmatpush.msra.mxu0 0.0
    %4266 = vmatpush.msra.mxu0 0.0
    %4267 = vmatpush.msra.mxu0 %v4206
    %4268 = vmatpush.msra.mxu0 %v4200
    %4269 = vmatpush.msra.mxu0 %v4194
    %4270 = vmatpush.msra.mxu0 %v4188
    %4271 = vmatmul.f32.gmra.mxu0 %v4227
    %v4272 = vpop.f32.mrf.mxu0
    %v4273 = vadd.f32 %v4215, %v4272
    %4274 = vmatmul.f32.gmra.mxu0 %v4230
    %v4275 = vpop.f32.mrf.mxu0
    %v4276 = vadd.f32 %v4221, %v4275
    %4277 = vdwg.mxu0
    %4278 = vmatpush.msra.mxu0 0.0
    %4279 = vmatpush.msra.mxu0 0.0
    %4280 = vmatpush.msra.mxu0 0.0
    %4281 = vmatpush.msra.mxu0 0.0
    %4282 = vmatpush.msra.mxu0 0.0
    %4283 = vmatpush.msra.mxu0 0.0
    %4284 = vmatpush.msra.mxu0 0.0
    %4285 = vmatpush.msra.mxu0 0.0
    %4286 = vmatpush.msra.mxu0 0.0
    %4287 = vmatpush.msra.mxu0 0.0
    %4288 = vmatpush.msra.mxu0 0.0
    %4289 = vmatpush.msra.mxu0 0.0
    %4290 = vmatpush.msra.mxu0 %v4207
    %4291 = vmatpush.msra.mxu0 %v4201
    %4292 = vmatpush.msra.mxu0 %v4195
    %4293 = vmatpush.msra.mxu0 %v4189
    %4294 = vmatmul.f32.gmra.mxu0 %v4227
    %v4295 = vpop.f32.mrf.mxu0
    %v4296 = vadd.f32 %v4216, %v4295
    %4297 = vmatmul.f32.gmra.mxu0 %v4230
    %v4298 = vpop.f32.mrf.mxu0
    %v4299 = vadd.f32 %v4222, %v4298
    %4300 = vdwg.mxu0
    %4301 = vmatpush.msra.mxu0 0.0
    %4302 = vmatpush.msra.mxu0 0.0
    %4303 = vmatpush.msra.mxu0 0.0
    %4304 = vmatpush.msra.mxu0 0.0
    %4305 = vmatpush.msra.mxu0 0.0
    %4306 = vmatpush.msra.mxu0 0.0
    %4307 = vmatpush.msra.mxu0 0.0
    %4308 = vmatpush.msra.mxu0 0.0
    %4309 = vmatpush.msra.mxu0 0.0
    %4310 = vmatpush.msra.mxu0 0.0
    %4311 = vmatpush.msra.mxu0 0.0
    %4312 = vmatpush.msra.mxu0 0.0
    %4313 = vmatpush.msra.mxu0 %v4208
    %4314 = vmatpush.msra.mxu0 %v4202
    %4315 = vmatpush.msra.mxu0 %v4196
    %4316 = vmatpush.msra.mxu0 %v4190
    %4317 = vmatmul.f32.gmra.mxu0 %v4227
    %v4318 = vpop.f32.mrf.mxu0
    %v4319 = vadd.f32 %v4217, %v4318
    %4320 = vmatmul.f32.gmra.mxu0 %v4230
    %v4321 = vpop.f32.mrf.mxu0
    %v4322 = vadd.f32 %v4223, %v4321
    %4323 = vdwg.mxu0
    %4324 = vmatpush.msra.mxu0 0.0
    %4325 = vmatpush.msra.mxu0 0.0
    %4326 = vmatpush.msra.mxu0 0.0
    %4327 = vmatpush.msra.mxu0 0.0
    %4328 = vmatpush.msra.mxu0 0.0
    %4329 = vmatpush.msra.mxu0 0.0
    %4330 = vmatpush.msra.mxu0 0.0
    %4331 = vmatpush.msra.mxu0 0.0
    %4332 = vmatpush.msra.mxu0 0.0
    %4333 = vmatpush.msra.mxu0 0.0
    %4334 = vmatpush.msra.mxu0 0.0
    %4335 = vmatpush.msra.mxu0 0.0
    %4336 = vmatpush.msra.mxu0 %v4209
    %4337 = vmatpush.msra.mxu0 %v4203
    %4338 = vmatpush.msra.mxu0 %v4197
    %4339 = vmatpush.msra.mxu0 %v4191
    %4340 = vmatmul.f32.gmra.mxu0 %v4227
    %v4341 = vpop.f32.mrf.mxu0
    %v4342 = vadd.f32 %v4218, %v4341
    %4343 = vmatmul.f32.gmra.mxu0 %v4230
    %v4344 = vpop.f32.mrf.mxu0
    %v4345 = vadd.f32 %v4224, %v4344
    %4346 = vdwg.mxu0
    %4347 = vmatpush.msra.mxu0 0.0
    %4348 = vmatpush.msra.mxu0 0.0
    %4349 = vmatpush.msra.mxu0 0.0
    %4350 = vmatpush.msra.mxu0 0.0
    %4351 = vmatpush.msra.mxu0 0.0
    %4352 = vmatpush.msra.mxu0 0.0
    %4353 = vmatpush.msra.mxu0 0.0
    %4354 = vmatpush.msra.mxu0 0.0
    %4355 = vmatpush.msra.mxu0 0.0
    %4356 = vmatpush.msra.mxu0 0.0
    %4357 = vmatpush.msra.mxu0 0.0
    %4358 = vmatpush.msra.mxu0 0.0
    %4359 = vmatpush.msra.mxu0 %v4210
    %4360 = vmatpush.msra.mxu0 %v4204
    %4361 = vmatpush.msra.mxu0 %v4198
    %4362 = vmatpush.msra.mxu0 %v4192
    %4363 = vmatmul.f32.gmra.mxu0 %v4227
    %v4364 = vpop.f32.mrf.mxu0
    %v4365 = vadd.f32 %v4219, %v4364
    %4366 = vmatmul.f32.gmra.mxu0 %v4230
    %v4367 = vpop.f32.mrf.mxu0
    %v4368 = vadd.f32 %v4225, %v4367
    %4369 = vdwg.mxu0
    %4370 = vst [vmem:[#allocation6] sm:$0xff] %v4250
    %4371 = vst [vmem:[#allocation6 + $0x8] sm:$0xff] %v4273
    %4372 = vst [vmem:[#allocation6 + $0x10] sm:$0xff] %v4296
    %4373 = vst [vmem:[#allocation6 + $0x18] sm:$0xff] %v4319
    %4374 = vst [vmem:[#allocation6 + $0x20] sm:$0xff] %v4342
    %4375 = vst [vmem:[#allocation6 + $0x28] sm:$0xff] %v4365
    %4376 = vst [vmem:[#allocation6 + $0x30] sm:$0xff] %v4253
    %4377 = vst [vmem:[#allocation6 + $0x38] sm:$0xff] %v4276
    %4378 = vst [vmem:[#allocation6 + $0x40] sm:$0xff] %v4299
    %4379 = vst [vmem:[#allocation6 + $0x48] sm:$0xff] %v4322
    %4380 = vst [vmem:[#allocation6 + $0x50] sm:$0xff] %v4345
    %4381 = vst [vmem:[#allocation6 + $0x58] sm:$0xff] %v4368
    // Predicated region
    $region34: #{tpu_custom_call.1} parent=1 // pred_check
      _
    $region35: #{tpu_custom_call.1} parent=1 // pred_check_branch
      %4383 = sbr.rel (0) target = $region37
    $region36: #{tpu_custom_call.1} parent=1 // pred_region
      %4385 = vsyncadd [#allocation5], 0
      %s4386 = sshll.u32 [#allocation6], 4
      %s4387 = int_to_ptr.vmem [resolvable:$true] %s4386
      %s4388 = sshll.u32 %s7, 4
      %s4389 = int_to_ptr.hbm [resolvable:$true] %s4388
      %4394 = dma.vmem_to_hbm [thread:$0]  %s4387, 1536, %s4389, [#allocation5], 768, 768, 48
    $region37: #{tpu_custom_call.1} parent=1 // pred_fallthru
      _
    // Predicated region
    $region38: #{tpu_custom_call.1} parent=1 // pred_check
      _
    $region39: #{tpu_custom_call.1} parent=1 // pred_check_branch
      %4396 = sbr.rel (0) target = $region41
    $region40: #{tpu_custom_call.1} parent=1 // pred_region
      %4398 = dma.done [#allocation5], 1536
    $region41: #{tpu_custom_call.1} parent=1 // pred_fallthru
      _
    %4399 = vsyncpa [#allocation4], 1
    %4400 = vsyncpa [#allocation5], 1

</llo_original>
